<compile_context>
chip_gen: v7x
topology: tpu7x:2x2x1
jax: 0.10.0
libtpu: 0.0.40
codegen_flags: <defaults>
</compile_context>

<pallas_src>
import functools

import jax
import jax.numpy as jnp
from jax.experimental import pallas as pl
from jax.experimental.pallas import tpu as pltpu

_LN_EPS = 1e-5  # PyTorch nn.LayerNorm default


# ------------------------------ fused kernel --------------------------------
# vecs_ref rows: 0/1 norm1 g,b | 2/3 norm2 g,b | 4/5 norm3 g,b | 6/7 norm4 g,b
#                8   to_out bias | 9 ff_b2
def _fused_kernel(x_ref, c2_ref, vecs_ref, b1_ref,
                  wq_ref, wk_ref, wv_ref, wo_ref, w1_ref, w2_ref,
                  o_ref, *, heads, head_dim, ffn_chunk):
    x = x_ref[0]            # (N, 64)
    c2 = c2_ref[0]          # (M, 64)
    vecs = vecs_ref[...]    # (10, 64)

    def ln(v, g, b):
        mu = jnp.mean(v, axis=-1, keepdims=True)
        var = jnp.mean((v - mu) ** 2, axis=-1, keepdims=True)
        return (v - mu) * jax.lax.rsqrt(var + _LN_EPS) * g + b

    # --- LN1 -> LN2 -> LN3 ---
    xn = ln(x, vecs[0:1], vecs[1:2])
    xn = ln(xn, vecs[2:3], vecs[3:4])
    xn = ln(xn, vecs[4:5], vecs[5:6])

    # --- projections (scale already folded into wq in the wrapper) ---
    q = jnp.dot(xn, wq_ref[...], preferred_element_type=jnp.float32)   # (N, 64)
    k = jnp.dot(c2, wk_ref[...], preferred_element_type=jnp.float32)   # (M, 64)
    v = jnp.dot(c2, wv_ref[...], preferred_element_type=jnp.float32)   # (M, 64)

    # --- multi-head attention; head-concat folded into to_out ---
    proj = vecs[8:9]                                   # to_out bias (1, 64)
    for h in range(heads):                             # static loop, static lane slices
        lo, hi = h * head_dim, (h + 1) * head_dim
        qh, kh, vh = q[:, lo:hi], k[:, lo:hi], v[:, lo:hi]
        s = jax.lax.dot_general(qh, kh, (((1,), (1,)), ((), ())),
                                preferred_element_type=jnp.float32)    # (N, M)
        s = s - jnp.max(s, axis=-1, keepdims=True)
        p = jnp.exp(s)
        p = p / jnp.sum(p, axis=-1, keepdims=True)     # exact softmax (PyTorch parity)
        oh = jnp.dot(p, vh, preferred_element_type=jnp.float32)        # (N, d)
        proj = proj + jnp.dot(oh, wo_ref[lo:hi, :],
                              preferred_element_type=jnp.float32)      # (N, 64)

    x1 = proj + xn                                     # residual adds the triple-normed x

    # --- LN4 ---
    x2 = ln(x1, vecs[6:7], vecs[7:8])

    # --- FFN, hidden processed in ffn_chunk-wide column/row slices ---
    H = w1_ref.shape[1]
    y = vecs[9:10]                                     # ff b2 (1, 64)
    for c0 in range(0, H, ffn_chunk):                  # static loop
        hsz = min(ffn_chunk, H - c0)
        hc = jnp.dot(x2, w1_ref[:, c0:c0 + hsz],
                     preferred_element_type=jnp.float32) + b1_ref[:, c0:c0 + hsz]
        hc = jnp.maximum(hc, 0.0)
        y = y + jnp.dot(hc, w2_ref[c0:c0 + hsz, :],
                        preferred_element_type=jnp.float32)

    o_ref[0] = x2 + y                                  # residual adds the norm4 output


# -------------------------------- forward -----------------------------------

def transformer_global4_forward(params, c2, x, *, heads, dim_head,
                                project_out=True, ffn_chunk=256):
    """c2: (B, M, 64) keys/values source; x: (B, N, 64) queries. Returns (B, N, 64)."""
    B, N, C = x.shape
    M = c2.shape[1]
    assert C == 64 and c2.shape[2] == 64, "reference hard-codes Linear(64, 64)"
    assert C % heads == 0
    d = C // heads                          # lane width per head (rearrange h=heads)
    scale = float(dim_head) ** -0.5         # reference scales by dim_head, not C//heads
    H = params["ff_w1"].shape[1]
    f32 = jnp.float32

    if project_out:
        wo = params["to_out_w"].astype(f32)
        bo = params["to_out_b"].astype(f32)
    else:                                   # to_out == nn.Identity()
        wo = jnp.eye(C, dtype=f32)
        bo = jnp.zeros((C,), f32)

    wq = params["to_q_w"].astype(f32) * scale        # fold attention scale into Wq

    vecs = jnp.stack([                               # all (C,) params in one (10, C) slab
        params["norm1_g"], params["norm1_b"],
        params["norm2_g"], params["norm2_b"],
        params["norm3_g"], params["norm3_b"],
        params["norm4_g"], params["norm4_b"],
        bo, params["ff_b2"],
    ]).astype(f32)
    b1 = params["ff_b1"].reshape(1, H).astype(f32)

    def pspec(shape):
        return pl.BlockSpec(shape, lambda b: (0, 0))

    out = pl.pallas_call(
        functools.partial(_fused_kernel, heads=heads, head_dim=d, ffn_chunk=ffn_chunk),
        out_shape=jax.ShapeDtypeStruct((B, N, C), f32),
        grid=(B,),
        in_specs=[pl.BlockSpec((1, N, C), lambda b: (b, 0, 0)),   # x
                  pl.BlockSpec((1, M, C), lambda b: (b, 0, 0)),   # c2
                  pspec((10, C)),                                 # packed (C,) params
                  pspec((1, H)),                                  # ff_b1
                  pspec((C, C)), pspec((C, C)), pspec((C, C)),    # wq, wk, wv
                  pspec((C, C)),                                  # wo
                  pspec((C, H)), pspec((H, C))],                  # ff_w1, ff_w2
        out_specs=pl.BlockSpec((1, N, C), lambda b: (b, 0, 0)),
        compiler_params=pltpu.CompilerParams(
            dimension_semantics=("parallel",),       # megacore-shards batches on v7x
            vmem_limit_bytes=32 * 1024 * 1024),
    )(x.astype(f32), c2.astype(f32), vecs, b1,
      wq, params["to_k_w"].astype(f32), params["to_v_w"].astype(f32), wo,
      params["ff_w1"].astype(f32), params["ff_w2"].astype(f32))
    return out
    # TODO(synk): bf16 MXU operands (weights + activations, f32 accumulate) would give
    # ~2-3x MXU throughput on v5e/v6e/v7x at the cost of small deviation vs PyTorch f32.


# ------------------------------- parameters ---------------------------------

def init_params(key, dim=64, mlp_dim=1024):
    f32 = jnp.float32
    ks = iter(jax.random.split(key, 24))   # 17 draws needed; headroom is harmless

    def lin_w(din, dout):       # stored pre-transposed as (in, out): y = x @ W
        return jax.random.normal(next(ks), (din, dout), f32) * 0.02

    def small(shape):
        return jax.random.normal(next(ks), shape, f32) * 0.02

    return dict(
        norm1_g=jnp.ones((dim,), f32) + small((dim,)), norm1_b=small((dim,)),
        norm2_g=jnp.ones((dim,), f32) + small((dim,)), norm2_b=small((dim,)),
        norm3_g=jnp.ones((dim,), f32) + small((dim,)), norm3_b=small((dim,)),
        norm4_g=jnp.ones((dim,), f32) + small((dim,)), norm4_b=small((dim,)),
        to_q_w=lin_w(dim, dim),                       # Linear(64, 64, bias=False)
        to_k_w=lin_w(dim, dim),
        to_v_w=lin_w(dim, dim),
        to_out_w=lin_w(dim, dim), to_out_b=small((dim,)),
        ff_w1=lin_w(dim, mlp_dim), ff_b1=small((mlp_dim,)),
        ff_w2=lin_w(mlp_dim, dim), ff_b2=small((dim,)),
    )
    # TODO(synk): self.layers (depth x [PreNorm3p, PreNorm]) is constructed but never
    # used in Transformer_global4.forward, so it is intentionally not materialized.


# --------------------------------- driver ------------------------------------

if __name__ == "__main__":
    B, N, M = 2, 128, 64          # x: (B, N, 64) queries ; c2: (B, M, 64) keys/values
    dim, heads, dim_head, mlp_dim = 64, 2, 32, 1024

    key = jax.random.PRNGKey(0)
    pk, kx, kc = jax.random.split(key, 3)
    params = init_params(pk, dim=dim, mlp_dim=mlp_dim)
    x = jax.random.normal(kx, (B, N, dim), jnp.float32)
    c2 = jax.random.normal(kc, (B, M, dim), jnp.float32)

    fwd = jax.jit(functools.partial(
        transformer_global4_forward, heads=heads, dim_head=dim_head,
        project_out=not (heads == 1 and dim_head == dim)))
    out = fwd(params, c2, x)
    jax.block_until_ready(out)

    assert out.shape == (B, N, dim), out.shape
    assert jnp.isfinite(out).all()
    print("KERNEL_OK")
</pallas_src>

<mosaic_0001>
module attributes {stable_mosaic.version = 11 : i64} {
  func.func @_fused_kernel(%arg0: i32, %arg1: memref<1x128x64xf32, #tpu.memory_space<vmem>>, %arg2: memref<1x64x64xf32, #tpu.memory_space<vmem>>, %arg3: memref<10x64xf32, #tpu.memory_space<vmem>>, %arg4: memref<1x1024xf32, #tpu.memory_space<vmem>>, %arg5: memref<64x64xf32, #tpu.memory_space<vmem>>, %arg6: memref<64x64xf32, #tpu.memory_space<vmem>>, %arg7: memref<64x64xf32, #tpu.memory_space<vmem>>, %arg8: memref<64x64xf32, #tpu.memory_space<vmem>>, %arg9: memref<64x1024xf32, #tpu.memory_space<vmem>>, %arg10: memref<1024x64xf32, #tpu.memory_space<vmem>>, %arg11: memref<1x128x64xf32, #tpu.memory_space<vmem>>) attributes {dimension_semantics = [#tpu.dimension_semantics<parallel>], iteration_bounds = array<i64: 2>, scalar_prefetch = 0 : i64, scratch_operands = 0 : i64, tpu.core_type = #tpu.core_type<tc>, window_params = [{transform_indices = @transform_0, window_bounds = array<i64: 1, 128, 64>}, {transform_indices = @transform_1, window_bounds = array<i64: 1, 64, 64>}, {pipeline_mode = #tpu.pipeline_mode<synchronous>, transform_indices = @transform_2, window_bounds = array<i64: 10, 64>}, {pipeline_mode = #tpu.pipeline_mode<synchronous>, transform_indices = @transform_3, window_bounds = array<i64: 1, 1024>}, {pipeline_mode = #tpu.pipeline_mode<synchronous>, transform_indices = @transform_4, window_bounds = array<i64: 64, 64>}, {pipeline_mode = #tpu.pipeline_mode<synchronous>, transform_indices = @transform_5, window_bounds = array<i64: 64, 64>}, {pipeline_mode = #tpu.pipeline_mode<synchronous>, transform_indices = @transform_6, window_bounds = array<i64: 64, 64>}, {pipeline_mode = #tpu.pipeline_mode<synchronous>, transform_indices = @transform_7, window_bounds = array<i64: 64, 64>}, {pipeline_mode = #tpu.pipeline_mode<synchronous>, transform_indices = @transform_8, window_bounds = array<i64: 64, 1024>}, {pipeline_mode = #tpu.pipeline_mode<synchronous>, transform_indices = @transform_9, window_bounds = array<i64: 1024, 64>}, {transform_indices = @transform_10, window_bounds = array<i64: 1, 128, 64>}]} {
    %c0 = arith.constant 0 : index
    %c0_0 = arith.constant 0 : index
    %c0_1 = arith.constant 0 : index
    %0 = vector.load %arg1[%c0, %c0_0, %c0_1] : memref<1x128x64xf32, #tpu.memory_space<vmem>>, vector<1x128x64xf32>
    %1 = vector.shape_cast %0 : vector<1x128x64xf32> to vector<128x64xf32>
    %c0_2 = arith.constant 0 : index
    %c0_3 = arith.constant 0 : index
    %c0_4 = arith.constant 0 : index
    %2 = vector.load %arg2[%c0_2, %c0_3, %c0_4] : memref<1x64x64xf32, #tpu.memory_space<vmem>>, vector<1x64x64xf32>
    %3 = vector.shape_cast %2 : vector<1x64x64xf32> to vector<64x64xf32>
    %c0_5 = arith.constant 0 : index
    %c0_6 = arith.constant 0 : index
    %4 = vector.load %arg3[%c0_5, %c0_6] : memref<10x64xf32, #tpu.memory_space<vmem>>, vector<10x64xf32>
    %5 = vector.extract_strided_slice %4 {offsets = [0, 0], sizes = [1, 64], strides = [1, 1]} : vector<10x64xf32> to vector<1x64xf32>
    %6 = vector.extract_strided_slice %4 {offsets = [1, 0], sizes = [1, 64], strides = [1, 1]} : vector<10x64xf32> to vector<1x64xf32>
    %cst = arith.constant dense<0.000000e+00> : vector<128xf32>
    %7 = vector.multi_reduction <add>, %1, %cst [1] : vector<128x64xf32> to vector<128xf32>
    %8 = vector.shape_cast %7 : vector<128xf32> to vector<128x1xf32>
    %cst_7 = arith.constant 6.400000e+01 : f32
    %9 = vector.broadcast %cst_7 : f32 to vector<128x1xf32>
    %10 = arith.divf %8, %9 : vector<128x1xf32>
    %11 = vector.broadcast %10 : vector<128x1xf32> to vector<128x64xf32>
    %12 = arith.subf %1, %11 : vector<128x64xf32>
    %13 = arith.mulf %12, %12 : vector<128x64xf32>
    %cst_8 = arith.constant dense<0.000000e+00> : vector<128xf32>
    %14 = vector.multi_reduction <add>, %13, %cst_8 [1] : vector<128x64xf32> to vector<128xf32>
    %15 = vector.shape_cast %14 : vector<128xf32> to vector<128x1xf32>
    %cst_9 = arith.constant 6.400000e+01 : f32
    %16 = vector.broadcast %cst_9 : f32 to vector<128x1xf32>
    %17 = arith.divf %15, %16 : vector<128x1xf32>
    %18 = vector.broadcast %10 : vector<128x1xf32> to vector<128x64xf32>
    %19 = arith.subf %1, %18 : vector<128x64xf32>
    %cst_10 = arith.constant 9.99999974E-6 : f32
    %20 = vector.broadcast %cst_10 : f32 to vector<128x1xf32>
    %21 = arith.addf %17, %20 : vector<128x1xf32>
    %22 = math.rsqrt %21 : vector<128x1xf32>
    %23 = vector.broadcast %22 : vector<128x1xf32> to vector<128x64xf32>
    %24 = arith.mulf %19, %23 : vector<128x64xf32>
    %25 = vector.broadcast %5 : vector<1x64xf32> to vector<128x64xf32>
    %26 = arith.mulf %24, %25 : vector<128x64xf32>
    %27 = vector.broadcast %6 : vector<1x64xf32> to vector<128x64xf32>
    %28 = arith.addf %26, %27 : vector<128x64xf32>
    %29 = vector.extract_strided_slice %4 {offsets = [2, 0], sizes = [1, 64], strides = [1, 1]} : vector<10x64xf32> to vector<1x64xf32>
    %30 = vector.extract_strided_slice %4 {offsets = [3, 0], sizes = [1, 64], strides = [1, 1]} : vector<10x64xf32> to vector<1x64xf32>
    %cst_11 = arith.constant dense<0.000000e+00> : vector<128xf32>
    %31 = vector.multi_reduction <add>, %28, %cst_11 [1] : vector<128x64xf32> to vector<128xf32>
    %32 = vector.shape_cast %31 : vector<128xf32> to vector<128x1xf32>
    %cst_12 = arith.constant 6.400000e+01 : f32
    %33 = vector.broadcast %cst_12 : f32 to vector<128x1xf32>
    %34 = arith.divf %32, %33 : vector<128x1xf32>
    %35 = vector.broadcast %34 : vector<128x1xf32> to vector<128x64xf32>
    %36 = arith.subf %28, %35 : vector<128x64xf32>
    %37 = arith.mulf %36, %36 : vector<128x64xf32>
    %cst_13 = arith.constant dense<0.000000e+00> : vector<128xf32>
    %38 = vector.multi_reduction <add>, %37, %cst_13 [1] : vector<128x64xf32> to vector<128xf32>
    %39 = vector.shape_cast %38 : vector<128xf32> to vector<128x1xf32>
    %cst_14 = arith.constant 6.400000e+01 : f32
    %40 = vector.broadcast %cst_14 : f32 to vector<128x1xf32>
    %41 = arith.divf %39, %40 : vector<128x1xf32>
    %42 = vector.broadcast %34 : vector<128x1xf32> to vector<128x64xf32>
    %43 = arith.subf %28, %42 : vector<128x64xf32>
    %cst_15 = arith.constant 9.99999974E-6 : f32
    %44 = vector.broadcast %cst_15 : f32 to vector<128x1xf32>
    %45 = arith.addf %41, %44 : vector<128x1xf32>
    %46 = math.rsqrt %45 : vector<128x1xf32>
    %47 = vector.broadcast %46 : vector<128x1xf32> to vector<128x64xf32>
    %48 = arith.mulf %43, %47 : vector<128x64xf32>
    %49 = vector.broadcast %29 : vector<1x64xf32> to vector<128x64xf32>
    %50 = arith.mulf %48, %49 : vector<128x64xf32>
    %51 = vector.broadcast %30 : vector<1x64xf32> to vector<128x64xf32>
    %52 = arith.addf %50, %51 : vector<128x64xf32>
    %53 = vector.extract_strided_slice %4 {offsets = [4, 0], sizes = [1, 64], strides = [1, 1]} : vector<10x64xf32> to vector<1x64xf32>
    %54 = vector.extract_strided_slice %4 {offsets = [5, 0], sizes = [1, 64], strides = [1, 1]} : vector<10x64xf32> to vector<1x64xf32>
    %cst_16 = arith.constant dense<0.000000e+00> : vector<128xf32>
    %55 = vector.multi_reduction <add>, %52, %cst_16 [1] : vector<128x64xf32> to vector<128xf32>
    %56 = vector.shape_cast %55 : vector<128xf32> to vector<128x1xf32>
    %cst_17 = arith.constant 6.400000e+01 : f32
    %57 = vector.broadcast %cst_17 : f32 to vector<128x1xf32>
    %58 = arith.divf %56, %57 : vector<128x1xf32>
    %59 = vector.broadcast %58 : vector<128x1xf32> to vector<128x64xf32>
    %60 = arith.subf %52, %59 : vector<128x64xf32>
    %61 = arith.mulf %60, %60 : vector<128x64xf32>
    %cst_18 = arith.constant dense<0.000000e+00> : vector<128xf32>
    %62 = vector.multi_reduction <add>, %61, %cst_18 [1] : vector<128x64xf32> to vector<128xf32>
    %63 = vector.shape_cast %62 : vector<128xf32> to vector<128x1xf32>
    %cst_19 = arith.constant 6.400000e+01 : f32
    %64 = vector.broadcast %cst_19 : f32 to vector<128x1xf32>
    %65 = arith.divf %63, %64 : vector<128x1xf32>
    %66 = vector.broadcast %58 : vector<128x1xf32> to vector<128x64xf32>
    %67 = arith.subf %52, %66 : vector<128x64xf32>
    %cst_20 = arith.constant 9.99999974E-6 : f32
    %68 = vector.broadcast %cst_20 : f32 to vector<128x1xf32>
    %69 = arith.addf %65, %68 : vector<128x1xf32>
    %70 = math.rsqrt %69 : vector<128x1xf32>
    %71 = vector.broadcast %70 : vector<128x1xf32> to vector<128x64xf32>
    %72 = arith.mulf %67, %71 : vector<128x64xf32>
    %73 = vector.broadcast %53 : vector<1x64xf32> to vector<128x64xf32>
    %74 = arith.mulf %72, %73 : vector<128x64xf32>
    %75 = vector.broadcast %54 : vector<1x64xf32> to vector<128x64xf32>
    %76 = arith.addf %74, %75 : vector<128x64xf32>
    %c0_21 = arith.constant 0 : index
    %c0_22 = arith.constant 0 : index
    %77 = vector.load %arg5[%c0_21, %c0_22] : memref<64x64xf32, #tpu.memory_space<vmem>>, vector<64x64xf32>
    %cst_23 = arith.constant dense<0.000000e+00> : vector<128x64xf32>
    %78 = tpu.matmul %76, %77, %cst_23 {dimension_numbers = #tpu.dot_dimension_numbers<[1], [0], [0], [1], [0, 0, 1, 1], [], []>} : vector<128x64xf32>, vector<64x64xf32>, vector<128x64xf32> -> vector<128x64xf32>
    %c0_24 = arith.constant 0 : index
    %c0_25 = arith.constant 0 : index
    %79 = vector.load %arg6[%c0_24, %c0_25] : memref<64x64xf32, #tpu.memory_space<vmem>>, vector<64x64xf32>
    %cst_26 = arith.constant dense<0.000000e+00> : vector<64x64xf32>
    %80 = tpu.matmul %3, %79, %cst_26 {dimension_numbers = #tpu.dot_dimension_numbers<[1], [0], [0], [1], [0, 0, 1, 1], [], []>} : vector<64x64xf32>, vector<64x64xf32>, vector<64x64xf32> -> vector<64x64xf32>
    %c0_27 = arith.constant 0 : index
    %c0_28 = arith.constant 0 : index
    %81 = vector.load %arg7[%c0_27, %c0_28] : memref<64x64xf32, #tpu.memory_space<vmem>>, vector<64x64xf32>
    %cst_29 = arith.constant dense<0.000000e+00> : vector<64x64xf32>
    %82 = tpu.matmul %3, %81, %cst_29 {dimension_numbers = #tpu.dot_dimension_numbers<[1], [0], [0], [1], [0, 0, 1, 1], [], []>} : vector<64x64xf32>, vector<64x64xf32>, vector<64x64xf32> -> vector<64x64xf32>
    %83 = vector.extract_strided_slice %4 {offsets = [8, 0], sizes = [1, 64], strides = [1, 1]} : vector<10x64xf32> to vector<1x64xf32>
    %84 = vector.extract_strided_slice %78 {offsets = [0, 0], sizes = [128, 32], strides = [1, 1]} : vector<128x64xf32> to vector<128x32xf32>
    %85 = vector.extract_strided_slice %80 {offsets = [0, 0], sizes = [64, 32], strides = [1, 1]} : vector<64x64xf32> to vector<64x32xf32>
    %86 = vector.extract_strided_slice %82 {offsets = [0, 0], sizes = [64, 32], strides = [1, 1]} : vector<64x64xf32> to vector<64x32xf32>
    %cst_30 = arith.constant dense<0.000000e+00> : vector<128x64xf32>
    %87 = tpu.matmul %84, %85, %cst_30 {dimension_numbers = #tpu.dot_dimension_numbers<[1], [1], [0], [0], [0, 0, 1, 0], [], []>} : vector<128x32xf32>, vector<64x32xf32>, vector<128x64xf32> -> vector<128x64xf32>
    %cst_31 = arith.constant dense<0xFF800000> : vector<128xf32>
    %88 = vector.multi_reduction <maximumf>, %87, %cst_31 [1] : vector<128x64xf32> to vector<128xf32>
    %89 = vector.shape_cast %88 : vector<128xf32> to vector<128x1xf32>
    %90 = vector.broadcast %89 : vector<128x1xf32> to vector<128x64xf32>
    %91 = arith.subf %87, %90 : vector<128x64xf32>
    %92 = math.exp %91 : vector<128x64xf32>
    %cst_32 = arith.constant dense<0.000000e+00> : vector<128xf32>
    %93 = vector.multi_reduction <add>, %92, %cst_32 [1] : vector<128x64xf32> to vector<128xf32>
    %94 = vector.shape_cast %93 : vector<128xf32> to vector<128x1xf32>
    %95 = vector.broadcast %94 : vector<128x1xf32> to vector<128x64xf32>
    %96 = arith.divf %92, %95 : vector<128x64xf32>
    %cst_33 = arith.constant dense<0.000000e+00> : vector<128x32xf32>
    %97 = tpu.matmul %96, %86, %cst_33 {dimension_numbers = #tpu.dot_dimension_numbers<[1], [0], [0], [1], [0, 0, 1, 1], [], []>} : vector<128x64xf32>, vector<64x32xf32>, vector<128x32xf32> -> vector<128x32xf32>
    %c0_34 = arith.constant 0 : index
    %c0_35 = arith.constant 0 : index
    %98 = vector.load %arg8[%c0_34, %c0_35] : memref<64x64xf32, #tpu.memory_space<vmem>>, vector<32x64xf32>
    %cst_36 = arith.constant dense<0.000000e+00> : vector<128x64xf32>
    %99 = tpu.matmul %97, %98, %cst_36 {dimension_numbers = #tpu.dot_dimension_numbers<[1], [0], [0], [1], [0, 0, 1, 1], [], []>} : vector<128x32xf32>, vector<32x64xf32>, vector<128x64xf32> -> vector<128x64xf32>
    %100 = vector.broadcast %83 : vector<1x64xf32> to vector<128x64xf32>
    %101 = arith.addf %100, %99 : vector<128x64xf32>
    %102 = vector.extract_strided_slice %78 {offsets = [0, 32], sizes = [128, 32], strides = [1, 1]} : vector<128x64xf32> to vector<128x32xf32>
    %103 = vector.extract_strided_slice %80 {offsets = [0, 32], sizes = [64, 32], strides = [1, 1]} : vector<64x64xf32> to vector<64x32xf32>
    %104 = vector.extract_strided_slice %82 {offsets = [0, 32], sizes = [64, 32], strides = [1, 1]} : vector<64x64xf32> to vector<64x32xf32>
    %cst_37 = arith.constant dense<0.000000e+00> : vector<128x64xf32>
    %105 = tpu.matmul %102, %103, %cst_37 {dimension_numbers = #tpu.dot_dimension_numbers<[1], [1], [0], [0], [0, 0, 1, 0], [], []>} : vector<128x32xf32>, vector<64x32xf32>, vector<128x64xf32> -> vector<128x64xf32>
    %cst_38 = arith.constant dense<0xFF800000> : vector<128xf32>
    %106 = vector.multi_reduction <maximumf>, %105, %cst_38 [1] : vector<128x64xf32> to vector<128xf32>
    %107 = vector.shape_cast %106 : vector<128xf32> to vector<128x1xf32>
    %108 = vector.broadcast %107 : vector<128x1xf32> to vector<128x64xf32>
    %109 = arith.subf %105, %108 : vector<128x64xf32>
    %110 = math.exp %109 : vector<128x64xf32>
    %cst_39 = arith.constant dense<0.000000e+00> : vector<128xf32>
    %111 = vector.multi_reduction <add>, %110, %cst_39 [1] : vector<128x64xf32> to vector<128xf32>
    %112 = vector.shape_cast %111 : vector<128xf32> to vector<128x1xf32>
    %113 = vector.broadcast %112 : vector<128x1xf32> to vector<128x64xf32>
    %114 = arith.divf %110, %113 : vector<128x64xf32>
    %cst_40 = arith.constant dense<0.000000e+00> : vector<128x32xf32>
    %115 = tpu.matmul %114, %104, %cst_40 {dimension_numbers = #tpu.dot_dimension_numbers<[1], [0], [0], [1], [0, 0, 1, 1], [], []>} : vector<128x64xf32>, vector<64x32xf32>, vector<128x32xf32> -> vector<128x32xf32>
    %c32 = arith.constant 32 : index
    %c0_41 = arith.constant 0 : index
    %116 = vector.load %arg8[%c32, %c0_41] : memref<64x64xf32, #tpu.memory_space<vmem>>, vector<32x64xf32>
    %cst_42 = arith.constant dense<0.000000e+00> : vector<128x64xf32>
    %117 = tpu.matmul %115, %116, %cst_42 {dimension_numbers = #tpu.dot_dimension_numbers<[1], [0], [0], [1], [0, 0, 1, 1], [], []>} : vector<128x32xf32>, vector<32x64xf32>, vector<128x64xf32> -> vector<128x64xf32>
    %118 = arith.addf %101, %117 : vector<128x64xf32>
    %119 = arith.addf %118, %76 : vector<128x64xf32>
    %120 = vector.extract_strided_slice %4 {offsets = [6, 0], sizes = [1, 64], strides = [1, 1]} : vector<10x64xf32> to vector<1x64xf32>
    %121 = vector.extract_strided_slice %4 {offsets = [7, 0], sizes = [1, 64], strides = [1, 1]} : vector<10x64xf32> to vector<1x64xf32>
    %cst_43 = arith.constant dense<0.000000e+00> : vector<128xf32>
    %122 = vector.multi_reduction <add>, %119, %cst_43 [1] : vector<128x64xf32> to vector<128xf32>
    %123 = vector.shape_cast %122 : vector<128xf32> to vector<128x1xf32>
    %cst_44 = arith.constant 6.400000e+01 : f32
    %124 = vector.broadcast %cst_44 : f32 to vector<128x1xf32>
    %125 = arith.divf %123, %124 : vector<128x1xf32>
    %126 = vector.broadcast %125 : vector<128x1xf32> to vector<128x64xf32>
    %127 = arith.subf %119, %126 : vector<128x64xf32>
    %128 = arith.mulf %127, %127 : vector<128x64xf32>
    %cst_45 = arith.constant dense<0.000000e+00> : vector<128xf32>
    %129 = vector.multi_reduction <add>, %128, %cst_45 [1] : vector<128x64xf32> to vector<128xf32>
    %130 = vector.shape_cast %129 : vector<128xf32> to vector<128x1xf32>
    %cst_46 = arith.constant 6.400000e+01 : f32
    %131 = vector.broadcast %cst_46 : f32 to vector<128x1xf32>
    %132 = arith.divf %130, %131 : vector<128x1xf32>
    %133 = vector.broadcast %125 : vector<128x1xf32> to vector<128x64xf32>
    %134 = arith.subf %119, %133 : vector<128x64xf32>
    %cst_47 = arith.constant 9.99999974E-6 : f32
    %135 = vector.broadcast %cst_47 : f32 to vector<128x1xf32>
    %136 = arith.addf %132, %135 : vector<128x1xf32>
    %137 = math.rsqrt %136 : vector<128x1xf32>
    %138 = vector.broadcast %137 : vector<128x1xf32> to vector<128x64xf32>
    %139 = arith.mulf %134, %138 : vector<128x64xf32>
    %140 = vector.broadcast %120 : vector<1x64xf32> to vector<128x64xf32>
    %141 = arith.mulf %139, %140 : vector<128x64xf32>
    %142 = vector.broadcast %121 : vector<1x64xf32> to vector<128x64xf32>
    %143 = arith.addf %141, %142 : vector<128x64xf32>
    %144 = vector.extract_strided_slice %4 {offsets = [9, 0], sizes = [1, 64], strides = [1, 1]} : vector<10x64xf32> to vector<1x64xf32>
    %c0_48 = arith.constant 0 : index
    %c0_49 = arith.constant 0 : index
    %145 = vector.load %arg9[%c0_48, %c0_49] : memref<64x1024xf32, #tpu.memory_space<vmem>>, vector<64x256xf32>
    %cst_50 = arith.constant dense<0.000000e+00> : vector<128x256xf32>
    %146 = tpu.matmul %143, %145, %cst_50 {dimension_numbers = #tpu.dot_dimension_numbers<[1], [0], [0], [1], [0, 0, 1, 1], [], []>} : vector<128x64xf32>, vector<64x256xf32>, vector<128x256xf32> -> vector<128x256xf32>
    %c0_51 = arith.constant 0 : index
    %c0_52 = arith.constant 0 : index
    %147 = vector.load %arg4[%c0_51, %c0_52] : memref<1x1024xf32, #tpu.memory_space<vmem>>, vector<1x256xf32>
    %148 = vector.broadcast %147 : vector<1x256xf32> to vector<128x256xf32>
    %149 = arith.addf %146, %148 : vector<128x256xf32>
    %cst_53 = arith.constant 0.000000e+00 : f32
    %150 = vector.broadcast %cst_53 : f32 to vector<128x256xf32>
    %151 = arith.maximumf %149, %150 : vector<128x256xf32>
    %c0_54 = arith.constant 0 : index
    %c0_55 = arith.constant 0 : index
    %152 = vector.load %arg10[%c0_54, %c0_55] : memref<1024x64xf32, #tpu.memory_space<vmem>>, vector<256x64xf32>
    %cst_56 = arith.constant dense<0.000000e+00> : vector<128x64xf32>
    %153 = tpu.matmul %151, %152, %cst_56 {dimension_numbers = #tpu.dot_dimension_numbers<[1], [0], [0], [1], [0, 0, 1, 1], [], []>} : vector<128x256xf32>, vector<256x64xf32>, vector<128x64xf32> -> vector<128x64xf32>
    %154 = vector.broadcast %144 : vector<1x64xf32> to vector<128x64xf32>
    %155 = arith.addf %154, %153 : vector<128x64xf32>
    %c0_57 = arith.constant 0 : index
    %c256 = arith.constant 256 : index
    %156 = vector.load %arg9[%c0_57, %c256] : memref<64x1024xf32, #tpu.memory_space<vmem>>, vector<64x256xf32>
    %cst_58 = arith.constant dense<0.000000e+00> : vector<128x256xf32>
    %157 = tpu.matmul %143, %156, %cst_58 {dimension_numbers = #tpu.dot_dimension_numbers<[1], [0], [0], [1], [0, 0, 1, 1], [], []>} : vector<128x64xf32>, vector<64x256xf32>, vector<128x256xf32> -> vector<128x256xf32>
    %c0_59 = arith.constant 0 : index
    %c256_60 = arith.constant 256 : index
    %158 = vector.load %arg4[%c0_59, %c256_60] : memref<1x1024xf32, #tpu.memory_space<vmem>>, vector<1x256xf32>
    %159 = vector.broadcast %158 : vector<1x256xf32> to vector<128x256xf32>
    %160 = arith.addf %157, %159 : vector<128x256xf32>
    %cst_61 = arith.constant 0.000000e+00 : f32
    %161 = vector.broadcast %cst_61 : f32 to vector<128x256xf32>
    %162 = arith.maximumf %160, %161 : vector<128x256xf32>
    %c256_62 = arith.constant 256 : index
    %c0_63 = arith.constant 0 : index
    %163 = vector.load %arg10[%c256_62, %c0_63] : memref<1024x64xf32, #tpu.memory_space<vmem>>, vector<256x64xf32>
    %cst_64 = arith.constant dense<0.000000e+00> : vector<128x64xf32>
    %164 = tpu.matmul %162, %163, %cst_64 {dimension_numbers = #tpu.dot_dimension_numbers<[1], [0], [0], [1], [0, 0, 1, 1], [], []>} : vector<128x256xf32>, vector<256x64xf32>, vector<128x64xf32> -> vector<128x64xf32>
    %165 = arith.addf %155, %164 : vector<128x64xf32>
    %c0_65 = arith.constant 0 : index
    %c512 = arith.constant 512 : index
    %166 = vector.load %arg9[%c0_65, %c512] : memref<64x1024xf32, #tpu.memory_space<vmem>>, vector<64x256xf32>
    %cst_66 = arith.constant dense<0.000000e+00> : vector<128x256xf32>
    %167 = tpu.matmul %143, %166, %cst_66 {dimension_numbers = #tpu.dot_dimension_numbers<[1], [0], [0], [1], [0, 0, 1, 1], [], []>} : vector<128x64xf32>, vector<64x256xf32>, vector<128x256xf32> -> vector<128x256xf32>
    %c0_67 = arith.constant 0 : index
    %c512_68 = arith.constant 512 : index
    %168 = vector.load %arg4[%c0_67, %c512_68] : memref<1x1024xf32, #tpu.memory_space<vmem>>, vector<1x256xf32>
    %169 = vector.broadcast %168 : vector<1x256xf32> to vector<128x256xf32>
    %170 = arith.addf %167, %169 : vector<128x256xf32>
    %cst_69 = arith.constant 0.000000e+00 : f32
    %171 = vector.broadcast %cst_69 : f32 to vector<128x256xf32>
    %172 = arith.maximumf %170, %171 : vector<128x256xf32>
    %c512_70 = arith.constant 512 : index
    %c0_71 = arith.constant 0 : index
    %173 = vector.load %arg10[%c512_70, %c0_71] : memref<1024x64xf32, #tpu.memory_space<vmem>>, vector<256x64xf32>
    %cst_72 = arith.constant dense<0.000000e+00> : vector<128x64xf32>
    %174 = tpu.matmul %172, %173, %cst_72 {dimension_numbers = #tpu.dot_dimension_numbers<[1], [0], [0], [1], [0, 0, 1, 1], [], []>} : vector<128x256xf32>, vector<256x64xf32>, vector<128x64xf32> -> vector<128x64xf32>
    %175 = arith.addf %165, %174 : vector<128x64xf32>
    %c0_73 = arith.constant 0 : index
    %c768 = arith.constant 768 : index
    %176 = vector.load %arg9[%c0_73, %c768] : memref<64x1024xf32, #tpu.memory_space<vmem>>, vector<64x256xf32>
    %cst_74 = arith.constant dense<0.000000e+00> : vector<128x256xf32>
    %177 = tpu.matmul %143, %176, %cst_74 {dimension_numbers = #tpu.dot_dimension_numbers<[1], [0], [0], [1], [0, 0, 1, 1], [], []>} : vector<128x64xf32>, vector<64x256xf32>, vector<128x256xf32> -> vector<128x256xf32>
    %c0_75 = arith.constant 0 : index
    %c768_76 = arith.constant 768 : index
    %178 = vector.load %arg4[%c0_75, %c768_76] : memref<1x1024xf32, #tpu.memory_space<vmem>>, vector<1x256xf32>
    %179 = vector.broadcast %178 : vector<1x256xf32> to vector<128x256xf32>
    %180 = arith.addf %177, %179 : vector<128x256xf32>
    %cst_77 = arith.constant 0.000000e+00 : f32
    %181 = vector.broadcast %cst_77 : f32 to vector<128x256xf32>
    %182 = arith.maximumf %180, %181 : vector<128x256xf32>
    %c768_78 = arith.constant 768 : index
    %c0_79 = arith.constant 0 : index
    %183 = vector.load %arg10[%c768_78, %c0_79] : memref<1024x64xf32, #tpu.memory_space<vmem>>, vector<256x64xf32>
    %cst_80 = arith.constant dense<0.000000e+00> : vector<128x64xf32>
    %184 = tpu.matmul %182, %183, %cst_80 {dimension_numbers = #tpu.dot_dimension_numbers<[1], [0], [0], [1], [0, 0, 1, 1], [], []>} : vector<128x256xf32>, vector<256x64xf32>, vector<128x64xf32> -> vector<128x64xf32>
    %185 = arith.addf %175, %184 : vector<128x64xf32>
    %186 = arith.addf %143, %185 : vector<128x64xf32>
    %c0_81 = arith.constant 0 : index
    %c0_82 = arith.constant 0 : index
    %c0_83 = arith.constant 0 : index
    %187 = vector.load %arg11[%c0_81, %c0_82, %c0_83] : memref<1x128x64xf32, #tpu.memory_space<vmem>>, vector<1x128x64xf32>
    %188 = vector.shape_cast %187 : vector<1x128x64xf32> to vector<128x64xf32>
    %189 = vector.shape_cast %186 : vector<128x64xf32> to vector<1x128x64xf32>
    tpu.vector_store %arg11[%c0_81, %c0_82, %c0_83], %189 {strides = array<i32>} : memref<1x128x64xf32, #tpu.memory_space<vmem>>, vector<1x128x64xf32>,
    return
  }
  func.func @transform_0(%arg0: i32) -> (i32, i32, i32) {
    %c0_i32 = arith.constant 0 : i32
    %c0_i32_0 = arith.constant 0 : i32
    %c0_i32_1 = arith.constant 0 : i32
    return %arg0, %c0_i32, %c0_i32_0 : i32, i32, i32
  }
  func.func @transform_1(%arg0: i32) -> (i32, i32, i32) {
    %c0_i32 = arith.constant 0 : i32
    %c0_i32_0 = arith.constant 0 : i32
    %c0_i32_1 = arith.constant 0 : i32
    return %arg0, %c0_i32, %c0_i32_0 : i32, i32, i32
  }
  func.func @transform_2(%arg0: i32) -> (i32, i32) {
    %c0_i32 = arith.constant 0 : i32
    %c0_i32_0 = arith.constant 0 : i32
    %c0_i32_1 = arith.constant 0 : i32
    return %c0_i32, %c0_i32_0 : i32, i32
  }
  func.func @transform_3(%arg0: i32) -> (i32, i32) {
    %c0_i32 = arith.constant 0 : i32
    %c0_i32_0 = arith.constant 0 : i32
    %c0_i32_1 = arith.constant 0 : i32
    return %c0_i32, %c0_i32_0 : i32, i32
  }
  func.func @transform_4(%arg0: i32) -> (i32, i32) {
    %c0_i32 = arith.constant 0 : i32
    %c0_i32_0 = arith.constant 0 : i32
    %c0_i32_1 = arith.constant 0 : i32
    return %c0_i32, %c0_i32_0 : i32, i32
  }
  func.func @transform_5(%arg0: i32) -> (i32, i32) {
    %c0_i32 = arith.constant 0 : i32
    %c0_i32_0 = arith.constant 0 : i32
    %c0_i32_1 = arith.constant 0 : i32
    return %c0_i32, %c0_i32_0 : i32, i32
  }
  func.func @transform_6(%arg0: i32) -> (i32, i32) {
    %c0_i32 = arith.constant 0 : i32
    %c0_i32_0 = arith.constant 0 : i32
    %c0_i32_1 = arith.constant 0 : i32
    return %c0_i32, %c0_i32_0 : i32, i32
  }
  func.func @transform_7(%arg0: i32) -> (i32, i32) {
    %c0_i32 = arith.constant 0 : i32
    %c0_i32_0 = arith.constant 0 : i32
    %c0_i32_1 = arith.constant 0 : i32
    return %c0_i32, %c0_i32_0 : i32, i32
  }
  func.func @transform_8(%arg0: i32) -> (i32, i32) {
    %c0_i32 = arith.constant 0 : i32
    %c0_i32_0 = arith.constant 0 : i32
    %c0_i32_1 = arith.constant 0 : i32
    return %c0_i32, %c0_i32_0 : i32, i32
  }
  func.func @transform_9(%arg0: i32) -> (i32, i32) {
    %c0_i32 = arith.constant 0 : i32
    %c0_i32_0 = arith.constant 0 : i32
    %c0_i32_1 = arith.constant 0 : i32
    return %c0_i32, %c0_i32_0 : i32, i32
  }
  func.func @transform_10(%arg0: i32) -> (i32, i32, i32) {
    %c0_i32 = arith.constant 0 : i32
    %c0_i32_0 = arith.constant 0 : i32
    %c0_i32_1 = arith.constant 0 : i32
    return %arg0, %c0_i32, %c0_i32_0 : i32, i32, i32
  }
}

</mosaic_0001>

<llo_original>
// kernel: transformer_global4_forward.1
$region0: #{transformer_global4_forward.1}
  #allocation0 [shape = 'u32[]', space=smem, size = 0x4, offset = 0x4, fixed_abs, tag = 'smem constant byte address 0x4 - core index']
  #allocation1 [shape = 'u32[144,128]{1,0:T(1,128)}', space=vmem, size = 0x12000, scoped, tag = 'internal scratch']
  %s0 = inlined_call_operand.vmem [shape: f32[2,128,64], index: 0, kind: input, shape index: {}]
  %s1 = inlined_call_operand.vmem [shape: f32[2,64,64], index: 1, kind: input, shape index: {}]
  %s2 = inlined_call_operand.vmem [shape: f32[10,64], index: 2, kind: input, shape index: {}]
  %s3 = inlined_call_operand.vmem [shape: f32[1,1024], index: 3, kind: input, shape index: {}]
  %s4 = inlined_call_operand.vmem [shape: f32[64,64], index: 4, kind: input, shape index: {}]
  %s5 = inlined_call_operand.vmem [shape: f32[64,64], index: 5, kind: input, shape index: {}]
  %s6 = inlined_call_operand.vmem [shape: f32[64,64], index: 6, kind: input, shape index: {}]
  %s7 = inlined_call_operand.vmem [shape: f32[64,64], index: 7, kind: input, shape index: {}]
  %s8 = inlined_call_operand.vmem [shape: f32[64,1024], index: 8, kind: input, shape index: {}]
  %s9 = inlined_call_operand.vmem [shape: f32[1024,64], index: 9, kind: input, shape index: {}]
  %s10 = inlined_call_operand.vmem [shape: f32[2,128,64], index: 10, kind: output, shape index: {}]
  %s11 = sld [smem:[#allocation0]]
  $region73: #{transformer_global4_forward.1} parent=0
    _
  %s13 = ssub.s32 1, %s11
  %s14 = scalar_select 0, %s13, %s11
  loop: start=0, step=1, limit=4
  $region2: #{transformer_global4_forward.1} parent=0 // loop_pre_header
    _
  $region3: #{transformer_global4_forward.1} parent=0 // loop_header
    %s16 = sphi 0, %s20
    %p17 = scmp.ge.s32.totalorder %s16, 4
    %s26 = sphi 0, %s28
    %s29 = sphi 0, %s26
    %s30 = sphi 0, %s29
    %s46 = sphi 0, %s30
    %s52 = sphi 0, %s54
    %s55 = sphi 0, %s52
    %s56 = sphi 0, %s55
    %s72 = sphi 0, %s56
    %s76 = sphi 0, %s76
    %s78 = sphi 0, %s76
    %s79 = sphi 0, %s78
    %s93 = sphi 0, %s79
    %s97 = sphi 0, %s97
    %s99 = sphi 0, %s97
    %s100 = sphi 0, %s99
    %s114 = sphi 0, %s100
    %s118 = sphi 0, %s118
    %s120 = sphi 0, %s118
    %s121 = sphi 0, %s120
    %s135 = sphi 0, %s121
    %s139 = sphi 0, %s139
    %s141 = sphi 0, %s139
    %s142 = sphi 0, %s141
    %s156 = sphi 0, %s142
    %s160 = sphi 0, %s160
    %s162 = sphi 0, %s160
    %s163 = sphi 0, %s162
    %s177 = sphi 0, %s163
    %s181 = sphi 0, %s181
    %s183 = sphi 0, %s181
    %s184 = sphi 0, %s183
    %s198 = sphi 0, %s184
    %s202 = sphi 0, %s202
    %s204 = sphi 0, %s202
    %s205 = sphi 0, %s204
    %s219 = sphi 0, %s205
    %s223 = sphi 0, %s223
    %s225 = sphi 0, %s223
    %s226 = sphi 0, %s225
    %s240 = sphi 0, %s226
    %s246 = sphi 0, %s248
    %s249 = sphi 0, %s246
    %s250 = sphi 0, %s249
    %s266 = sphi 0, %s250
  $region4: #{transformer_global4_forward.1} parent=0 // loop_header_branch
    %19 = sbr.rel (%p17) target = $region8
  $region5: #{transformer_global4_forward.1} parent=0 // loop_body
    %s21 = ssub.s32 %s16, 1
    %s22 = ssub.s32 %s16, 2
    %s23 = sadd.s32 %s16, 1
    %s24 = ssub.s32 %s16, %s23
    %p25 = scmp.eq.s32.totalorder %s24, 0
    %s27 = sadd.s32 %s26, 1
    %s28 = scalar_select %p25, %s26, %s27
    %p31 = pneg %p25
    %p32 = scmp.eq.s32.totalorder %s16, 1
    %p33 = por %p31, %p32
    %p34 = scmp.ne.s32.totalorder %s26, %s29
    %p35 = scmp.eq.s32.totalorder %s16, 0
    %p36 = por %p34, %p35
    %p37 = scmp.ne.s32.totalorder %s26, %s29
    %p38 = scmp.eq.s32.totalorder %s21, 1
    %p39 = por %p37, %p38
    %p40 = scmp.ne.s32.totalorder %s29, %s30
    %p41 = scmp.eq.s32.totalorder %s21, 0
    %p42 = por %p40, %p41
    %p43 = scmp.ne.s32.totalorder %s29, %s30
    %p44 = scmp.eq.s32.totalorder %s22, 1
    %p45 = por %p43, %p44
    %p47 = scmp.ne.s32.totalorder %s30, %s46
    %p48 = scmp.eq.s32.totalorder %s22, 0
    %p49 = por %p47, %p48
    %s50 = ssub.s32 %s16, %s23
    %p51 = scmp.eq.s32.totalorder %s50, 0
    %s53 = sadd.s32 %s52, 1
    %s54 = scalar_select %p51, %s52, %s53
    %p57 = pneg %p51
    %p58 = scmp.eq.s32.totalorder %s16, 1
    %p59 = por %p57, %p58
    %p60 = scmp.ne.s32.totalorder %s52, %s55
    %p61 = scmp.eq.s32.totalorder %s16, 0
    %p62 = por %p60, %p61
    %p63 = scmp.ne.s32.totalorder %s52, %s55
    %p64 = scmp.eq.s32.totalorder %s21, 1
    %p65 = por %p63, %p64
    %p66 = scmp.ne.s32.totalorder %s55, %s56
    %p67 = scmp.eq.s32.totalorder %s21, 0
    %p68 = por %p66, %p67
    %p69 = scmp.ne.s32.totalorder %s55, %s56
    %p70 = scmp.eq.s32.totalorder %s22, 1
    %p71 = por %p69, %p70
    %p73 = scmp.ne.s32.totalorder %s56, %s72
    %p74 = scmp.eq.s32.totalorder %s22, 0
    %p75 = por %p73, %p74
    %s77 = sadd.s32 %s76, 1
    %p80 = scmp.eq.s32.totalorder %s16, 1
    %p81 = scmp.ne.s32.totalorder %s76, %s78
    %p82 = scmp.eq.s32.totalorder %s16, 0
    %p83 = por %p81, %p82
    %p84 = scmp.ne.s32.totalorder %s76, %s78
    %p85 = scmp.eq.s32.totalorder %s21, 1
    %p86 = por %p84, %p85
    %p87 = scmp.ne.s32.totalorder %s78, %s79
    %p88 = scmp.eq.s32.totalorder %s21, 0
    %p89 = por %p87, %p88
    %p90 = scmp.ne.s32.totalorder %s78, %s79
    %p91 = scmp.eq.s32.totalorder %s22, 1
    %p92 = por %p90, %p91
    %p94 = scmp.ne.s32.totalorder %s79, %s93
    %p95 = scmp.eq.s32.totalorder %s22, 0
    %p96 = por %p94, %p95
    %s98 = sadd.s32 %s97, 1
    %p101 = scmp.eq.s32.totalorder %s16, 1
    %p102 = scmp.ne.s32.totalorder %s97, %s99
    %p103 = scmp.eq.s32.totalorder %s16, 0
    %p104 = por %p102, %p103
    %p105 = scmp.ne.s32.totalorder %s97, %s99
    %p106 = scmp.eq.s32.totalorder %s21, 1
    %p107 = por %p105, %p106
    %p108 = scmp.ne.s32.totalorder %s99, %s100
    %p109 = scmp.eq.s32.totalorder %s21, 0
    %p110 = por %p108, %p109
    %p111 = scmp.ne.s32.totalorder %s99, %s100
    %p112 = scmp.eq.s32.totalorder %s22, 1
    %p113 = por %p111, %p112
    %p115 = scmp.ne.s32.totalorder %s100, %s114
    %p116 = scmp.eq.s32.totalorder %s22, 0
    %p117 = por %p115, %p116
    %s119 = sadd.s32 %s118, 1
    %p122 = scmp.eq.s32.totalorder %s16, 1
    %p123 = scmp.ne.s32.totalorder %s118, %s120
    %p124 = scmp.eq.s32.totalorder %s16, 0
    %p125 = por %p123, %p124
    %p126 = scmp.ne.s32.totalorder %s118, %s120
    %p127 = scmp.eq.s32.totalorder %s21, 1
    %p128 = por %p126, %p127
    %p129 = scmp.ne.s32.totalorder %s120, %s121
    %p130 = scmp.eq.s32.totalorder %s21, 0
    %p131 = por %p129, %p130
    %p132 = scmp.ne.s32.totalorder %s120, %s121
    %p133 = scmp.eq.s32.totalorder %s22, 1
    %p134 = por %p132, %p133
    %p136 = scmp.ne.s32.totalorder %s121, %s135
    %p137 = scmp.eq.s32.totalorder %s22, 0
    %p138 = por %p136, %p137
    %s140 = sadd.s32 %s139, 1
    %p143 = scmp.eq.s32.totalorder %s16, 1
    %p144 = scmp.ne.s32.totalorder %s139, %s141
    %p145 = scmp.eq.s32.totalorder %s16, 0
    %p146 = por %p144, %p145
    %p147 = scmp.ne.s32.totalorder %s139, %s141
    %p148 = scmp.eq.s32.totalorder %s21, 1
    %p149 = por %p147, %p148
    %p150 = scmp.ne.s32.totalorder %s141, %s142
    %p151 = scmp.eq.s32.totalorder %s21, 0
    %p152 = por %p150, %p151
    %p153 = scmp.ne.s32.totalorder %s141, %s142
    %p154 = scmp.eq.s32.totalorder %s22, 1
    %p155 = por %p153, %p154
    %p157 = scmp.ne.s32.totalorder %s142, %s156
    %p158 = scmp.eq.s32.totalorder %s22, 0
    %p159 = por %p157, %p158
    %s161 = sadd.s32 %s160, 1
    %p164 = scmp.eq.s32.totalorder %s16, 1
    %p165 = scmp.ne.s32.totalorder %s160, %s162
    %p166 = scmp.eq.s32.totalorder %s16, 0
    %p167 = por %p165, %p166
    %p168 = scmp.ne.s32.totalorder %s160, %s162
    %p169 = scmp.eq.s32.totalorder %s21, 1
    %p170 = por %p168, %p169
    %p171 = scmp.ne.s32.totalorder %s162, %s163
    %p172 = scmp.eq.s32.totalorder %s21, 0
    %p173 = por %p171, %p172
    %p174 = scmp.ne.s32.totalorder %s162, %s163
    %p175 = scmp.eq.s32.totalorder %s22, 1
    %p176 = por %p174, %p175
    %p178 = scmp.ne.s32.totalorder %s163, %s177
    %p179 = scmp.eq.s32.totalorder %s22, 0
    %p180 = por %p178, %p179
    %s182 = sadd.s32 %s181, 1
    %p185 = scmp.eq.s32.totalorder %s16, 1
    %p186 = scmp.ne.s32.totalorder %s181, %s183
    %p187 = scmp.eq.s32.totalorder %s16, 0
    %p188 = por %p186, %p187
    %p189 = scmp.ne.s32.totalorder %s181, %s183
    %p190 = scmp.eq.s32.totalorder %s21, 1
    %p191 = por %p189, %p190
    %p192 = scmp.ne.s32.totalorder %s183, %s184
    %p193 = scmp.eq.s32.totalorder %s21, 0
    %p194 = por %p192, %p193
    %p195 = scmp.ne.s32.totalorder %s183, %s184
    %p196 = scmp.eq.s32.totalorder %s22, 1
    %p197 = por %p195, %p196
    %p199 = scmp.ne.s32.totalorder %s184, %s198
    %p200 = scmp.eq.s32.totalorder %s22, 0
    %p201 = por %p199, %p200
    %s203 = sadd.s32 %s202, 1
    %p206 = scmp.eq.s32.totalorder %s16, 1
    %p207 = scmp.ne.s32.totalorder %s202, %s204
    %p208 = scmp.eq.s32.totalorder %s16, 0
    %p209 = por %p207, %p208
    %p210 = scmp.ne.s32.totalorder %s202, %s204
    %p211 = scmp.eq.s32.totalorder %s21, 1
    %p212 = por %p210, %p211
    %p213 = scmp.ne.s32.totalorder %s204, %s205
    %p214 = scmp.eq.s32.totalorder %s21, 0
    %p215 = por %p213, %p214
    %p216 = scmp.ne.s32.totalorder %s204, %s205
    %p217 = scmp.eq.s32.totalorder %s22, 1
    %p218 = por %p216, %p217
    %p220 = scmp.ne.s32.totalorder %s205, %s219
    %p221 = scmp.eq.s32.totalorder %s22, 0
    %p222 = por %p220, %p221
    %s224 = sadd.s32 %s223, 1
    %p227 = scmp.eq.s32.totalorder %s16, 1
    %p228 = scmp.ne.s32.totalorder %s223, %s225
    %p229 = scmp.eq.s32.totalorder %s16, 0
    %p230 = por %p228, %p229
    %p231 = scmp.ne.s32.totalorder %s223, %s225
    %p232 = scmp.eq.s32.totalorder %s21, 1
    %p233 = por %p231, %p232
    %p234 = scmp.ne.s32.totalorder %s225, %s226
    %p235 = scmp.eq.s32.totalorder %s21, 0
    %p236 = por %p234, %p235
    %p237 = scmp.ne.s32.totalorder %s225, %s226
    %p238 = scmp.eq.s32.totalorder %s22, 1
    %p239 = por %p237, %p238
    %p241 = scmp.ne.s32.totalorder %s226, %s240
    %p242 = scmp.eq.s32.totalorder %s22, 0
    %p243 = por %p241, %p242
    %s244 = ssub.s32 %s16, %s23
    %p245 = scmp.eq.s32.totalorder %s244, 0
    %s247 = sadd.s32 %s246, 1
    %s248 = scalar_select %p245, %s246, %s247
    %p251 = pneg %p245
    %p252 = scmp.eq.s32.totalorder %s16, 1
    %p253 = por %p251, %p252
    %p254 = scmp.ne.s32.totalorder %s246, %s249
    %p255 = scmp.eq.s32.totalorder %s16, 0
    %p256 = por %p254, %p255
    %p257 = scmp.ne.s32.totalorder %s246, %s249
    %p258 = scmp.eq.s32.totalorder %s21, 1
    %p259 = por %p257, %p258
    %p260 = scmp.ne.s32.totalorder %s249, %s250
    %p261 = scmp.eq.s32.totalorder %s21, 0
    %p262 = por %p260, %p261
    %p263 = scmp.ne.s32.totalorder %s249, %s250
    %p264 = scmp.eq.s32.totalorder %s22, 1
    %p265 = por %p263, %p264
    %p267 = scmp.ne.s32.totalorder %s250, %s266
    %p268 = scmp.eq.s32.totalorder %s22, 0
    %p269 = por %p267, %p268
    %p270 = scmp.le.s32.totalorder 1, %s16
    %p271 = scmp.lt.s32.totalorder %s16, 3
    %p272 = pnand %p270, %p271
    %p273 = pneg %p272
    // Predicated region
    $region9: #{transformer_global4_forward.1} parent=5 // pred_check
      _
    $region10: #{transformer_global4_forward.1} parent=5 // pred_check_branch
      %275 = sbr.rel (%p272) target = $region12
    $region11: #{transformer_global4_forward.1} parent=5 // pred_region
      %s276 = ssub.s32 %s16, 1
      // Predicated region
      $region13: #{transformer_global4_forward.1} parent=11 // pred_check
        %p277 = pneg %p89
      $region14: #{transformer_global4_forward.1} parent=11 // pred_check_branch
        %279 = sbr.rel (%p277) target = $region16
      $region15: #{transformer_global4_forward.1} parent=11 // pred_region
        _
      $region16: #{transformer_global4_forward.1} parent=11 // pred_fallthru
        _
      // Predicated region
      $region17: #{transformer_global4_forward.1} parent=11 // pred_check
        %p280 = pneg %p110
      $region18: #{transformer_global4_forward.1} parent=11 // pred_check_branch
        %282 = sbr.rel (%p280) target = $region20
      $region19: #{transformer_global4_forward.1} parent=11 // pred_region
        _
      $region20: #{transformer_global4_forward.1} parent=11 // pred_fallthru
        _
      // Predicated region
      $region21: #{transformer_global4_forward.1} parent=11 // pred_check
        %p283 = pneg %p131
      $region22: #{transformer_global4_forward.1} parent=11 // pred_check_branch
        %285 = sbr.rel (%p283) target = $region24
      $region23: #{transformer_global4_forward.1} parent=11 // pred_region
        _
      $region24: #{transformer_global4_forward.1} parent=11 // pred_fallthru
        _
      // Predicated region
      $region25: #{transformer_global4_forward.1} parent=11 // pred_check
        %p286 = pneg %p152
      $region26: #{transformer_global4_forward.1} parent=11 // pred_check_branch
        %288 = sbr.rel (%p286) target = $region28
      $region27: #{transformer_global4_forward.1} parent=11 // pred_region
        _
      $region28: #{transformer_global4_forward.1} parent=11 // pred_fallthru
        _
      // Predicated region
      $region29: #{transformer_global4_forward.1} parent=11 // pred_check
        %p289 = pneg %p173
      $region30: #{transformer_global4_forward.1} parent=11 // pred_check_branch
        %291 = sbr.rel (%p289) target = $region32
      $region31: #{transformer_global4_forward.1} parent=11 // pred_region
        _
      $region32: #{transformer_global4_forward.1} parent=11 // pred_fallthru
        _
      // Predicated region
      $region33: #{transformer_global4_forward.1} parent=11 // pred_check
        %p292 = pneg %p194
      $region34: #{transformer_global4_forward.1} parent=11 // pred_check_branch
        %294 = sbr.rel (%p292) target = $region36
      $region35: #{transformer_global4_forward.1} parent=11 // pred_region
        _
      $region36: #{transformer_global4_forward.1} parent=11 // pred_fallthru
        _
      // Predicated region
      $region37: #{transformer_global4_forward.1} parent=11 // pred_check
        %p295 = pneg %p215
      $region38: #{transformer_global4_forward.1} parent=11 // pred_check_branch
        %297 = sbr.rel (%p295) target = $region40
      $region39: #{transformer_global4_forward.1} parent=11 // pred_region
        _
      $region40: #{transformer_global4_forward.1} parent=11 // pred_fallthru
        _
      // Predicated region
      $region41: #{transformer_global4_forward.1} parent=11 // pred_check
        %p298 = pneg %p236
      $region42: #{transformer_global4_forward.1} parent=11 // pred_check_branch
        %300 = sbr.rel (%p298) target = $region44
      $region43: #{transformer_global4_forward.1} parent=11 // pred_region
        _
      $region44: #{transformer_global4_forward.1} parent=11 // pred_fallthru
        _
    $region12: #{transformer_global4_forward.1} parent=5 // pred_fallthru
      _
    %p301 = scmp.lt.s32.totalorder %s16, 2
    // Predicated region
    $region45: #{transformer_global4_forward.1} parent=5 // pred_check
      %p302 = pneg %p301
    $region46: #{transformer_global4_forward.1} parent=5 // pred_check_branch
      %304 = sbr.rel (%p302) target = $region48
    $region47: #{transformer_global4_forward.1} parent=5 // pred_region
      // Predicated region
      $region49: #{transformer_global4_forward.1} parent=47 // pred_check
        %p305 = pneg %p36
      $region50: #{transformer_global4_forward.1} parent=47 // pred_check_branch
        %307 = sbr.rel (%p305) target = $region52
      $region51: #{transformer_global4_forward.1} parent=47 // pred_region
        %p308 = scmp.lt.s32.totalorder %s16, 1
        %s309 = scalar_select %p308, %s16, 1
        %s310 = smul.addr %s309, 16
        %s311 = smul.addr %s310, 8
        %s312 = scalar_lea.vmem %s0, %s311
      $region52: #{transformer_global4_forward.1} parent=47 // pred_fallthru
        _
      // Predicated region
      $region53: #{transformer_global4_forward.1} parent=47 // pred_check
        %p313 = pneg %p62
      $region54: #{transformer_global4_forward.1} parent=47 // pred_check_branch
        %315 = sbr.rel (%p313) target = $region56
      $region55: #{transformer_global4_forward.1} parent=47 // pred_region
        %p316 = scmp.lt.s32.totalorder %s16, 1
        %s317 = scalar_select %p316, %s16, 1
        %s318 = smul.addr %s317, 8
        %s319 = smul.addr %s318, 8
        %s320 = scalar_lea.vmem %s1, %s319
      $region56: #{transformer_global4_forward.1} parent=47 // pred_fallthru
        _
    $region48: #{transformer_global4_forward.1} parent=5 // pred_fallthru
      _
    %p321 = scmp.le.s32.totalorder 1, %s16
    %p322 = scmp.lt.s32.totalorder %s16, 3
    %p323 = pnand %p321, %p322
    %p324 = pneg %p323
    // Predicated region
    $region57: #{transformer_global4_forward.1} parent=5 // pred_check
      _
    $region58: #{transformer_global4_forward.1} parent=5 // pred_check_branch
      %326 = sbr.rel (%p323) target = $region60
    $region59: #{transformer_global4_forward.1} parent=5 // pred_region
      %s327 = ssub.s32 %s16, 1
      %p328 = scmp.lt.s32.totalorder %s21, 1
      %s329 = scalar_select %p328, %s21, 1
      %s330 = smul.addr %s329, 16
      %s331 = smul.addr %s330, 8
      %s332 = scalar_lea.vmem %s0, %s331
      %p333 = pneg %p42
      %p334 = pneg %p39
      %p335 = scmp.lt.s32.totalorder %s21, 1
      %s336 = scalar_select %p335, %s21, 1
      %s337 = smul.addr %s336, 8
      %s338 = smul.addr %s337, 8
      %s339 = scalar_lea.vmem %s1, %s338
      %p340 = pneg %p68
      %p341 = pneg %p65
      %p342 = pneg %p89
      %p343 = pneg %p86
      %p344 = pneg %p110
      %p345 = pneg %p107
      %p346 = pneg %p131
      %p347 = pneg %p128
      %p348 = pneg %p152
      %p349 = pneg %p149
      %p350 = pneg %p173
      %p351 = pneg %p170
      %p352 = pneg %p194
      %p353 = pneg %p191
      %p354 = pneg %p215
      %p355 = pneg %p212
      %p356 = pneg %p236
      %p357 = pneg %p233
      %p358 = pneg %p262
      %p359 = pneg %p259
      %p360 = scmp.lt.s32.totalorder %s21, 1
      %s361 = scalar_select %p360, %s21, 1
      %s362 = smul.addr %s361, 16
      %s363 = smul.addr %s362, 8
      %s364 = scalar_lea.vmem %s10, %s363
      %p365 = scmp.lt.s32.totalorder %s21, 1
      %s366 = scalar_select %p365, %s21, 1
      %s367 = smul.addr %s366, 16
      %s368 = smul.addr %s367, 8
      %s369 = scalar_lea.vmem %s0, %s368
      %p370 = scmp.lt.s32.totalorder %s21, 1
      %s371 = scalar_select %p370, %s21, 1
      %s372 = smul.addr %s371, 8
      %s373 = smul.addr %s372, 8
      %s374 = scalar_lea.vmem %s1, %s373
      %p375 = scmp.lt.s32.totalorder %s21, 1
      %s376 = scalar_select %p375, %s21, 1
      %s377 = smul.addr %s376, 16
      %s378 = smul.addr %s377, 8
      %s379 = scalar_lea.vmem %s10, %s378
      %v380 = vld [vmem:[%s369] sm:$0xff]
      %v381 = vld [vmem:[%s369 + $0x8] sm:$0xff]
      %v382 = vld [vmem:[%s369 + $0x10] sm:$0xff]
      %v383 = vld [vmem:[%s369 + $0x18] sm:$0xff]
      %v384 = vld [vmem:[%s369 + $0x20] sm:$0xff]
      %v385 = vld [vmem:[%s369 + $0x28] sm:$0xff]
      %v386 = vld [vmem:[%s369 + $0x30] sm:$0xff]
      %v387 = vld [vmem:[%s369 + $0x38] sm:$0xff]
      %v388 = vld [vmem:[%s369 + $0x40] sm:$0xff]
      %v389 = vld [vmem:[%s369 + $0x48] sm:$0xff]
      %v390 = vld [vmem:[%s369 + $0x50] sm:$0xff]
      %v391 = vld [vmem:[%s369 + $0x58] sm:$0xff]
      %v392 = vld [vmem:[%s369 + $0x60] sm:$0xff]
      %v393 = vld [vmem:[%s369 + $0x68] sm:$0xff]
      %v394 = vld [vmem:[%s369 + $0x70] sm:$0xff]
      %v395 = vld [vmem:[%s369 + $0x78] sm:$0xff]
      %v396 = vld [vmem:[%s374] sm:$0xff]
      %v397 = vld [vmem:[%s374 + $0x8] sm:$0xff]
      %v398 = vld [vmem:[%s374 + $0x10] sm:$0xff]
      %v399 = vld [vmem:[%s374 + $0x18] sm:$0xff]
      %v400 = vld [vmem:[%s374 + $0x20] sm:$0xff]
      %v401 = vld [vmem:[%s374 + $0x28] sm:$0xff]
      %v402 = vld [vmem:[%s374 + $0x30] sm:$0xff]
      %v403 = vld [vmem:[%s374 + $0x38] sm:$0xff]
      %v404 = vld [vmem:[%s2] sm:$0xff]
      %v405 = vld [vmem:[%s2 + $0x8] sm:$0x3]
      %vm406 = vcmask 523264
      %v407 = vsel %vm406, %v380, 0.0
      %408 = vadd.xlane.f32.xlu0 %v407
      %v409 = vpop.xlane.xlu0 %408
      %v410 = vsel %vm406, %v381, 0.0
      %411 = vadd.xlane.f32.xlu0 %v410
      %v412 = vpop.xlane.xlu0 %411
      %v413 = vsel %vm406, %v382, 0.0
      %414 = vadd.xlane.f32.xlu0 %v413
      %v415 = vpop.xlane.xlu0 %414
      %v416 = vsel %vm406, %v383, 0.0
      %417 = vadd.xlane.f32.xlu0 %v416
      %v418 = vpop.xlane.xlu0 %417
      %v419 = vsel %vm406, %v384, 0.0
      %420 = vadd.xlane.f32.xlu0 %v419
      %v421 = vpop.xlane.xlu0 %420
      %v422 = vsel %vm406, %v385, 0.0
      %423 = vadd.xlane.f32.xlu0 %v422
      %v424 = vpop.xlane.xlu0 %423
      %v425 = vsel %vm406, %v386, 0.0
      %426 = vadd.xlane.f32.xlu0 %v425
      %v427 = vpop.xlane.xlu0 %426
      %v428 = vsel %vm406, %v387, 0.0
      %429 = vadd.xlane.f32.xlu0 %v428
      %v430 = vpop.xlane.xlu0 %429
      %v431 = vsel %vm406, %v388, 0.0
      %432 = vadd.xlane.f32.xlu0 %v431
      %v433 = vpop.xlane.xlu0 %432
      %v434 = vsel %vm406, %v389, 0.0
      %435 = vadd.xlane.f32.xlu0 %v434
      %v436 = vpop.xlane.xlu0 %435
      %v437 = vsel %vm406, %v390, 0.0
      %438 = vadd.xlane.f32.xlu0 %v437
      %v439 = vpop.xlane.xlu0 %438
      %v440 = vsel %vm406, %v391, 0.0
      %441 = vadd.xlane.f32.xlu0 %v440
      %v442 = vpop.xlane.xlu0 %441
      %v443 = vsel %vm406, %v392, 0.0
      %444 = vadd.xlane.f32.xlu0 %v443
      %v445 = vpop.xlane.xlu0 %444
      %v446 = vsel %vm406, %v393, 0.0
      %447 = vadd.xlane.f32.xlu0 %v446
      %v448 = vpop.xlane.xlu0 %447
      %v449 = vsel %vm406, %v394, 0.0
      %450 = vadd.xlane.f32.xlu0 %v449
      %v451 = vpop.xlane.xlu0 %450
      %v452 = vsel %vm406, %v395, 0.0
      %453 = vadd.xlane.f32.xlu0 %v452
      %v454 = vpop.xlane.xlu0 %453
      %v455 = vrcp.pop 64.0
      %v456 = vmul.f32 %v409, %v455
      %v457 = vmul.f32 %v412, %v455
      %v458 = vmul.f32 %v415, %v455
      %v459 = vmul.f32 %v418, %v455
      %v460 = vmul.f32 %v421, %v455
      %v461 = vmul.f32 %v424, %v455
      %v462 = vmul.f32 %v427, %v455
      %v463 = vmul.f32 %v430, %v455
      %v464 = vmul.f32 %v433, %v455
      %v465 = vmul.f32 %v436, %v455
      %v466 = vmul.f32 %v439, %v455
      %v467 = vmul.f32 %v442, %v455
      %v468 = vmul.f32 %v445, %v455
      %v469 = vmul.f32 %v448, %v455
      %v470 = vmul.f32 %v451, %v455
      %v471 = vmul.f32 %v454, %v455
      %v472 = vsub.f32 %v380, %v456
      %v473 = vsub.f32 %v381, %v457
      %v474 = vsub.f32 %v382, %v458
      %v475 = vsub.f32 %v383, %v459
      %v476 = vsub.f32 %v384, %v460
      %v477 = vsub.f32 %v385, %v461
      %v478 = vsub.f32 %v386, %v462
      %v479 = vsub.f32 %v387, %v463
      %v480 = vsub.f32 %v388, %v464
      %v481 = vsub.f32 %v389, %v465
      %v482 = vsub.f32 %v390, %v466
      %v483 = vsub.f32 %v391, %v467
      %v484 = vsub.f32 %v392, %v468
      %v485 = vsub.f32 %v393, %v469
      %v486 = vsub.f32 %v394, %v470
      %v487 = vsub.f32 %v395, %v471
      %v488 = vmul.f32 %v472, %v472
      %v489 = vmul.f32 %v473, %v473
      %v490 = vmul.f32 %v474, %v474
      %v491 = vmul.f32 %v475, %v475
      %v492 = vmul.f32 %v476, %v476
      %v493 = vmul.f32 %v477, %v477
      %v494 = vmul.f32 %v478, %v478
      %v495 = vmul.f32 %v479, %v479
      %v496 = vmul.f32 %v480, %v480
      %v497 = vmul.f32 %v481, %v481
      %v498 = vmul.f32 %v482, %v482
      %v499 = vmul.f32 %v483, %v483
      %v500 = vmul.f32 %v484, %v484
      %v501 = vmul.f32 %v485, %v485
      %v502 = vmul.f32 %v486, %v486
      %v503 = vmul.f32 %v487, %v487
      %v504 = vsel %vm406, %v488, 0.0
      %505 = vadd.xlane.f32.xlu0 %v504
      %v506 = vpop.xlane.xlu0 %505
      %v507 = vsel %vm406, %v489, 0.0
      %508 = vadd.xlane.f32.xlu0 %v507
      %v509 = vpop.xlane.xlu0 %508
      %v510 = vsel %vm406, %v490, 0.0
      %511 = vadd.xlane.f32.xlu0 %v510
      %v512 = vpop.xlane.xlu0 %511
      %v513 = vsel %vm406, %v491, 0.0
      %514 = vadd.xlane.f32.xlu0 %v513
      %v515 = vpop.xlane.xlu0 %514
      %v516 = vsel %vm406, %v492, 0.0
      %517 = vadd.xlane.f32.xlu0 %v516
      %v518 = vpop.xlane.xlu0 %517
      %v519 = vsel %vm406, %v493, 0.0
      %520 = vadd.xlane.f32.xlu0 %v519
      %v521 = vpop.xlane.xlu0 %520
      %v522 = vsel %vm406, %v494, 0.0
      %523 = vadd.xlane.f32.xlu0 %v522
      %v524 = vpop.xlane.xlu0 %523
      %v525 = vsel %vm406, %v495, 0.0
      %526 = vadd.xlane.f32.xlu0 %v525
      %v527 = vpop.xlane.xlu0 %526
      %v528 = vsel %vm406, %v496, 0.0
      %529 = vadd.xlane.f32.xlu0 %v528
      %v530 = vpop.xlane.xlu0 %529
      %v531 = vsel %vm406, %v497, 0.0
      %532 = vadd.xlane.f32.xlu0 %v531
      %v533 = vpop.xlane.xlu0 %532
      %v534 = vsel %vm406, %v498, 0.0
      %535 = vadd.xlane.f32.xlu0 %v534
      %v536 = vpop.xlane.xlu0 %535
      %v537 = vsel %vm406, %v499, 0.0
      %538 = vadd.xlane.f32.xlu0 %v537
      %v539 = vpop.xlane.xlu0 %538
      %v540 = vsel %vm406, %v500, 0.0
      %541 = vadd.xlane.f32.xlu0 %v540
      %v542 = vpop.xlane.xlu0 %541
      %v543 = vsel %vm406, %v501, 0.0
      %544 = vadd.xlane.f32.xlu0 %v543
      %v545 = vpop.xlane.xlu0 %544
      %v546 = vsel %vm406, %v502, 0.0
      %547 = vadd.xlane.f32.xlu0 %v546
      %v548 = vpop.xlane.xlu0 %547
      %v549 = vsel %vm406, %v503, 0.0
      %550 = vadd.xlane.f32.xlu0 %v549
      %v551 = vpop.xlane.xlu0 %550
      %v552 = vmul.f32 %v506, %v455
      %v553 = vmul.f32 %v509, %v455
      %v554 = vmul.f32 %v512, %v455
      %v555 = vmul.f32 %v515, %v455
      %v556 = vmul.f32 %v518, %v455
      %v557 = vmul.f32 %v521, %v455
      %v558 = vmul.f32 %v524, %v455
      %v559 = vmul.f32 %v527, %v455
      %v560 = vmul.f32 %v530, %v455
      %v561 = vmul.f32 %v533, %v455
      %v562 = vmul.f32 %v536, %v455
      %v563 = vmul.f32 %v539, %v455
      %v564 = vmul.f32 %v542, %v455
      %v565 = vmul.f32 %v545, %v455
      %v566 = vmul.f32 %v548, %v455
      %v567 = vmul.f32 %v551, %v455
      %v568 = vadd.f32 %v552, 1e-05
      %v569 = vadd.f32 %v553, 1e-05
      %v570 = vadd.f32 %v554, 1e-05
      %v571 = vadd.f32 %v555, 1e-05
      %v572 = vadd.f32 %v556, 1e-05
      %v573 = vadd.f32 %v557, 1e-05
      %v574 = vadd.f32 %v558, 1e-05
      %v575 = vadd.f32 %v559, 1e-05
      %v576 = vadd.f32 %v560, 1e-05
      %v577 = vadd.f32 %v561, 1e-05
      %v578 = vadd.f32 %v562, 1e-05
      %v579 = vadd.f32 %v563, 1e-05
      %v580 = vadd.f32 %v564, 1e-05
      %v581 = vadd.f32 %v565, 1e-05
      %v582 = vadd.f32 %v566, 1e-05
      %v583 = vadd.f32 %v567, 1e-05
      %v584 = vrsqrt.pop %v568
      %v585 = vrsqrt.pop %v569
      %v586 = vrsqrt.pop %v570
      %v587 = vrsqrt.pop %v571
      %v588 = vrsqrt.pop %v572
      %v589 = vrsqrt.pop %v573
      %v590 = vrsqrt.pop %v574
      %v591 = vrsqrt.pop %v575
      %v592 = vrsqrt.pop %v576
      %v593 = vrsqrt.pop %v577
      %v594 = vrsqrt.pop %v578
      %v595 = vrsqrt.pop %v579
      %v596 = vrsqrt.pop %v580
      %v597 = vrsqrt.pop %v581
      %v598 = vrsqrt.pop %v582
      %v599 = vrsqrt.pop %v583
      %v600 = vmul.f32 %v472, %v584
      %v601 = vmul.f32 %v473, %v585
      %v602 = vmul.f32 %v474, %v586
      %v603 = vmul.f32 %v475, %v587
      %v604 = vmul.f32 %v476, %v588
      %v605 = vmul.f32 %v477, %v589
      %v606 = vmul.f32 %v478, %v590
      %v607 = vmul.f32 %v479, %v591
      %v608 = vmul.f32 %v480, %v592
      %v609 = vmul.f32 %v481, %v593
      %v610 = vmul.f32 %v482, %v594
      %v611 = vmul.f32 %v483, %v595
      %v612 = vmul.f32 %v484, %v596
      %v613 = vmul.f32 %v485, %v597
      %v614 = vmul.f32 %v486, %v598
      %v615 = vmul.f32 %v487, %v599
      %v616 = vlaneseq
      %v617 = vshrl.u32 %v616, 7
      %v618 = vsub.s32 0, %v617
      %v619 = vrot.slane %v404, %v618
      %v620 = vmul.f32 %v600, %v619
      %v621 = vmul.f32 %v601, %v619
      %v622 = vmul.f32 %v602, %v619
      %v623 = vmul.f32 %v603, %v619
      %v624 = vmul.f32 %v604, %v619
      %v625 = vmul.f32 %v605, %v619
      %v626 = vmul.f32 %v606, %v619
      %v627 = vmul.f32 %v607, %v619
      %v628 = vmul.f32 %v608, %v619
      %v629 = vmul.f32 %v609, %v619
      %v630 = vmul.f32 %v610, %v619
      %v631 = vmul.f32 %v611, %v619
      %v632 = vmul.f32 %v612, %v619
      %v633 = vmul.f32 %v613, %v619
      %v634 = vmul.f32 %v614, %v619
      %v635 = vmul.f32 %v615, %v619
      %v636 = vlaneseq
      %v637 = vshrl.u32 %v636, 7
      %v638 = vsub.s32 1, %v637
      %v639 = vrot.slane %v404, %v638
      %v640 = vadd.f32 %v620, %v639
      %v641 = vadd.f32 %v621, %v639
      %v642 = vadd.f32 %v622, %v639
      %v643 = vadd.f32 %v623, %v639
      %v644 = vadd.f32 %v624, %v639
      %v645 = vadd.f32 %v625, %v639
      %v646 = vadd.f32 %v626, %v639
      %v647 = vadd.f32 %v627, %v639
      %v648 = vadd.f32 %v628, %v639
      %v649 = vadd.f32 %v629, %v639
      %v650 = vadd.f32 %v630, %v639
      %v651 = vadd.f32 %v631, %v639
      %v652 = vadd.f32 %v632, %v639
      %v653 = vadd.f32 %v633, %v639
      %v654 = vadd.f32 %v634, %v639
      %v655 = vadd.f32 %v635, %v639
      %v656 = vsel %vm406, %v640, 0.0
      %657 = vadd.xlane.f32.xlu0 %v656
      %v658 = vpop.xlane.xlu0 %657
      %v659 = vsel %vm406, %v641, 0.0
      %660 = vadd.xlane.f32.xlu0 %v659
      %v661 = vpop.xlane.xlu0 %660
      %v662 = vsel %vm406, %v642, 0.0
      %663 = vadd.xlane.f32.xlu0 %v662
      %v664 = vpop.xlane.xlu0 %663
      %v665 = vsel %vm406, %v643, 0.0
      %666 = vadd.xlane.f32.xlu0 %v665
      %v667 = vpop.xlane.xlu0 %666
      %v668 = vsel %vm406, %v644, 0.0
      %669 = vadd.xlane.f32.xlu0 %v668
      %v670 = vpop.xlane.xlu0 %669
      %v671 = vsel %vm406, %v645, 0.0
      %672 = vadd.xlane.f32.xlu0 %v671
      %v673 = vpop.xlane.xlu0 %672
      %v674 = vsel %vm406, %v646, 0.0
      %675 = vadd.xlane.f32.xlu0 %v674
      %v676 = vpop.xlane.xlu0 %675
      %v677 = vsel %vm406, %v647, 0.0
      %678 = vadd.xlane.f32.xlu0 %v677
      %v679 = vpop.xlane.xlu0 %678
      %v680 = vsel %vm406, %v648, 0.0
      %681 = vadd.xlane.f32.xlu0 %v680
      %v682 = vpop.xlane.xlu0 %681
      %v683 = vsel %vm406, %v649, 0.0
      %684 = vadd.xlane.f32.xlu0 %v683
      %v685 = vpop.xlane.xlu0 %684
      %v686 = vsel %vm406, %v650, 0.0
      %687 = vadd.xlane.f32.xlu0 %v686
      %v688 = vpop.xlane.xlu0 %687
      %v689 = vsel %vm406, %v651, 0.0
      %690 = vadd.xlane.f32.xlu0 %v689
      %v691 = vpop.xlane.xlu0 %690
      %v692 = vsel %vm406, %v652, 0.0
      %693 = vadd.xlane.f32.xlu0 %v692
      %v694 = vpop.xlane.xlu0 %693
      %v695 = vsel %vm406, %v653, 0.0
      %696 = vadd.xlane.f32.xlu0 %v695
      %v697 = vpop.xlane.xlu0 %696
      %v698 = vsel %vm406, %v654, 0.0
      %699 = vadd.xlane.f32.xlu0 %v698
      %v700 = vpop.xlane.xlu0 %699
      %v701 = vsel %vm406, %v655, 0.0
      %702 = vadd.xlane.f32.xlu0 %v701
      %v703 = vpop.xlane.xlu0 %702
      %v704 = vmul.f32 %v658, %v455
      %v705 = vmul.f32 %v661, %v455
      %v706 = vmul.f32 %v664, %v455
      %v707 = vmul.f32 %v667, %v455
      %v708 = vmul.f32 %v670, %v455
      %v709 = vmul.f32 %v673, %v455
      %v710 = vmul.f32 %v676, %v455
      %v711 = vmul.f32 %v679, %v455
      %v712 = vmul.f32 %v682, %v455
      %v713 = vmul.f32 %v685, %v455
      %v714 = vmul.f32 %v688, %v455
      %v715 = vmul.f32 %v691, %v455
      %v716 = vmul.f32 %v694, %v455
      %v717 = vmul.f32 %v697, %v455
      %v718 = vmul.f32 %v700, %v455
      %v719 = vmul.f32 %v703, %v455
      %v720 = vsub.f32 %v640, %v704
      %v721 = vsub.f32 %v641, %v705
      %v722 = vsub.f32 %v642, %v706
      %v723 = vsub.f32 %v643, %v707
      %v724 = vsub.f32 %v644, %v708
      %v725 = vsub.f32 %v645, %v709
      %v726 = vsub.f32 %v646, %v710
      %v727 = vsub.f32 %v647, %v711
      %v728 = vsub.f32 %v648, %v712
      %v729 = vsub.f32 %v649, %v713
      %v730 = vsub.f32 %v650, %v714
      %v731 = vsub.f32 %v651, %v715
      %v732 = vsub.f32 %v652, %v716
      %v733 = vsub.f32 %v653, %v717
      %v734 = vsub.f32 %v654, %v718
      %v735 = vsub.f32 %v655, %v719
      %v736 = vmul.f32 %v720, %v720
      %v737 = vmul.f32 %v721, %v721
      %v738 = vmul.f32 %v722, %v722
      %v739 = vmul.f32 %v723, %v723
      %v740 = vmul.f32 %v724, %v724
      %v741 = vmul.f32 %v725, %v725
      %v742 = vmul.f32 %v726, %v726
      %v743 = vmul.f32 %v727, %v727
      %v744 = vmul.f32 %v728, %v728
      %v745 = vmul.f32 %v729, %v729
      %v746 = vmul.f32 %v730, %v730
      %v747 = vmul.f32 %v731, %v731
      %v748 = vmul.f32 %v732, %v732
      %v749 = vmul.f32 %v733, %v733
      %v750 = vmul.f32 %v734, %v734
      %v751 = vmul.f32 %v735, %v735
      %v752 = vsel %vm406, %v736, 0.0
      %753 = vadd.xlane.f32.xlu0 %v752
      %v754 = vpop.xlane.xlu0 %753
      %v755 = vsel %vm406, %v737, 0.0
      %756 = vadd.xlane.f32.xlu0 %v755
      %v757 = vpop.xlane.xlu0 %756
      %v758 = vsel %vm406, %v738, 0.0
      %759 = vadd.xlane.f32.xlu0 %v758
      %v760 = vpop.xlane.xlu0 %759
      %v761 = vsel %vm406, %v739, 0.0
      %762 = vadd.xlane.f32.xlu0 %v761
      %v763 = vpop.xlane.xlu0 %762
      %v764 = vsel %vm406, %v740, 0.0
      %765 = vadd.xlane.f32.xlu0 %v764
      %v766 = vpop.xlane.xlu0 %765
      %v767 = vsel %vm406, %v741, 0.0
      %768 = vadd.xlane.f32.xlu0 %v767
      %v769 = vpop.xlane.xlu0 %768
      %v770 = vsel %vm406, %v742, 0.0
      %771 = vadd.xlane.f32.xlu0 %v770
      %v772 = vpop.xlane.xlu0 %771
      %v773 = vsel %vm406, %v743, 0.0
      %774 = vadd.xlane.f32.xlu0 %v773
      %v775 = vpop.xlane.xlu0 %774
      %v776 = vsel %vm406, %v744, 0.0
      %777 = vadd.xlane.f32.xlu0 %v776
      %v778 = vpop.xlane.xlu0 %777
      %v779 = vsel %vm406, %v745, 0.0
      %780 = vadd.xlane.f32.xlu0 %v779
      %v781 = vpop.xlane.xlu0 %780
      %v782 = vsel %vm406, %v746, 0.0
      %783 = vadd.xlane.f32.xlu0 %v782
      %v784 = vpop.xlane.xlu0 %783
      %v785 = vsel %vm406, %v747, 0.0
      %786 = vadd.xlane.f32.xlu0 %v785
      %v787 = vpop.xlane.xlu0 %786
      %v788 = vsel %vm406, %v748, 0.0
      %789 = vadd.xlane.f32.xlu0 %v788
      %v790 = vpop.xlane.xlu0 %789
      %v791 = vsel %vm406, %v749, 0.0
      %792 = vadd.xlane.f32.xlu0 %v791
      %v793 = vpop.xlane.xlu0 %792
      %v794 = vsel %vm406, %v750, 0.0
      %795 = vadd.xlane.f32.xlu0 %v794
      %v796 = vpop.xlane.xlu0 %795
      %v797 = vsel %vm406, %v751, 0.0
      %798 = vadd.xlane.f32.xlu0 %v797
      %v799 = vpop.xlane.xlu0 %798
      %v800 = vmul.f32 %v754, %v455
      %v801 = vmul.f32 %v757, %v455
      %v802 = vmul.f32 %v760, %v455
      %v803 = vmul.f32 %v763, %v455
      %v804 = vmul.f32 %v766, %v455
      %v805 = vmul.f32 %v769, %v455
      %v806 = vmul.f32 %v772, %v455
      %v807 = vmul.f32 %v775, %v455
      %v808 = vmul.f32 %v778, %v455
      %v809 = vmul.f32 %v781, %v455
      %v810 = vmul.f32 %v784, %v455
      %v811 = vmul.f32 %v787, %v455
      %v812 = vmul.f32 %v790, %v455
      %v813 = vmul.f32 %v793, %v455
      %v814 = vmul.f32 %v796, %v455
      %v815 = vmul.f32 %v799, %v455
      %v816 = vadd.f32 %v800, 1e-05
      %v817 = vadd.f32 %v801, 1e-05
      %v818 = vadd.f32 %v802, 1e-05
      %v819 = vadd.f32 %v803, 1e-05
      %v820 = vadd.f32 %v804, 1e-05
      %v821 = vadd.f32 %v805, 1e-05
      %v822 = vadd.f32 %v806, 1e-05
      %v823 = vadd.f32 %v807, 1e-05
      %v824 = vadd.f32 %v808, 1e-05
      %v825 = vadd.f32 %v809, 1e-05
      %v826 = vadd.f32 %v810, 1e-05
      %v827 = vadd.f32 %v811, 1e-05
      %v828 = vadd.f32 %v812, 1e-05
      %v829 = vadd.f32 %v813, 1e-05
      %v830 = vadd.f32 %v814, 1e-05
      %v831 = vadd.f32 %v815, 1e-05
      %v832 = vrsqrt.pop %v816
      %v833 = vrsqrt.pop %v817
      %v834 = vrsqrt.pop %v818
      %v835 = vrsqrt.pop %v819
      %v836 = vrsqrt.pop %v820
      %v837 = vrsqrt.pop %v821
      %v838 = vrsqrt.pop %v822
      %v839 = vrsqrt.pop %v823
      %v840 = vrsqrt.pop %v824
      %v841 = vrsqrt.pop %v825
      %v842 = vrsqrt.pop %v826
      %v843 = vrsqrt.pop %v827
      %v844 = vrsqrt.pop %v828
      %v845 = vrsqrt.pop %v829
      %v846 = vrsqrt.pop %v830
      %v847 = vrsqrt.pop %v831
      %v848 = vmul.f32 %v720, %v832
      %v849 = vmul.f32 %v721, %v833
      %v850 = vmul.f32 %v722, %v834
      %v851 = vmul.f32 %v723, %v835
      %v852 = vmul.f32 %v724, %v836
      %v853 = vmul.f32 %v725, %v837
      %v854 = vmul.f32 %v726, %v838
      %v855 = vmul.f32 %v727, %v839
      %v856 = vmul.f32 %v728, %v840
      %v857 = vmul.f32 %v729, %v841
      %v858 = vmul.f32 %v730, %v842
      %v859 = vmul.f32 %v731, %v843
      %v860 = vmul.f32 %v732, %v844
      %v861 = vmul.f32 %v733, %v845
      %v862 = vmul.f32 %v734, %v846
      %v863 = vmul.f32 %v735, %v847
      %v864 = vlaneseq
      %v865 = vshrl.u32 %v864, 7
      %v866 = vsub.s32 2, %v865
      %v867 = vrot.slane %v404, %v866
      %v868 = vmul.f32 %v848, %v867
      %v869 = vmul.f32 %v849, %v867
      %v870 = vmul.f32 %v850, %v867
      %v871 = vmul.f32 %v851, %v867
      %v872 = vmul.f32 %v852, %v867
      %v873 = vmul.f32 %v853, %v867
      %v874 = vmul.f32 %v854, %v867
      %v875 = vmul.f32 %v855, %v867
      %v876 = vmul.f32 %v856, %v867
      %v877 = vmul.f32 %v857, %v867
      %v878 = vmul.f32 %v858, %v867
      %v879 = vmul.f32 %v859, %v867
      %v880 = vmul.f32 %v860, %v867
      %v881 = vmul.f32 %v861, %v867
      %v882 = vmul.f32 %v862, %v867
      %v883 = vmul.f32 %v863, %v867
      %v884 = vlaneseq
      %v885 = vshrl.u32 %v884, 7
      %v886 = vsub.s32 3, %v885
      %v887 = vrot.slane %v404, %v886
      %v888 = vadd.f32 %v868, %v887
      %v889 = vadd.f32 %v869, %v887
      %v890 = vadd.f32 %v870, %v887
      %v891 = vadd.f32 %v871, %v887
      %v892 = vadd.f32 %v872, %v887
      %v893 = vadd.f32 %v873, %v887
      %v894 = vadd.f32 %v874, %v887
      %v895 = vadd.f32 %v875, %v887
      %v896 = vadd.f32 %v876, %v887
      %v897 = vadd.f32 %v877, %v887
      %v898 = vadd.f32 %v878, %v887
      %v899 = vadd.f32 %v879, %v887
      %v900 = vadd.f32 %v880, %v887
      %v901 = vadd.f32 %v881, %v887
      %v902 = vadd.f32 %v882, %v887
      %v903 = vadd.f32 %v883, %v887
      %v904 = vsel %vm406, %v888, 0.0
      %905 = vadd.xlane.f32.xlu0 %v904
      %v906 = vpop.xlane.xlu0 %905
      %v907 = vsel %vm406, %v889, 0.0
      %908 = vadd.xlane.f32.xlu0 %v907
      %v909 = vpop.xlane.xlu0 %908
      %v910 = vsel %vm406, %v890, 0.0
      %911 = vadd.xlane.f32.xlu0 %v910
      %v912 = vpop.xlane.xlu0 %911
      %v913 = vsel %vm406, %v891, 0.0
      %914 = vadd.xlane.f32.xlu0 %v913
      %v915 = vpop.xlane.xlu0 %914
      %v916 = vsel %vm406, %v892, 0.0
      %917 = vadd.xlane.f32.xlu0 %v916
      %v918 = vpop.xlane.xlu0 %917
      %v919 = vsel %vm406, %v893, 0.0
      %920 = vadd.xlane.f32.xlu0 %v919
      %v921 = vpop.xlane.xlu0 %920
      %v922 = vsel %vm406, %v894, 0.0
      %923 = vadd.xlane.f32.xlu0 %v922
      %v924 = vpop.xlane.xlu0 %923
      %v925 = vsel %vm406, %v895, 0.0
      %926 = vadd.xlane.f32.xlu0 %v925
      %v927 = vpop.xlane.xlu0 %926
      %v928 = vsel %vm406, %v896, 0.0
      %929 = vadd.xlane.f32.xlu0 %v928
      %v930 = vpop.xlane.xlu0 %929
      %v931 = vsel %vm406, %v897, 0.0
      %932 = vadd.xlane.f32.xlu0 %v931
      %v933 = vpop.xlane.xlu0 %932
      %v934 = vsel %vm406, %v898, 0.0
      %935 = vadd.xlane.f32.xlu0 %v934
      %v936 = vpop.xlane.xlu0 %935
      %v937 = vsel %vm406, %v899, 0.0
      %938 = vadd.xlane.f32.xlu0 %v937
      %v939 = vpop.xlane.xlu0 %938
      %v940 = vsel %vm406, %v900, 0.0
      %941 = vadd.xlane.f32.xlu0 %v940
      %v942 = vpop.xlane.xlu0 %941
      %v943 = vsel %vm406, %v901, 0.0
      %944 = vadd.xlane.f32.xlu0 %v943
      %v945 = vpop.xlane.xlu0 %944
      %v946 = vsel %vm406, %v902, 0.0
      %947 = vadd.xlane.f32.xlu0 %v946
      %v948 = vpop.xlane.xlu0 %947
      %v949 = vsel %vm406, %v903, 0.0
      %950 = vadd.xlane.f32.xlu0 %v949
      %v951 = vpop.xlane.xlu0 %950
      %v952 = vmul.f32 %v906, %v455
      %v953 = vmul.f32 %v909, %v455
      %v954 = vmul.f32 %v912, %v455
      %v955 = vmul.f32 %v915, %v455
      %v956 = vmul.f32 %v918, %v455
      %v957 = vmul.f32 %v921, %v455
      %v958 = vmul.f32 %v924, %v455
      %v959 = vmul.f32 %v927, %v455
      %v960 = vmul.f32 %v930, %v455
      %v961 = vmul.f32 %v933, %v455
      %v962 = vmul.f32 %v936, %v455
      %v963 = vmul.f32 %v939, %v455
      %v964 = vmul.f32 %v942, %v455
      %v965 = vmul.f32 %v945, %v455
      %v966 = vmul.f32 %v948, %v455
      %v967 = vmul.f32 %v951, %v455
      %v968 = vsub.f32 %v888, %v952
      %v969 = vsub.f32 %v889, %v953
      %v970 = vsub.f32 %v890, %v954
      %v971 = vsub.f32 %v891, %v955
      %v972 = vsub.f32 %v892, %v956
      %v973 = vsub.f32 %v893, %v957
      %v974 = vsub.f32 %v894, %v958
      %v975 = vsub.f32 %v895, %v959
      %v976 = vsub.f32 %v896, %v960
      %v977 = vsub.f32 %v897, %v961
      %v978 = vsub.f32 %v898, %v962
      %v979 = vsub.f32 %v899, %v963
      %v980 = vsub.f32 %v900, %v964
      %v981 = vsub.f32 %v901, %v965
      %v982 = vsub.f32 %v902, %v966
      %v983 = vsub.f32 %v903, %v967
      %v984 = vmul.f32 %v968, %v968
      %v985 = vmul.f32 %v969, %v969
      %v986 = vmul.f32 %v970, %v970
      %v987 = vmul.f32 %v971, %v971
      %v988 = vmul.f32 %v972, %v972
      %v989 = vmul.f32 %v973, %v973
      %v990 = vmul.f32 %v974, %v974
      %v991 = vmul.f32 %v975, %v975
      %v992 = vmul.f32 %v976, %v976
      %v993 = vmul.f32 %v977, %v977
      %v994 = vmul.f32 %v978, %v978
      %v995 = vmul.f32 %v979, %v979
      %v996 = vmul.f32 %v980, %v980
      %v997 = vmul.f32 %v981, %v981
      %v998 = vmul.f32 %v982, %v982
      %v999 = vmul.f32 %v983, %v983
      %v1000 = vsel %vm406, %v984, 0.0
      %1001 = vadd.xlane.f32.xlu0 %v1000
      %v1002 = vpop.xlane.xlu0 %1001
      %v1003 = vsel %vm406, %v985, 0.0
      %1004 = vadd.xlane.f32.xlu0 %v1003
      %v1005 = vpop.xlane.xlu0 %1004
      %v1006 = vsel %vm406, %v986, 0.0
      %1007 = vadd.xlane.f32.xlu0 %v1006
      %v1008 = vpop.xlane.xlu0 %1007
      %v1009 = vsel %vm406, %v987, 0.0
      %1010 = vadd.xlane.f32.xlu0 %v1009
      %v1011 = vpop.xlane.xlu0 %1010
      %v1012 = vsel %vm406, %v988, 0.0
      %1013 = vadd.xlane.f32.xlu0 %v1012
      %v1014 = vpop.xlane.xlu0 %1013
      %v1015 = vsel %vm406, %v989, 0.0
      %1016 = vadd.xlane.f32.xlu0 %v1015
      %v1017 = vpop.xlane.xlu0 %1016
      %v1018 = vsel %vm406, %v990, 0.0
      %1019 = vadd.xlane.f32.xlu0 %v1018
      %v1020 = vpop.xlane.xlu0 %1019
      %v1021 = vsel %vm406, %v991, 0.0
      %1022 = vadd.xlane.f32.xlu0 %v1021
      %v1023 = vpop.xlane.xlu0 %1022
      %v1024 = vsel %vm406, %v992, 0.0
      %1025 = vadd.xlane.f32.xlu0 %v1024
      %v1026 = vpop.xlane.xlu0 %1025
      %v1027 = vsel %vm406, %v993, 0.0
      %1028 = vadd.xlane.f32.xlu0 %v1027
      %v1029 = vpop.xlane.xlu0 %1028
      %v1030 = vsel %vm406, %v994, 0.0
      %1031 = vadd.xlane.f32.xlu0 %v1030
      %v1032 = vpop.xlane.xlu0 %1031
      %v1033 = vsel %vm406, %v995, 0.0
      %1034 = vadd.xlane.f32.xlu0 %v1033
      %v1035 = vpop.xlane.xlu0 %1034
      %v1036 = vsel %vm406, %v996, 0.0
      %1037 = vadd.xlane.f32.xlu0 %v1036
      %v1038 = vpop.xlane.xlu0 %1037
      %v1039 = vsel %vm406, %v997, 0.0
      %1040 = vadd.xlane.f32.xlu0 %v1039
      %v1041 = vpop.xlane.xlu0 %1040
      %v1042 = vsel %vm406, %v998, 0.0
      %1043 = vadd.xlane.f32.xlu0 %v1042
      %v1044 = vpop.xlane.xlu0 %1043
      %v1045 = vsel %vm406, %v999, 0.0
      %1046 = vadd.xlane.f32.xlu0 %v1045
      %v1047 = vpop.xlane.xlu0 %1046
      %v1048 = vmul.f32 %v1002, %v455
      %v1049 = vmul.f32 %v1005, %v455
      %v1050 = vmul.f32 %v1008, %v455
      %v1051 = vmul.f32 %v1011, %v455
      %v1052 = vmul.f32 %v1014, %v455
      %v1053 = vmul.f32 %v1017, %v455
      %v1054 = vmul.f32 %v1020, %v455
      %v1055 = vmul.f32 %v1023, %v455
      %v1056 = vmul.f32 %v1026, %v455
      %v1057 = vmul.f32 %v1029, %v455
      %v1058 = vmul.f32 %v1032, %v455
      %v1059 = vmul.f32 %v1035, %v455
      %v1060 = vmul.f32 %v1038, %v455
      %v1061 = vmul.f32 %v1041, %v455
      %v1062 = vmul.f32 %v1044, %v455
      %v1063 = vmul.f32 %v1047, %v455
      %v1064 = vadd.f32 %v1048, 1e-05
      %v1065 = vadd.f32 %v1049, 1e-05
      %v1066 = vadd.f32 %v1050, 1e-05
      %v1067 = vadd.f32 %v1051, 1e-05
      %v1068 = vadd.f32 %v1052, 1e-05
      %v1069 = vadd.f32 %v1053, 1e-05
      %v1070 = vadd.f32 %v1054, 1e-05
      %v1071 = vadd.f32 %v1055, 1e-05
      %v1072 = vadd.f32 %v1056, 1e-05
      %v1073 = vadd.f32 %v1057, 1e-05
      %v1074 = vadd.f32 %v1058, 1e-05
      %v1075 = vadd.f32 %v1059, 1e-05
      %v1076 = vadd.f32 %v1060, 1e-05
      %v1077 = vadd.f32 %v1061, 1e-05
      %v1078 = vadd.f32 %v1062, 1e-05
      %v1079 = vadd.f32 %v1063, 1e-05
      %v1080 = vrsqrt.pop %v1064
      %v1081 = vrsqrt.pop %v1065
      %v1082 = vrsqrt.pop %v1066
      %v1083 = vrsqrt.pop %v1067
      %v1084 = vrsqrt.pop %v1068
      %v1085 = vrsqrt.pop %v1069
      %v1086 = vrsqrt.pop %v1070
      %v1087 = vrsqrt.pop %v1071
      %v1088 = vrsqrt.pop %v1072
      %v1089 = vrsqrt.pop %v1073
      %v1090 = vrsqrt.pop %v1074
      %v1091 = vrsqrt.pop %v1075
      %v1092 = vrsqrt.pop %v1076
      %v1093 = vrsqrt.pop %v1077
      %v1094 = vrsqrt.pop %v1078
      %v1095 = vrsqrt.pop %v1079
      %v1096 = vmul.f32 %v968, %v1080
      %v1097 = vmul.f32 %v969, %v1081
      %v1098 = vmul.f32 %v970, %v1082
      %v1099 = vmul.f32 %v971, %v1083
      %v1100 = vmul.f32 %v972, %v1084
      %v1101 = vmul.f32 %v973, %v1085
      %v1102 = vmul.f32 %v974, %v1086
      %v1103 = vmul.f32 %v975, %v1087
      %v1104 = vmul.f32 %v976, %v1088
      %v1105 = vmul.f32 %v977, %v1089
      %v1106 = vmul.f32 %v978, %v1090
      %v1107 = vmul.f32 %v979, %v1091
      %v1108 = vmul.f32 %v980, %v1092
      %v1109 = vmul.f32 %v981, %v1093
      %v1110 = vmul.f32 %v982, %v1094
      %v1111 = vmul.f32 %v983, %v1095
      %v1112 = vlaneseq
      %v1113 = vshrl.u32 %v1112, 7
      %v1114 = vsub.s32 4, %v1113
      %v1115 = vrot.slane %v404, %v1114
      %v1116 = vmul.f32 %v1096, %v1115
      %v1117 = vmul.f32 %v1097, %v1115
      %v1118 = vmul.f32 %v1098, %v1115
      %v1119 = vmul.f32 %v1099, %v1115
      %v1120 = vmul.f32 %v1100, %v1115
      %v1121 = vmul.f32 %v1101, %v1115
      %v1122 = vmul.f32 %v1102, %v1115
      %v1123 = vmul.f32 %v1103, %v1115
      %v1124 = vmul.f32 %v1104, %v1115
      %v1125 = vmul.f32 %v1105, %v1115
      %v1126 = vmul.f32 %v1106, %v1115
      %v1127 = vmul.f32 %v1107, %v1115
      %v1128 = vmul.f32 %v1108, %v1115
      %v1129 = vmul.f32 %v1109, %v1115
      %v1130 = vmul.f32 %v1110, %v1115
      %v1131 = vmul.f32 %v1111, %v1115
      %v1132 = vlaneseq
      %v1133 = vshrl.u32 %v1132, 7
      %v1134 = vsub.s32 5, %v1133
      %v1135 = vrot.slane %v404, %v1134
      %v1136 = vadd.f32 %v1116, %v1135
      %v1137 = vadd.f32 %v1117, %v1135
      %v1138 = vadd.f32 %v1118, %v1135
      %v1139 = vadd.f32 %v1119, %v1135
      %v1140 = vadd.f32 %v1120, %v1135
      %v1141 = vadd.f32 %v1121, %v1135
      %v1142 = vadd.f32 %v1122, %v1135
      %v1143 = vadd.f32 %v1123, %v1135
      %v1144 = vadd.f32 %v1124, %v1135
      %v1145 = vadd.f32 %v1125, %v1135
      %v1146 = vadd.f32 %v1126, %v1135
      %v1147 = vadd.f32 %v1127, %v1135
      %v1148 = vadd.f32 %v1128, %v1135
      %v1149 = vadd.f32 %v1129, %v1135
      %v1150 = vadd.f32 %v1130, %v1135
      %v1151 = vadd.f32 %v1131, %v1135
      %v1152 = vld [vmem:[%s4] sm:$0xff]
      %v1153 = vld [vmem:[%s4 + $0x8] sm:$0xff]
      %v1154 = vld [vmem:[%s4 + $0x10] sm:$0xff]
      %v1155 = vld [vmem:[%s4 + $0x18] sm:$0xff]
      %v1156 = vld [vmem:[%s4 + $0x20] sm:$0xff]
      %v1157 = vld [vmem:[%s4 + $0x28] sm:$0xff]
      %v1158 = vld [vmem:[%s4 + $0x30] sm:$0xff]
      %v1159 = vld [vmem:[%s4 + $0x38] sm:$0xff]
      %v1161 = vsel %vm406, %v1136, 0
      %v1164 = vsel %vm406, %v1137, 0
      %v1167 = vsel %vm406, %v1138, 0
      %v1170 = vsel %vm406, %v1139, 0
      %v1173 = vsel %vm406, %v1140, 0
      %v1176 = vsel %vm406, %v1141, 0
      %v1179 = vsel %vm406, %v1142, 0
      %v1182 = vsel %vm406, %v1143, 0
      %v1185 = vsel %vm406, %v1144, 0
      %v1188 = vsel %vm406, %v1145, 0
      %v1191 = vsel %vm406, %v1146, 0
      %v1194 = vsel %vm406, %v1147, 0
      %v1197 = vsel %vm406, %v1148, 0
      %v1200 = vsel %vm406, %v1149, 0
      %v1203 = vsel %vm406, %v1150, 0
      %v1206 = vsel %vm406, %v1151, 0
      %1208 = vmatprep.subr.mxu0 0.0
      %1209 = vmatpush1.msra.mxu0 %v1152
      %1210 = vmatprep.subr.mxu0 0.0
      %1211 = vmatpush1.msra.mxu0 %v1153
      %1212 = vmatprep.subr.mxu0 0.0
      %1213 = vmatpush1.msra.mxu0 %v1154
      %1214 = vmatprep.subr.mxu0 0.0
      %1215 = vmatpush1.msra.mxu0 %v1155
      %1216 = vmatprep.subr.mxu0 0.0
      %1217 = vmatpush1.msra.mxu0 %v1156
      %1218 = vmatprep.subr.mxu0 0.0
      %1219 = vmatpush1.msra.mxu0 %v1157
      %1220 = vmatprep.subr.mxu0 0.0
      %1221 = vmatpush1.msra.mxu0 %v1158
      %1222 = vmatprep.subr.mxu0 0.0
      %1223 = vmatpush1.msra.mxu0 %v1159
      %1224 = vmatprep.subr.mxu0 0.0
      %1225 = vmatpush1.msra.mxu0 0.0
      %1226 = vmatprep.subr.mxu0 0.0
      %1227 = vmatpush1.msra.mxu0 0.0
      %1228 = vmatprep.subr.mxu0 0.0
      %1229 = vmatpush1.msra.mxu0 0.0
      %1230 = vmatprep.subr.mxu0 0.0
      %1231 = vmatpush1.msra.mxu0 0.0
      %1232 = vmatprep.subr.mxu0 0.0
      %1233 = vmatpush1.msra.mxu0 0.0
      %1234 = vmatprep.subr.mxu0 0.0
      %1235 = vmatpush1.msra.mxu0 0.0
      %1236 = vmatprep.subr.mxu0 0.0
      %1237 = vmatpush1.msra.mxu0 0.0
      %1238 = vmatprep.subr.mxu0 0.0
      %1239 = vmatpush1.msra.mxu0 0.0
      %1240 = vmatprep.subr.mxu0 0.0
      %1241 = vmatpush1.msra.mxu0 0.0
      %1242 = vmatprep.subr.mxu0 0.0
      %1243 = vmatpush1.msra.mxu0 0.0
      %1244 = vmatprep.subr.mxu0 0.0
      %1245 = vmatpush1.msra.mxu0 0.0
      %1246 = vmatprep.subr.mxu0 0.0
      %1247 = vmatpush1.msra.mxu0 0.0
      %1248 = vmatprep.subr.mxu0 0.0
      %1249 = vmatpush1.msra.mxu0 0.0
      %1250 = vmatprep.subr.mxu0 0.0
      %1251 = vmatpush1.msra.mxu0 0.0
      %1252 = vmatprep.subr.mxu0 0.0
      %1253 = vmatpush1.msra.mxu0 0.0
      %1254 = vmatprep.subr.mxu0 0.0
      %1255 = vmatpush1.msra.mxu0 0.0
      %1256 = vmatprep.subr.mxu0 0.0
      %1257 = vmatpush1.msra.mxu0 0.0
      %1258 = vmatprep.subr.mxu0 0.0
      %1259 = vmatpush1.msra.mxu0 0.0
      %1260 = vmatprep.subr.mxu0 0.0
      %1261 = vmatpush1.msra.mxu0 0.0
      %1262 = vmatprep.subr.mxu0 0.0
      %1263 = vmatpush1.msra.mxu0 0.0
      %1264 = vmatprep.subr.mxu0 0.0
      %1265 = vmatpush1.msra.mxu0 0.0
      %1266 = vmatprep.subr.mxu0 0.0
      %1267 = vmatpush1.msra.mxu0 0.0
      %1268 = vmatprep.subr.mxu0 0.0
      %1269 = vmatpush1.msra.mxu0 0.0
      %1270 = vmatprep.subr.mxu0 0.0
      %1271 = vmatpush1.msra.mxu0 0.0
      %1272 = vmatprep.mubr.f32.mxu0 0.0
      %1273 = vmatmul.mubr.f32.gmra.mrb[0].mxu0 %v1161
      %v1274 = vpop.f32.mrb[0].mxu0
      %v1275 = vadd.f32 0.0, %v1274
      %v1276 = vpop.f32.mrb[0].mxu0
      %1277 = vmatprep.mubr.f32.mxu0 0.0
      %1278 = vmatmul.mubr.f32.gmra.mrb[0].mxu0 %v1164
      %v1279 = vpop.f32.mrb[0].mxu0
      %v1280 = vadd.f32 0.0, %v1279
      %v1281 = vpop.f32.mrb[0].mxu0
      %1282 = vmatprep.mubr.f32.mxu0 0.0
      %1283 = vmatmul.mubr.f32.gmra.mrb[0].mxu0 %v1167
      %v1284 = vpop.f32.mrb[0].mxu0
      %v1285 = vadd.f32 0.0, %v1284
      %v1286 = vpop.f32.mrb[0].mxu0
      %1287 = vmatprep.mubr.f32.mxu0 0.0
      %1288 = vmatmul.mubr.f32.gmra.mrb[0].mxu0 %v1170
      %v1289 = vpop.f32.mrb[0].mxu0
      %v1290 = vadd.f32 0.0, %v1289
      %v1291 = vpop.f32.mrb[0].mxu0
      %1292 = vmatprep.mubr.f32.mxu0 0.0
      %1293 = vmatmul.mubr.f32.gmra.mrb[0].mxu0 %v1173
      %v1294 = vpop.f32.mrb[0].mxu0
      %v1295 = vadd.f32 0.0, %v1294
      %v1296 = vpop.f32.mrb[0].mxu0
      %1297 = vmatprep.mubr.f32.mxu0 0.0
      %1298 = vmatmul.mubr.f32.gmra.mrb[0].mxu0 %v1176
      %v1299 = vpop.f32.mrb[0].mxu0
      %v1300 = vadd.f32 0.0, %v1299
      %v1301 = vpop.f32.mrb[0].mxu0
      %1302 = vmatprep.mubr.f32.mxu0 0.0
      %1303 = vmatmul.mubr.f32.gmra.mrb[0].mxu0 %v1179
      %v1304 = vpop.f32.mrb[0].mxu0
      %v1305 = vadd.f32 0.0, %v1304
      %v1306 = vpop.f32.mrb[0].mxu0
      %1307 = vmatprep.mubr.f32.mxu0 0.0
      %1308 = vmatmul.mubr.f32.gmra.mrb[0].mxu0 %v1182
      %v1309 = vpop.f32.mrb[0].mxu0
      %v1310 = vadd.f32 0.0, %v1309
      %v1311 = vpop.f32.mrb[0].mxu0
      %1312 = vmatprep.mubr.f32.mxu0 0.0
      %1313 = vmatmul.mubr.f32.gmra.mrb[0].mxu0 %v1185
      %v1314 = vpop.f32.mrb[0].mxu0
      %v1315 = vadd.f32 0.0, %v1314
      %v1316 = vpop.f32.mrb[0].mxu0
      %1317 = vmatprep.mubr.f32.mxu0 0.0
      %1318 = vmatmul.mubr.f32.gmra.mrb[0].mxu0 %v1188
      %v1319 = vpop.f32.mrb[0].mxu0
      %v1320 = vadd.f32 0.0, %v1319
      %v1321 = vpop.f32.mrb[0].mxu0
      %1322 = vmatprep.mubr.f32.mxu0 0.0
      %1323 = vmatmul.mubr.f32.gmra.mrb[0].mxu0 %v1191
      %v1324 = vpop.f32.mrb[0].mxu0
      %v1325 = vadd.f32 0.0, %v1324
      %v1326 = vpop.f32.mrb[0].mxu0
      %1327 = vmatprep.mubr.f32.mxu0 0.0
      %1328 = vmatmul.mubr.f32.gmra.mrb[0].mxu0 %v1194
      %v1329 = vpop.f32.mrb[0].mxu0
      %v1330 = vadd.f32 0.0, %v1329
      %v1331 = vpop.f32.mrb[0].mxu0
      %1332 = vmatprep.mubr.f32.mxu0 0.0
      %1333 = vmatmul.mubr.f32.gmra.mrb[0].mxu0 %v1197
      %v1334 = vpop.f32.mrb[0].mxu0
      %v1335 = vadd.f32 0.0, %v1334
      %v1336 = vpop.f32.mrb[0].mxu0
      %1337 = vmatprep.mubr.f32.mxu0 0.0
      %1338 = vmatmul.mubr.f32.gmra.mrb[0].mxu0 %v1200
      %v1339 = vpop.f32.mrb[0].mxu0
      %v1340 = vadd.f32 0.0, %v1339
      %v1341 = vpop.f32.mrb[0].mxu0
      %1342 = vmatprep.mubr.f32.mxu0 0.0
      %1343 = vmatmul.mubr.f32.gmra.mrb[0].mxu0 %v1203
      %v1344 = vpop.f32.mrb[0].mxu0
      %v1345 = vadd.f32 0.0, %v1344
      %v1346 = vpop.f32.mrb[0].mxu0
      %1347 = vmatprep.mubr.f32.mxu0 0.0
      %1348 = vmatmul.mubr.f32.gmra.mrb[0].mxu0 %v1206
      %v1349 = vpop.f32.mrb[0].mxu0
      %v1350 = vadd.f32 0.0, %v1349
      %v1351 = vpop.f32.mrb[0].mxu0
      %1352 = vdwg.mxu0
      %v1353 = vld [vmem:[%s5] sm:$0xff]
      %v1354 = vld [vmem:[%s5 + $0x8] sm:$0xff]
      %v1355 = vld [vmem:[%s5 + $0x10] sm:$0xff]
      %v1356 = vld [vmem:[%s5 + $0x18] sm:$0xff]
      %v1357 = vld [vmem:[%s5 + $0x20] sm:$0xff]
      %v1358 = vld [vmem:[%s5 + $0x28] sm:$0xff]
      %v1359 = vld [vmem:[%s5 + $0x30] sm:$0xff]
      %v1360 = vld [vmem:[%s5 + $0x38] sm:$0xff]
      %v1362 = vsel %vm406, %v396, 0
      %v1365 = vsel %vm406, %v397, 0
      %v1368 = vsel %vm406, %v398, 0
      %v1371 = vsel %vm406, %v399, 0
      %v1374 = vsel %vm406, %v400, 0
      %v1377 = vsel %vm406, %v401, 0
      %v1380 = vsel %vm406, %v402, 0
      %v1383 = vsel %vm406, %v403, 0
      %1385 = vmatprep.subr.mxu0 0.0
      %1386 = vmatpush1.msra.mxu0 %v1353
      %1387 = vmatprep.subr.mxu0 0.0
      %1388 = vmatpush1.msra.mxu0 %v1354
      %1389 = vmatprep.subr.mxu0 0.0
      %1390 = vmatpush1.msra.mxu0 %v1355
      %1391 = vmatprep.subr.mxu0 0.0
      %1392 = vmatpush1.msra.mxu0 %v1356
      %1393 = vmatprep.subr.mxu0 0.0
      %1394 = vmatpush1.msra.mxu0 %v1357
      %1395 = vmatprep.subr.mxu0 0.0
      %1396 = vmatpush1.msra.mxu0 %v1358
      %1397 = vmatprep.subr.mxu0 0.0
      %1398 = vmatpush1.msra.mxu0 %v1359
      %1399 = vmatprep.subr.mxu0 0.0
      %1400 = vmatpush1.msra.mxu0 %v1360
      %1401 = vmatprep.subr.mxu0 0.0
      %1402 = vmatpush1.msra.mxu0 0.0
      %1403 = vmatprep.subr.mxu0 0.0
      %1404 = vmatpush1.msra.mxu0 0.0
      %1405 = vmatprep.subr.mxu0 0.0
      %1406 = vmatpush1.msra.mxu0 0.0
      %1407 = vmatprep.subr.mxu0 0.0
      %1408 = vmatpush1.msra.mxu0 0.0
      %1409 = vmatprep.subr.mxu0 0.0
      %1410 = vmatpush1.msra.mxu0 0.0
      %1411 = vmatprep.subr.mxu0 0.0
      %1412 = vmatpush1.msra.mxu0 0.0
      %1413 = vmatprep.subr.mxu0 0.0
      %1414 = vmatpush1.msra.mxu0 0.0
      %1415 = vmatprep.subr.mxu0 0.0
      %1416 = vmatpush1.msra.mxu0 0.0
      %1417 = vmatprep.subr.mxu0 0.0
      %1418 = vmatpush1.msra.mxu0 0.0
      %1419 = vmatprep.subr.mxu0 0.0
      %1420 = vmatpush1.msra.mxu0 0.0
      %1421 = vmatprep.subr.mxu0 0.0
      %1422 = vmatpush1.msra.mxu0 0.0
      %1423 = vmatprep.subr.mxu0 0.0
      %1424 = vmatpush1.msra.mxu0 0.0
      %1425 = vmatprep.subr.mxu0 0.0
      %1426 = vmatpush1.msra.mxu0 0.0
      %1427 = vmatprep.subr.mxu0 0.0
      %1428 = vmatpush1.msra.mxu0 0.0
      %1429 = vmatprep.subr.mxu0 0.0
      %1430 = vmatpush1.msra.mxu0 0.0
      %1431 = vmatprep.subr.mxu0 0.0
      %1432 = vmatpush1.msra.mxu0 0.0
      %1433 = vmatprep.subr.mxu0 0.0
      %1434 = vmatpush1.msra.mxu0 0.0
      %1435 = vmatprep.subr.mxu0 0.0
      %1436 = vmatpush1.msra.mxu0 0.0
      %1437 = vmatprep.subr.mxu0 0.0
      %1438 = vmatpush1.msra.mxu0 0.0
      %1439 = vmatprep.subr.mxu0 0.0
      %1440 = vmatpush1.msra.mxu0 0.0
      %1441 = vmatprep.subr.mxu0 0.0
      %1442 = vmatpush1.msra.mxu0 0.0
      %1443 = vmatprep.subr.mxu0 0.0
      %1444 = vmatpush1.msra.mxu0 0.0
      %1445 = vmatprep.subr.mxu0 0.0
      %1446 = vmatpush1.msra.mxu0 0.0
      %1447 = vmatprep.subr.mxu0 0.0
      %1448 = vmatpush1.msra.mxu0 0.0
      %1449 = vmatprep.mubr.f32.mxu0 0.0
      %1450 = vmatmul.mubr.f32.gmra.mrb[0].mxu0 %v1362
      %v1451 = vpop.f32.mrb[0].mxu0
      %v1452 = vadd.f32 0.0, %v1451
      %v1453 = vpop.f32.mrb[0].mxu0
      %1454 = vmatprep.mubr.f32.mxu0 0.0
      %1455 = vmatmul.mubr.f32.gmra.mrb[0].mxu0 %v1365
      %v1456 = vpop.f32.mrb[0].mxu0
      %v1457 = vadd.f32 0.0, %v1456
      %v1458 = vpop.f32.mrb[0].mxu0
      %1459 = vmatprep.mubr.f32.mxu0 0.0
      %1460 = vmatmul.mubr.f32.gmra.mrb[0].mxu0 %v1368
      %v1461 = vpop.f32.mrb[0].mxu0
      %v1462 = vadd.f32 0.0, %v1461
      %v1463 = vpop.f32.mrb[0].mxu0
      %1464 = vmatprep.mubr.f32.mxu0 0.0
      %1465 = vmatmul.mubr.f32.gmra.mrb[0].mxu0 %v1371
      %v1466 = vpop.f32.mrb[0].mxu0
      %v1467 = vadd.f32 0.0, %v1466
      %v1468 = vpop.f32.mrb[0].mxu0
      %1469 = vmatprep.mubr.f32.mxu0 0.0
      %1470 = vmatmul.mubr.f32.gmra.mrb[0].mxu0 %v1374
      %v1471 = vpop.f32.mrb[0].mxu0
      %v1472 = vadd.f32 0.0, %v1471
      %v1473 = vpop.f32.mrb[0].mxu0
      %1474 = vmatprep.mubr.f32.mxu0 0.0
      %1475 = vmatmul.mubr.f32.gmra.mrb[0].mxu0 %v1377
      %v1476 = vpop.f32.mrb[0].mxu0
      %v1477 = vadd.f32 0.0, %v1476
      %v1478 = vpop.f32.mrb[0].mxu0
      %1479 = vmatprep.mubr.f32.mxu0 0.0
      %1480 = vmatmul.mubr.f32.gmra.mrb[0].mxu0 %v1380
      %v1481 = vpop.f32.mrb[0].mxu0
      %v1482 = vadd.f32 0.0, %v1481
      %v1483 = vpop.f32.mrb[0].mxu0
      %1484 = vmatprep.mubr.f32.mxu0 0.0
      %1485 = vmatmul.mubr.f32.gmra.mrb[0].mxu0 %v1383
      %v1486 = vpop.f32.mrb[0].mxu0
      %v1487 = vadd.f32 0.0, %v1486
      %v1488 = vpop.f32.mrb[0].mxu0
      %1489 = vdwg.mxu0
      %v1490 = vld [vmem:[%s6] sm:$0xff]
      %v1491 = vld [vmem:[%s6 + $0x8] sm:$0xff]
      %v1492 = vld [vmem:[%s6 + $0x10] sm:$0xff]
      %v1493 = vld [vmem:[%s6 + $0x18] sm:$0xff]
      %v1494 = vld [vmem:[%s6 + $0x20] sm:$0xff]
      %v1495 = vld [vmem:[%s6 + $0x28] sm:$0xff]
      %v1496 = vld [vmem:[%s6 + $0x30] sm:$0xff]
      %v1497 = vld [vmem:[%s6 + $0x38] sm:$0xff]
      %1498 = vmatprep.subr.mxu0 0.0
      %1499 = vmatpush1.msra.mxu0 %v1490
      %1500 = vmatprep.subr.mxu0 0.0
      %1501 = vmatpush1.msra.mxu0 %v1491
      %1502 = vmatprep.subr.mxu0 0.0
      %1503 = vmatpush1.msra.mxu0 %v1492
      %1504 = vmatprep.subr.mxu0 0.0
      %1505 = vmatpush1.msra.mxu0 %v1493
      %1506 = vmatprep.subr.mxu0 0.0
      %1507 = vmatpush1.msra.mxu0 %v1494
      %1508 = vmatprep.subr.mxu0 0.0
      %1509 = vmatpush1.msra.mxu0 %v1495
      %1510 = vmatprep.subr.mxu0 0.0
      %1511 = vmatpush1.msra.mxu0 %v1496
      %1512 = vmatprep.subr.mxu0 0.0
      %1513 = vmatpush1.msra.mxu0 %v1497
      %1514 = vmatprep.subr.mxu0 0.0
      %1515 = vmatpush1.msra.mxu0 0.0
      %1516 = vmatprep.subr.mxu0 0.0
      %1517 = vmatpush1.msra.mxu0 0.0
      %1518 = vmatprep.subr.mxu0 0.0
      %1519 = vmatpush1.msra.mxu0 0.0
      %1520 = vmatprep.subr.mxu0 0.0
      %1521 = vmatpush1.msra.mxu0 0.0
      %1522 = vmatprep.subr.mxu0 0.0
      %1523 = vmatpush1.msra.mxu0 0.0
      %1524 = vmatprep.subr.mxu0 0.0
      %1525 = vmatpush1.msra.mxu0 0.0
      %1526 = vmatprep.subr.mxu0 0.0
      %1527 = vmatpush1.msra.mxu0 0.0
      %1528 = vmatprep.subr.mxu0 0.0
      %1529 = vmatpush1.msra.mxu0 0.0
      %1530 = vmatprep.subr.mxu0 0.0
      %1531 = vmatpush1.msra.mxu0 0.0
      %1532 = vmatprep.subr.mxu0 0.0
      %1533 = vmatpush1.msra.mxu0 0.0
      %1534 = vmatprep.subr.mxu0 0.0
      %1535 = vmatpush1.msra.mxu0 0.0
      %1536 = vmatprep.subr.mxu0 0.0
      %1537 = vmatpush1.msra.mxu0 0.0
      %1538 = vmatprep.subr.mxu0 0.0
      %1539 = vmatpush1.msra.mxu0 0.0
      %1540 = vmatprep.subr.mxu0 0.0
      %1541 = vmatpush1.msra.mxu0 0.0
      %1542 = vmatprep.subr.mxu0 0.0
      %1543 = vmatpush1.msra.mxu0 0.0
      %1544 = vmatprep.subr.mxu0 0.0
      %1545 = vmatpush1.msra.mxu0 0.0
      %1546 = vmatprep.subr.mxu0 0.0
      %1547 = vmatpush1.msra.mxu0 0.0
      %1548 = vmatprep.subr.mxu0 0.0
      %1549 = vmatpush1.msra.mxu0 0.0
      %1550 = vmatprep.subr.mxu0 0.0
      %1551 = vmatpush1.msra.mxu0 0.0
      %1552 = vmatprep.subr.mxu0 0.0
      %1553 = vmatpush1.msra.mxu0 0.0
      %1554 = vmatprep.subr.mxu0 0.0
      %1555 = vmatpush1.msra.mxu0 0.0
      %1556 = vmatprep.subr.mxu0 0.0
      %1557 = vmatpush1.msra.mxu0 0.0
      %1558 = vmatprep.subr.mxu0 0.0
      %1559 = vmatpush1.msra.mxu0 0.0
      %1560 = vmatprep.subr.mxu0 0.0
      %1561 = vmatpush1.msra.mxu0 0.0
      %1562 = vmatprep.mubr.f32.mxu0 0.0
      %1563 = vmatmul.mubr.f32.gmra.mrb[0].mxu0 %v1362
      %v1564 = vpop.f32.mrb[0].mxu0
      %v1565 = vadd.f32 0.0, %v1564
      %v1566 = vpop.f32.mrb[0].mxu0
      %1567 = vmatprep.mubr.f32.mxu0 0.0
      %1568 = vmatmul.mubr.f32.gmra.mrb[0].mxu0 %v1365
      %v1569 = vpop.f32.mrb[0].mxu0
      %v1570 = vadd.f32 0.0, %v1569
      %v1571 = vpop.f32.mrb[0].mxu0
      %1572 = vmatprep.mubr.f32.mxu0 0.0
      %1573 = vmatmul.mubr.f32.gmra.mrb[0].mxu0 %v1368
      %v1574 = vpop.f32.mrb[0].mxu0
      %v1575 = vadd.f32 0.0, %v1574
      %v1576 = vpop.f32.mrb[0].mxu0
      %1577 = vmatprep.mubr.f32.mxu0 0.0
      %1578 = vmatmul.mubr.f32.gmra.mrb[0].mxu0 %v1371
      %v1579 = vpop.f32.mrb[0].mxu0
      %v1580 = vadd.f32 0.0, %v1579
      %v1581 = vpop.f32.mrb[0].mxu0
      %1582 = vmatprep.mubr.f32.mxu0 0.0
      %1583 = vmatmul.mubr.f32.gmra.mrb[0].mxu0 %v1374
      %v1584 = vpop.f32.mrb[0].mxu0
      %v1585 = vadd.f32 0.0, %v1584
      %v1586 = vpop.f32.mrb[0].mxu0
      %1587 = vmatprep.mubr.f32.mxu0 0.0
      %1588 = vmatmul.mubr.f32.gmra.mrb[0].mxu0 %v1377
      %v1589 = vpop.f32.mrb[0].mxu0
      %v1590 = vadd.f32 0.0, %v1589
      %v1591 = vpop.f32.mrb[0].mxu0
      %1592 = vmatprep.mubr.f32.mxu0 0.0
      %1593 = vmatmul.mubr.f32.gmra.mrb[0].mxu0 %v1380
      %v1594 = vpop.f32.mrb[0].mxu0
      %v1595 = vadd.f32 0.0, %v1594
      %v1596 = vpop.f32.mrb[0].mxu0
      %1597 = vmatprep.mubr.f32.mxu0 0.0
      %1598 = vmatmul.mubr.f32.gmra.mrb[0].mxu0 %v1383
      %v1599 = vpop.f32.mrb[0].mxu0
      %v1600 = vadd.f32 0.0, %v1599
      %v1601 = vpop.f32.mrb[0].mxu0
      %1602 = vdwg.mxu0
      %vm1603 = vcmask 261120
      %v1605 = vsel %vm1603, %v1275, 0
      %v1608 = vsel %vm1603, %v1280, 0
      %v1611 = vsel %vm1603, %v1285, 0
      %v1614 = vsel %vm1603, %v1290, 0
      %v1617 = vsel %vm1603, %v1295, 0
      %v1620 = vsel %vm1603, %v1300, 0
      %v1623 = vsel %vm1603, %v1305, 0
      %v1626 = vsel %vm1603, %v1310, 0
      %v1629 = vsel %vm1603, %v1315, 0
      %v1632 = vsel %vm1603, %v1320, 0
      %v1635 = vsel %vm1603, %v1325, 0
      %v1638 = vsel %vm1603, %v1330, 0
      %v1641 = vsel %vm1603, %v1335, 0
      %v1644 = vsel %vm1603, %v1340, 0
      %v1647 = vsel %vm1603, %v1345, 0
      %v1650 = vsel %vm1603, %v1350, 0
      %v1653 = vsel %vm1603, %v1452, 0
      %v1656 = vsel %vm1603, %v1457, 0
      %v1659 = vsel %vm1603, %v1462, 0
      %v1662 = vsel %vm1603, %v1467, 0
      %v1665 = vsel %vm1603, %v1472, 0
      %v1668 = vsel %vm1603, %v1477, 0
      %v1671 = vsel %vm1603, %v1482, 0
      %v1674 = vsel %vm1603, %v1487, 0
      %1676 = vmatprep.subr.mxu0 0.0
      %1677 = vmatpush1.xpose.msra.mxu0 %v1653
      %1678 = vmatprep.subr.mxu0 0.0
      %1679 = vmatpush1.xpose.msra.mxu0 %v1656
      %1680 = vmatprep.subr.mxu0 0.0
      %1681 = vmatpush1.xpose.msra.mxu0 %v1659
      %1682 = vmatprep.subr.mxu0 0.0
      %1683 = vmatpush1.xpose.msra.mxu0 %v1662
      %1684 = vmatprep.subr.mxu0 0.0
      %1685 = vmatpush1.xpose.msra.mxu0 %v1665
      %1686 = vmatprep.subr.mxu0 0.0
      %1687 = vmatpush1.xpose.msra.mxu0 %v1668
      %1688 = vmatprep.subr.mxu0 0.0
      %1689 = vmatpush1.xpose.msra.mxu0 %v1671
      %1690 = vmatprep.subr.mxu0 0.0
      %1691 = vmatpush1.xpose.msra.mxu0 %v1674
      %1692 = vmatprep.subr.mxu0 0.0
      %1693 = vmatpush1.xpose.msra.mxu0 0.0
      %1694 = vmatprep.subr.mxu0 0.0
      %1695 = vmatpush1.xpose.msra.mxu0 0.0
      %1696 = vmatprep.subr.mxu0 0.0
      %1697 = vmatpush1.xpose.msra.mxu0 0.0
      %1698 = vmatprep.subr.mxu0 0.0
      %1699 = vmatpush1.xpose.msra.mxu0 0.0
      %1700 = vmatprep.subr.mxu0 0.0
      %1701 = vmatpush1.xpose.msra.mxu0 0.0
      %1702 = vmatprep.subr.mxu0 0.0
      %1703 = vmatpush1.xpose.msra.mxu0 0.0
      %1704 = vmatprep.subr.mxu0 0.0
      %1705 = vmatpush1.xpose.msra.mxu0 0.0
      %1706 = vmatprep.subr.mxu0 0.0
      %1707 = vmatpush1.xpose.msra.mxu0 0.0
      %1708 = vmatprep.subr.mxu0 0.0
      %1709 = vmatpush1.xpose.msra.mxu0 0.0
      %1710 = vmatprep.subr.mxu0 0.0
      %1711 = vmatpush1.xpose.msra.mxu0 0.0
      %1712 = vmatprep.subr.mxu0 0.0
      %1713 = vmatpush1.xpose.msra.mxu0 0.0
      %1714 = vmatprep.subr.mxu0 0.0
      %1715 = vmatpush1.xpose.msra.mxu0 0.0
      %1716 = vmatprep.subr.mxu0 0.0
      %1717 = vmatpush1.xpose.msra.mxu0 0.0
      %1718 = vmatprep.subr.mxu0 0.0
      %1719 = vmatpush1.xpose.msra.mxu0 0.0
      %1720 = vmatprep.subr.mxu0 0.0
      %1721 = vmatpush1.xpose.msra.mxu0 0.0
      %1722 = vmatprep.subr.mxu0 0.0
      %1723 = vmatpush1.xpose.msra.mxu0 0.0
      %1724 = vmatprep.subr.mxu0 0.0
      %1725 = vmatpush1.xpose.msra.mxu0 0.0
      %1726 = vmatprep.subr.mxu0 0.0
      %1727 = vmatpush1.xpose.msra.mxu0 0.0
      %1728 = vmatprep.subr.mxu0 0.0
      %1729 = vmatpush1.xpose.msra.mxu0 0.0
      %1730 = vmatprep.subr.mxu0 0.0
      %1731 = vmatpush1.xpose.msra.mxu0 0.0
      %1732 = vmatprep.subr.mxu0 0.0
      %1733 = vmatpush1.xpose.msra.mxu0 0.0
      %1734 = vmatprep.subr.mxu0 0.0
      %1735 = vmatpush1.xpose.msra.mxu0 0.0
      %1736 = vmatprep.subr.mxu0 0.0
      %1737 = vmatpush1.xpose.msra.mxu0 0.0
      %1738 = vmatprep.subr.mxu0 0.0
      %1739 = vmatpush1.xpose.msra.mxu0 0.0
      %1740 = vmatprep.mubr.f32.mxu0 0.0
      %1741 = vmatmul.mubr.f32.gmra.mrb[0].mxu0 %v1605
      %v1742 = vpop.f32.mrb[0].mxu0
      %v1743 = vadd.f32 0.0, %v1742
      %v1744 = vpop.f32.mrb[0].mxu0
      %1745 = vmatprep.mubr.f32.mxu0 0.0
      %1746 = vmatmul.mubr.f32.gmra.mrb[0].mxu0 %v1608
      %v1747 = vpop.f32.mrb[0].mxu0
      %v1748 = vadd.f32 0.0, %v1747
      %v1749 = vpop.f32.mrb[0].mxu0
      %1750 = vmatprep.mubr.f32.mxu0 0.0
      %1751 = vmatmul.mubr.f32.gmra.mrb[0].mxu0 %v1611
      %v1752 = vpop.f32.mrb[0].mxu0
      %v1753 = vadd.f32 0.0, %v1752
      %v1754 = vpop.f32.mrb[0].mxu0
      %1755 = vmatprep.mubr.f32.mxu0 0.0
      %1756 = vmatmul.mubr.f32.gmra.mrb[0].mxu0 %v1614
      %v1757 = vpop.f32.mrb[0].mxu0
      %v1758 = vadd.f32 0.0, %v1757
      %v1759 = vpop.f32.mrb[0].mxu0
      %1760 = vmatprep.mubr.f32.mxu0 0.0
      %1761 = vmatmul.mubr.f32.gmra.mrb[0].mxu0 %v1617
      %v1762 = vpop.f32.mrb[0].mxu0
      %v1763 = vadd.f32 0.0, %v1762
      %v1764 = vpop.f32.mrb[0].mxu0
      %1765 = vmatprep.mubr.f32.mxu0 0.0
      %1766 = vmatmul.mubr.f32.gmra.mrb[0].mxu0 %v1620
      %v1767 = vpop.f32.mrb[0].mxu0
      %v1768 = vadd.f32 0.0, %v1767
      %v1769 = vpop.f32.mrb[0].mxu0
      %1770 = vmatprep.mubr.f32.mxu0 0.0
      %1771 = vmatmul.mubr.f32.gmra.mrb[0].mxu0 %v1623
      %v1772 = vpop.f32.mrb[0].mxu0
      %v1773 = vadd.f32 0.0, %v1772
      %v1774 = vpop.f32.mrb[0].mxu0
      %1775 = vmatprep.mubr.f32.mxu0 0.0
      %1776 = vmatmul.mubr.f32.gmra.mrb[0].mxu0 %v1626
      %v1777 = vpop.f32.mrb[0].mxu0
      %v1778 = vadd.f32 0.0, %v1777
      %v1779 = vpop.f32.mrb[0].mxu0
      %1780 = vmatprep.mubr.f32.mxu0 0.0
      %1781 = vmatmul.mubr.f32.gmra.mrb[0].mxu0 %v1629
      %v1782 = vpop.f32.mrb[0].mxu0
      %v1783 = vadd.f32 0.0, %v1782
      %v1784 = vpop.f32.mrb[0].mxu0
      %1785 = vmatprep.mubr.f32.mxu0 0.0
      %1786 = vmatmul.mubr.f32.gmra.mrb[0].mxu0 %v1632
      %v1787 = vpop.f32.mrb[0].mxu0
      %v1788 = vadd.f32 0.0, %v1787
      %v1789 = vpop.f32.mrb[0].mxu0
      %1790 = vmatprep.mubr.f32.mxu0 0.0
      %1791 = vmatmul.mubr.f32.gmra.mrb[0].mxu0 %v1635
      %v1792 = vpop.f32.mrb[0].mxu0
      %v1793 = vadd.f32 0.0, %v1792
      %v1794 = vpop.f32.mrb[0].mxu0
      %1795 = vmatprep.mubr.f32.mxu0 0.0
      %1796 = vmatmul.mubr.f32.gmra.mrb[0].mxu0 %v1638
      %v1797 = vpop.f32.mrb[0].mxu0
      %v1798 = vadd.f32 0.0, %v1797
      %v1799 = vpop.f32.mrb[0].mxu0
      %1800 = vmatprep.mubr.f32.mxu0 0.0
      %1801 = vmatmul.mubr.f32.gmra.mrb[0].mxu0 %v1641
      %v1802 = vpop.f32.mrb[0].mxu0
      %v1803 = vadd.f32 0.0, %v1802
      %v1804 = vpop.f32.mrb[0].mxu0
      %1805 = vmatprep.mubr.f32.mxu0 0.0
      %1806 = vmatmul.mubr.f32.gmra.mrb[0].mxu0 %v1644
      %v1807 = vpop.f32.mrb[0].mxu0
      %v1808 = vadd.f32 0.0, %v1807
      %v1809 = vpop.f32.mrb[0].mxu0
      %1810 = vmatprep.mubr.f32.mxu0 0.0
      %1811 = vmatmul.mubr.f32.gmra.mrb[0].mxu0 %v1647
      %v1812 = vpop.f32.mrb[0].mxu0
      %v1813 = vadd.f32 0.0, %v1812
      %v1814 = vpop.f32.mrb[0].mxu0
      %1815 = vmatprep.mubr.f32.mxu0 0.0
      %1816 = vmatmul.mubr.f32.gmra.mrb[0].mxu0 %v1650
      %v1817 = vpop.f32.mrb[0].mxu0
      %v1818 = vadd.f32 0.0, %v1817
      %v1819 = vpop.f32.mrb[0].mxu0
      %1820 = vdwg.mxu0
      %v1821 = vsel %vm406, %v1743, -inf
      %1822 = vmax.xlane.f32.xlu0 %v1821
      %v1823 = vpop.xlane.xlu0 %1822
      %v1824 = vsel %vm406, %v1748, -inf
      %1825 = vmax.xlane.f32.xlu0 %v1824
      %v1826 = vpop.xlane.xlu0 %1825
      %v1827 = vsel %vm406, %v1753, -inf
      %1828 = vmax.xlane.f32.xlu0 %v1827
      %v1829 = vpop.xlane.xlu0 %1828
      %v1830 = vsel %vm406, %v1758, -inf
      %1831 = vmax.xlane.f32.xlu0 %v1830
      %v1832 = vpop.xlane.xlu0 %1831
      %v1833 = vsel %vm406, %v1763, -inf
      %1834 = vmax.xlane.f32.xlu0 %v1833
      %v1835 = vpop.xlane.xlu0 %1834
      %v1836 = vsel %vm406, %v1768, -inf
      %1837 = vmax.xlane.f32.xlu0 %v1836
      %v1838 = vpop.xlane.xlu0 %1837
      %v1839 = vsel %vm406, %v1773, -inf
      %1840 = vmax.xlane.f32.xlu0 %v1839
      %v1841 = vpop.xlane.xlu0 %1840
      %v1842 = vsel %vm406, %v1778, -inf
      %1843 = vmax.xlane.f32.xlu0 %v1842
      %v1844 = vpop.xlane.xlu0 %1843
      %v1845 = vsel %vm406, %v1783, -inf
      %1846 = vmax.xlane.f32.xlu0 %v1845
      %v1847 = vpop.xlane.xlu0 %1846
      %v1848 = vsel %vm406, %v1788, -inf
      %1849 = vmax.xlane.f32.xlu0 %v1848
      %v1850 = vpop.xlane.xlu0 %1849
      %v1851 = vsel %vm406, %v1793, -inf
      %1852 = vmax.xlane.f32.xlu0 %v1851
      %v1853 = vpop.xlane.xlu0 %1852
      %v1854 = vsel %vm406, %v1798, -inf
      %1855 = vmax.xlane.f32.xlu0 %v1854
      %v1856 = vpop.xlane.xlu0 %1855
      %v1857 = vsel %vm406, %v1803, -inf
      %1858 = vmax.xlane.f32.xlu0 %v1857
      %v1859 = vpop.xlane.xlu0 %1858
      %v1860 = vsel %vm406, %v1808, -inf
      %1861 = vmax.xlane.f32.xlu0 %v1860
      %v1862 = vpop.xlane.xlu0 %1861
      %v1863 = vsel %vm406, %v1813, -inf
      %1864 = vmax.xlane.f32.xlu0 %v1863
      %v1865 = vpop.xlane.xlu0 %1864
      %v1866 = vsel %vm406, %v1818, -inf
      %1867 = vmax.xlane.f32.xlu0 %v1866
      %v1868 = vpop.xlane.xlu0 %1867
      %v1869 = vsub.f32 %v1743, %v1823
      %v1870 = vsub.f32 %v1748, %v1826
      %v1871 = vsub.f32 %v1753, %v1829
      %v1872 = vsub.f32 %v1758, %v1832
      %v1873 = vsub.f32 %v1763, %v1835
      %v1874 = vsub.f32 %v1768, %v1838
      %v1875 = vsub.f32 %v1773, %v1841
      %v1876 = vsub.f32 %v1778, %v1844
      %v1877 = vsub.f32 %v1783, %v1847
      %v1878 = vsub.f32 %v1788, %v1850
      %v1879 = vsub.f32 %v1793, %v1853
      %v1880 = vsub.f32 %v1798, %v1856
      %v1881 = vsub.f32 %v1803, %v1859
      %v1882 = vsub.f32 %v1808, %v1862
      %v1883 = vsub.f32 %v1813, %v1865
      %v1884 = vsub.f32 %v1818, %v1868
      %v1885 = vmul.f32 %v1869, 1.442695
      %v1886 = vpow.pop %v1885
      %v1887 = vmul.f32 %v1870, 1.442695
      %v1888 = vpow.pop %v1887
      %v1889 = vmul.f32 %v1871, 1.442695
      %v1890 = vpow.pop %v1889
      %v1891 = vmul.f32 %v1872, 1.442695
      %v1892 = vpow.pop %v1891
      %v1893 = vmul.f32 %v1873, 1.442695
      %v1894 = vpow.pop %v1893
      %v1895 = vmul.f32 %v1874, 1.442695
      %v1896 = vpow.pop %v1895
      %v1897 = vmul.f32 %v1875, 1.442695
      %v1898 = vpow.pop %v1897
      %v1899 = vmul.f32 %v1876, 1.442695
      %v1900 = vpow.pop %v1899
      %v1901 = vmul.f32 %v1877, 1.442695
      %v1902 = vpow.pop %v1901
      %v1903 = vmul.f32 %v1878, 1.442695
      %v1904 = vpow.pop %v1903
      %v1905 = vmul.f32 %v1879, 1.442695
      %v1906 = vpow.pop %v1905
      %v1907 = vmul.f32 %v1880, 1.442695
      %v1908 = vpow.pop %v1907
      %v1909 = vmul.f32 %v1881, 1.442695
      %v1910 = vpow.pop %v1909
      %v1911 = vmul.f32 %v1882, 1.442695
      %v1912 = vpow.pop %v1911
      %v1913 = vmul.f32 %v1883, 1.442695
      %v1914 = vpow.pop %v1913
      %v1915 = vmul.f32 %v1884, 1.442695
      %v1916 = vpow.pop %v1915
      %v1917 = vsel %vm406, %v1886, 0.0
      %1918 = vadd.xlane.f32.xlu0 %v1917
      %v1919 = vpop.xlane.xlu0 %1918
      %v1920 = vsel %vm406, %v1888, 0.0
      %1921 = vadd.xlane.f32.xlu0 %v1920
      %v1922 = vpop.xlane.xlu0 %1921
      %v1923 = vsel %vm406, %v1890, 0.0
      %1924 = vadd.xlane.f32.xlu0 %v1923
      %v1925 = vpop.xlane.xlu0 %1924
      %v1926 = vsel %vm406, %v1892, 0.0
      %1927 = vadd.xlane.f32.xlu0 %v1926
      %v1928 = vpop.xlane.xlu0 %1927
      %v1929 = vsel %vm406, %v1894, 0.0
      %1930 = vadd.xlane.f32.xlu0 %v1929
      %v1931 = vpop.xlane.xlu0 %1930
      %v1932 = vsel %vm406, %v1896, 0.0
      %1933 = vadd.xlane.f32.xlu0 %v1932
      %v1934 = vpop.xlane.xlu0 %1933
      %v1935 = vsel %vm406, %v1898, 0.0
      %1936 = vadd.xlane.f32.xlu0 %v1935
      %v1937 = vpop.xlane.xlu0 %1936
      %v1938 = vsel %vm406, %v1900, 0.0
      %1939 = vadd.xlane.f32.xlu0 %v1938
      %v1940 = vpop.xlane.xlu0 %1939
      %v1941 = vsel %vm406, %v1902, 0.0
      %1942 = vadd.xlane.f32.xlu0 %v1941
      %v1943 = vpop.xlane.xlu0 %1942
      %v1944 = vsel %vm406, %v1904, 0.0
      %1945 = vadd.xlane.f32.xlu0 %v1944
      %v1946 = vpop.xlane.xlu0 %1945
      %v1947 = vsel %vm406, %v1906, 0.0
      %1948 = vadd.xlane.f32.xlu0 %v1947
      %v1949 = vpop.xlane.xlu0 %1948
      %v1950 = vsel %vm406, %v1908, 0.0
      %1951 = vadd.xlane.f32.xlu0 %v1950
      %v1952 = vpop.xlane.xlu0 %1951
      %v1953 = vsel %vm406, %v1910, 0.0
      %1954 = vadd.xlane.f32.xlu0 %v1953
      %v1955 = vpop.xlane.xlu0 %1954
      %v1956 = vsel %vm406, %v1912, 0.0
      %1957 = vadd.xlane.f32.xlu0 %v1956
      %v1958 = vpop.xlane.xlu0 %1957
      %v1959 = vsel %vm406, %v1914, 0.0
      %1960 = vadd.xlane.f32.xlu0 %v1959
      %v1961 = vpop.xlane.xlu0 %1960
      %v1962 = vsel %vm406, %v1916, 0.0
      %1963 = vadd.xlane.f32.xlu0 %v1962
      %v1964 = vpop.xlane.xlu0 %1963
      %v1965 = vrcp.pop %v1919
      %v1966 = vmul.f32 %v1886, %v1965
      %v1967 = vrcp.pop %v1922
      %v1968 = vmul.f32 %v1888, %v1967
      %v1969 = vrcp.pop %v1925
      %v1970 = vmul.f32 %v1890, %v1969
      %v1971 = vrcp.pop %v1928
      %v1972 = vmul.f32 %v1892, %v1971
      %v1973 = vrcp.pop %v1931
      %v1974 = vmul.f32 %v1894, %v1973
      %v1975 = vrcp.pop %v1934
      %v1976 = vmul.f32 %v1896, %v1975
      %v1977 = vrcp.pop %v1937
      %v1978 = vmul.f32 %v1898, %v1977
      %v1979 = vrcp.pop %v1940
      %v1980 = vmul.f32 %v1900, %v1979
      %v1981 = vrcp.pop %v1943
      %v1982 = vmul.f32 %v1902, %v1981
      %v1983 = vrcp.pop %v1946
      %v1984 = vmul.f32 %v1904, %v1983
      %v1985 = vrcp.pop %v1949
      %v1986 = vmul.f32 %v1906, %v1985
      %v1987 = vrcp.pop %v1952
      %v1988 = vmul.f32 %v1908, %v1987
      %v1989 = vrcp.pop %v1955
      %v1990 = vmul.f32 %v1910, %v1989
      %v1991 = vrcp.pop %v1958
      %v1992 = vmul.f32 %v1912, %v1991
      %v1993 = vrcp.pop %v1961
      %v1994 = vmul.f32 %v1914, %v1993
      %v1995 = vrcp.pop %v1964
      %v1996 = vmul.f32 %v1916, %v1995
      %v1998 = vsel %vm406, %v1966, 0
      %v2001 = vsel %vm406, %v1968, 0
      %v2004 = vsel %vm406, %v1970, 0
      %v2007 = vsel %vm406, %v1972, 0
      %v2010 = vsel %vm406, %v1974, 0
      %v2013 = vsel %vm406, %v1976, 0
      %v2016 = vsel %vm406, %v1978, 0
      %v2019 = vsel %vm406, %v1980, 0
      %v2022 = vsel %vm406, %v1982, 0
      %v2025 = vsel %vm406, %v1984, 0
      %v2028 = vsel %vm406, %v1986, 0
      %v2031 = vsel %vm406, %v1988, 0
      %v2034 = vsel %vm406, %v1990, 0
      %v2037 = vsel %vm406, %v1992, 0
      %v2040 = vsel %vm406, %v1994, 0
      %v2043 = vsel %vm406, %v1996, 0
      %2045 = vmatprep.subr.mxu0 0.0
      %2046 = vmatpush1.msra.mxu0 %v1565
      %2047 = vmatprep.subr.mxu0 0.0
      %2048 = vmatpush1.msra.mxu0 %v1570
      %2049 = vmatprep.subr.mxu0 0.0
      %2050 = vmatpush1.msra.mxu0 %v1575
      %2051 = vmatprep.subr.mxu0 0.0
      %2052 = vmatpush1.msra.mxu0 %v1580
      %2053 = vmatprep.subr.mxu0 0.0
      %2054 = vmatpush1.msra.mxu0 %v1585
      %2055 = vmatprep.subr.mxu0 0.0
      %2056 = vmatpush1.msra.mxu0 %v1590
      %2057 = vmatprep.subr.mxu0 0.0
      %2058 = vmatpush1.msra.mxu0 %v1595
      %2059 = vmatprep.subr.mxu0 0.0
      %2060 = vmatpush1.msra.mxu0 %v1600
      %2061 = vmatprep.subr.mxu0 0.0
      %2062 = vmatpush1.msra.mxu0 0.0
      %2063 = vmatprep.subr.mxu0 0.0
      %2064 = vmatpush1.msra.mxu0 0.0
      %2065 = vmatprep.subr.mxu0 0.0
      %2066 = vmatpush1.msra.mxu0 0.0
      %2067 = vmatprep.subr.mxu0 0.0
      %2068 = vmatpush1.msra.mxu0 0.0
      %2069 = vmatprep.subr.mxu0 0.0
      %2070 = vmatpush1.msra.mxu0 0.0
      %2071 = vmatprep.subr.mxu0 0.0
      %2072 = vmatpush1.msra.mxu0 0.0
      %2073 = vmatprep.subr.mxu0 0.0
      %2074 = vmatpush1.msra.mxu0 0.0
      %2075 = vmatprep.subr.mxu0 0.0
      %2076 = vmatpush1.msra.mxu0 0.0
      %2077 = vmatprep.subr.mxu0 0.0
      %2078 = vmatpush1.msra.mxu0 0.0
      %2079 = vmatprep.subr.mxu0 0.0
      %2080 = vmatpush1.msra.mxu0 0.0
      %2081 = vmatprep.subr.mxu0 0.0
      %2082 = vmatpush1.msra.mxu0 0.0
      %2083 = vmatprep.subr.mxu0 0.0
      %2084 = vmatpush1.msra.mxu0 0.0
      %2085 = vmatprep.subr.mxu0 0.0
      %2086 = vmatpush1.msra.mxu0 0.0
      %2087 = vmatprep.subr.mxu0 0.0
      %2088 = vmatpush1.msra.mxu0 0.0
      %2089 = vmatprep.subr.mxu0 0.0
      %2090 = vmatpush1.msra.mxu0 0.0
      %2091 = vmatprep.subr.mxu0 0.0
      %2092 = vmatpush1.msra.mxu0 0.0
      %2093 = vmatprep.subr.mxu0 0.0
      %2094 = vmatpush1.msra.mxu0 0.0
      %2095 = vmatprep.subr.mxu0 0.0
      %2096 = vmatpush1.msra.mxu0 0.0
      %2097 = vmatprep.subr.mxu0 0.0
      %2098 = vmatpush1.msra.mxu0 0.0
      %2099 = vmatprep.subr.mxu0 0.0
      %2100 = vmatpush1.msra.mxu0 0.0
      %2101 = vmatprep.subr.mxu0 0.0
      %2102 = vmatpush1.msra.mxu0 0.0
      %2103 = vmatprep.subr.mxu0 0.0
      %2104 = vmatpush1.msra.mxu0 0.0
      %2105 = vmatprep.subr.mxu0 0.0
      %2106 = vmatpush1.msra.mxu0 0.0
      %2107 = vmatprep.subr.mxu0 0.0
      %2108 = vmatpush1.msra.mxu0 0.0
      %2109 = vmatprep.mubr.f32.mxu0 0.0
      %2110 = vmatmul.mubr.f32.gmra.mrb[0].mxu0 %v1998
      %v2111 = vpop.f32.mrb[0].mxu0
      %v2112 = vadd.f32 0.0, %v2111
      %v2113 = vpop.f32.mrb[0].mxu0
      %2114 = vmatprep.mubr.f32.mxu0 0.0
      %2115 = vmatmul.mubr.f32.gmra.mrb[0].mxu0 %v2001
      %v2116 = vpop.f32.mrb[0].mxu0
      %v2117 = vadd.f32 0.0, %v2116
      %v2118 = vpop.f32.mrb[0].mxu0
      %2119 = vmatprep.mubr.f32.mxu0 0.0
      %2120 = vmatmul.mubr.f32.gmra.mrb[0].mxu0 %v2004
      %v2121 = vpop.f32.mrb[0].mxu0
      %v2122 = vadd.f32 0.0, %v2121
      %v2123 = vpop.f32.mrb[0].mxu0
      %2124 = vmatprep.mubr.f32.mxu0 0.0
      %2125 = vmatmul.mubr.f32.gmra.mrb[0].mxu0 %v2007
      %v2126 = vpop.f32.mrb[0].mxu0
      %v2127 = vadd.f32 0.0, %v2126
      %v2128 = vpop.f32.mrb[0].mxu0
      %2129 = vmatprep.mubr.f32.mxu0 0.0
      %2130 = vmatmul.mubr.f32.gmra.mrb[0].mxu0 %v2010
      %v2131 = vpop.f32.mrb[0].mxu0
      %v2132 = vadd.f32 0.0, %v2131
      %v2133 = vpop.f32.mrb[0].mxu0
      %2134 = vmatprep.mubr.f32.mxu0 0.0
      %2135 = vmatmul.mubr.f32.gmra.mrb[0].mxu0 %v2013
      %v2136 = vpop.f32.mrb[0].mxu0
      %v2137 = vadd.f32 0.0, %v2136
      %v2138 = vpop.f32.mrb[0].mxu0
      %2139 = vmatprep.mubr.f32.mxu0 0.0
      %2140 = vmatmul.mubr.f32.gmra.mrb[0].mxu0 %v2016
      %v2141 = vpop.f32.mrb[0].mxu0
      %v2142 = vadd.f32 0.0, %v2141
      %v2143 = vpop.f32.mrb[0].mxu0
      %2144 = vmatprep.mubr.f32.mxu0 0.0
      %2145 = vmatmul.mubr.f32.gmra.mrb[0].mxu0 %v2019
      %v2146 = vpop.f32.mrb[0].mxu0
      %v2147 = vadd.f32 0.0, %v2146
      %v2148 = vpop.f32.mrb[0].mxu0
      %2149 = vmatprep.mubr.f32.mxu0 0.0
      %2150 = vmatmul.mubr.f32.gmra.mrb[0].mxu0 %v2022
      %v2151 = vpop.f32.mrb[0].mxu0
      %v2152 = vadd.f32 0.0, %v2151
      %v2153 = vpop.f32.mrb[0].mxu0
      %2154 = vmatprep.mubr.f32.mxu0 0.0
      %2155 = vmatmul.mubr.f32.gmra.mrb[0].mxu0 %v2025
      %v2156 = vpop.f32.mrb[0].mxu0
      %v2157 = vadd.f32 0.0, %v2156
      %v2158 = vpop.f32.mrb[0].mxu0
      %2159 = vmatprep.mubr.f32.mxu0 0.0
      %2160 = vmatmul.mubr.f32.gmra.mrb[0].mxu0 %v2028
      %v2161 = vpop.f32.mrb[0].mxu0
      %v2162 = vadd.f32 0.0, %v2161
      %v2163 = vpop.f32.mrb[0].mxu0
      %2164 = vmatprep.mubr.f32.mxu0 0.0
      %2165 = vmatmul.mubr.f32.gmra.mrb[0].mxu0 %v2031
      %v2166 = vpop.f32.mrb[0].mxu0
      %v2167 = vadd.f32 0.0, %v2166
      %v2168 = vpop.f32.mrb[0].mxu0
      %2169 = vmatprep.mubr.f32.mxu0 0.0
      %2170 = vmatmul.mubr.f32.gmra.mrb[0].mxu0 %v2034
      %v2171 = vpop.f32.mrb[0].mxu0
      %v2172 = vadd.f32 0.0, %v2171
      %v2173 = vpop.f32.mrb[0].mxu0
      %2174 = vmatprep.mubr.f32.mxu0 0.0
      %2175 = vmatmul.mubr.f32.gmra.mrb[0].mxu0 %v2037
      %v2176 = vpop.f32.mrb[0].mxu0
      %v2177 = vadd.f32 0.0, %v2176
      %v2178 = vpop.f32.mrb[0].mxu0
      %2179 = vmatprep.mubr.f32.mxu0 0.0
      %2180 = vmatmul.mubr.f32.gmra.mrb[0].mxu0 %v2040
      %v2181 = vpop.f32.mrb[0].mxu0
      %v2182 = vadd.f32 0.0, %v2181
      %v2183 = vpop.f32.mrb[0].mxu0
      %2184 = vmatprep.mubr.f32.mxu0 0.0
      %2185 = vmatmul.mubr.f32.gmra.mrb[0].mxu0 %v2043
      %v2186 = vpop.f32.mrb[0].mxu0
      %v2187 = vadd.f32 0.0, %v2186
      %v2188 = vpop.f32.mrb[0].mxu0
      %2189 = vdwg.mxu0
      %v2190 = vld [vmem:[%s7] sm:$0xff]
      %v2191 = vld [vmem:[%s7 + $0x8] sm:$0xff]
      %v2192 = vld [vmem:[%s7 + $0x10] sm:$0xff]
      %v2193 = vld [vmem:[%s7 + $0x18] sm:$0xff]
      %v2195 = vsel %vm1603, %v2112, 0
      %v2198 = vsel %vm1603, %v2117, 0
      %v2201 = vsel %vm1603, %v2122, 0
      %v2204 = vsel %vm1603, %v2127, 0
      %v2207 = vsel %vm1603, %v2132, 0
      %v2210 = vsel %vm1603, %v2137, 0
      %v2213 = vsel %vm1603, %v2142, 0
      %v2216 = vsel %vm1603, %v2147, 0
      %v2219 = vsel %vm1603, %v2152, 0
      %v2222 = vsel %vm1603, %v2157, 0
      %v2225 = vsel %vm1603, %v2162, 0
      %v2228 = vsel %vm1603, %v2167, 0
      %v2231 = vsel %vm1603, %v2172, 0
      %v2234 = vsel %vm1603, %v2177, 0
      %v2237 = vsel %vm1603, %v2182, 0
      %v2240 = vsel %vm1603, %v2187, 0
      %2242 = vmatprep.subr.mxu0 0.0
      %2243 = vmatpush1.msra.mxu0 %v2190
      %2244 = vmatprep.subr.mxu0 0.0
      %2245 = vmatpush1.msra.mxu0 %v2191
      %2246 = vmatprep.subr.mxu0 0.0
      %2247 = vmatpush1.msra.mxu0 %v2192
      %2248 = vmatprep.subr.mxu0 0.0
      %2249 = vmatpush1.msra.mxu0 %v2193
      %2250 = vmatprep.subr.mxu0 0.0
      %2251 = vmatpush1.msra.mxu0 0.0
      %2252 = vmatprep.subr.mxu0 0.0
      %2253 = vmatpush1.msra.mxu0 0.0
      %2254 = vmatprep.subr.mxu0 0.0
      %2255 = vmatpush1.msra.mxu0 0.0
      %2256 = vmatprep.subr.mxu0 0.0
      %2257 = vmatpush1.msra.mxu0 0.0
      %2258 = vmatprep.subr.mxu0 0.0
      %2259 = vmatpush1.msra.mxu0 0.0
      %2260 = vmatprep.subr.mxu0 0.0
      %2261 = vmatpush1.msra.mxu0 0.0
      %2262 = vmatprep.subr.mxu0 0.0
      %2263 = vmatpush1.msra.mxu0 0.0
      %2264 = vmatprep.subr.mxu0 0.0
      %2265 = vmatpush1.msra.mxu0 0.0
      %2266 = vmatprep.subr.mxu0 0.0
      %2267 = vmatpush1.msra.mxu0 0.0
      %2268 = vmatprep.subr.mxu0 0.0
      %2269 = vmatpush1.msra.mxu0 0.0
      %2270 = vmatprep.subr.mxu0 0.0
      %2271 = vmatpush1.msra.mxu0 0.0
      %2272 = vmatprep.subr.mxu0 0.0
      %2273 = vmatpush1.msra.mxu0 0.0
      %2274 = vmatprep.subr.mxu0 0.0
      %2275 = vmatpush1.msra.mxu0 0.0
      %2276 = vmatprep.subr.mxu0 0.0
      %2277 = vmatpush1.msra.mxu0 0.0
      %2278 = vmatprep.subr.mxu0 0.0
      %2279 = vmatpush1.msra.mxu0 0.0
      %2280 = vmatprep.subr.mxu0 0.0
      %2281 = vmatpush1.msra.mxu0 0.0
      %2282 = vmatprep.subr.mxu0 0.0
      %2283 = vmatpush1.msra.mxu0 0.0
      %2284 = vmatprep.subr.mxu0 0.0
      %2285 = vmatpush1.msra.mxu0 0.0
      %2286 = vmatprep.subr.mxu0 0.0
      %2287 = vmatpush1.msra.mxu0 0.0
      %2288 = vmatprep.subr.mxu0 0.0
      %2289 = vmatpush1.msra.mxu0 0.0
      %2290 = vmatprep.subr.mxu0 0.0
      %2291 = vmatpush1.msra.mxu0 0.0
      %2292 = vmatprep.subr.mxu0 0.0
      %2293 = vmatpush1.msra.mxu0 0.0
      %2294 = vmatprep.subr.mxu0 0.0
      %2295 = vmatpush1.msra.mxu0 0.0
      %2296 = vmatprep.subr.mxu0 0.0
      %2297 = vmatpush1.msra.mxu0 0.0
      %2298 = vmatprep.subr.mxu0 0.0
      %2299 = vmatpush1.msra.mxu0 0.0
      %2300 = vmatprep.subr.mxu0 0.0
      %2301 = vmatpush1.msra.mxu0 0.0
      %2302 = vmatprep.subr.mxu0 0.0
      %2303 = vmatpush1.msra.mxu0 0.0
      %2304 = vmatprep.subr.mxu0 0.0
      %2305 = vmatpush1.msra.mxu0 0.0
      %2306 = vmatprep.mubr.f32.mxu0 0.0
      %2307 = vmatmul.mubr.f32.gmra.mrb[0].mxu0 %v2195
      %v2308 = vpop.f32.mrb[0].mxu0
      %v2309 = vadd.f32 0.0, %v2308
      %v2310 = vpop.f32.mrb[0].mxu0
      %2311 = vmatprep.mubr.f32.mxu0 0.0
      %2312 = vmatmul.mubr.f32.gmra.mrb[0].mxu0 %v2198
      %v2313 = vpop.f32.mrb[0].mxu0
      %v2314 = vadd.f32 0.0, %v2313
      %v2315 = vpop.f32.mrb[0].mxu0
      %2316 = vmatprep.mubr.f32.mxu0 0.0
      %2317 = vmatmul.mubr.f32.gmra.mrb[0].mxu0 %v2201
      %v2318 = vpop.f32.mrb[0].mxu0
      %v2319 = vadd.f32 0.0, %v2318
      %v2320 = vpop.f32.mrb[0].mxu0
      %2321 = vmatprep.mubr.f32.mxu0 0.0
      %2322 = vmatmul.mubr.f32.gmra.mrb[0].mxu0 %v2204
      %v2323 = vpop.f32.mrb[0].mxu0
      %v2324 = vadd.f32 0.0, %v2323
      %v2325 = vpop.f32.mrb[0].mxu0
      %2326 = vmatprep.mubr.f32.mxu0 0.0
      %2327 = vmatmul.mubr.f32.gmra.mrb[0].mxu0 %v2207
      %v2328 = vpop.f32.mrb[0].mxu0
      %v2329 = vadd.f32 0.0, %v2328
      %v2330 = vpop.f32.mrb[0].mxu0
      %2331 = vmatprep.mubr.f32.mxu0 0.0
      %2332 = vmatmul.mubr.f32.gmra.mrb[0].mxu0 %v2210
      %v2333 = vpop.f32.mrb[0].mxu0
      %v2334 = vadd.f32 0.0, %v2333
      %v2335 = vpop.f32.mrb[0].mxu0
      %2336 = vmatprep.mubr.f32.mxu0 0.0
      %2337 = vmatmul.mubr.f32.gmra.mrb[0].mxu0 %v2213
      %v2338 = vpop.f32.mrb[0].mxu0
      %v2339 = vadd.f32 0.0, %v2338
      %v2340 = vpop.f32.mrb[0].mxu0
      %2341 = vmatprep.mubr.f32.mxu0 0.0
      %2342 = vmatmul.mubr.f32.gmra.mrb[0].mxu0 %v2216
      %v2343 = vpop.f32.mrb[0].mxu0
      %v2344 = vadd.f32 0.0, %v2343
      %v2345 = vpop.f32.mrb[0].mxu0
      %2346 = vmatprep.mubr.f32.mxu0 0.0
      %2347 = vmatmul.mubr.f32.gmra.mrb[0].mxu0 %v2219
      %v2348 = vpop.f32.mrb[0].mxu0
      %v2349 = vadd.f32 0.0, %v2348
      %v2350 = vpop.f32.mrb[0].mxu0
      %2351 = vmatprep.mubr.f32.mxu0 0.0
      %2352 = vmatmul.mubr.f32.gmra.mrb[0].mxu0 %v2222
      %v2353 = vpop.f32.mrb[0].mxu0
      %v2354 = vadd.f32 0.0, %v2353
      %v2355 = vpop.f32.mrb[0].mxu0
      %2356 = vmatprep.mubr.f32.mxu0 0.0
      %2357 = vmatmul.mubr.f32.gmra.mrb[0].mxu0 %v2225
      %v2358 = vpop.f32.mrb[0].mxu0
      %v2359 = vadd.f32 0.0, %v2358
      %v2360 = vpop.f32.mrb[0].mxu0
      %2361 = vmatprep.mubr.f32.mxu0 0.0
      %2362 = vmatmul.mubr.f32.gmra.mrb[0].mxu0 %v2228
      %v2363 = vpop.f32.mrb[0].mxu0
      %v2364 = vadd.f32 0.0, %v2363
      %v2365 = vpop.f32.mrb[0].mxu0
      %2366 = vmatprep.mubr.f32.mxu0 0.0
      %2367 = vmatmul.mubr.f32.gmra.mrb[0].mxu0 %v2231
      %v2368 = vpop.f32.mrb[0].mxu0
      %v2369 = vadd.f32 0.0, %v2368
      %v2370 = vpop.f32.mrb[0].mxu0
      %2371 = vmatprep.mubr.f32.mxu0 0.0
      %2372 = vmatmul.mubr.f32.gmra.mrb[0].mxu0 %v2234
      %v2373 = vpop.f32.mrb[0].mxu0
      %v2374 = vadd.f32 0.0, %v2373
      %v2375 = vpop.f32.mrb[0].mxu0
      %2376 = vmatprep.mubr.f32.mxu0 0.0
      %2377 = vmatmul.mubr.f32.gmra.mrb[0].mxu0 %v2237
      %v2378 = vpop.f32.mrb[0].mxu0
      %v2379 = vadd.f32 0.0, %v2378
      %v2380 = vpop.f32.mrb[0].mxu0
      %2381 = vmatprep.mubr.f32.mxu0 0.0
      %2382 = vmatmul.mubr.f32.gmra.mrb[0].mxu0 %v2240
      %v2383 = vpop.f32.mrb[0].mxu0
      %v2384 = vadd.f32 0.0, %v2383
      %v2385 = vpop.f32.mrb[0].mxu0
      %2386 = vdwg.mxu0
      %v2387 = vlaneseq
      %v2388 = vshrl.u32 %v2387, 7
      %v2389 = vsub.s32 0, %v2388
      %v2390 = vrot.slane %v405, %v2389
      %v2391 = vadd.f32 %v2390, %v2309
      %v2392 = vadd.f32 %v2390, %v2314
      %v2393 = vadd.f32 %v2390, %v2319
      %v2394 = vadd.f32 %v2390, %v2324
      %v2395 = vadd.f32 %v2390, %v2329
      %v2396 = vadd.f32 %v2390, %v2334
      %v2397 = vadd.f32 %v2390, %v2339
      %v2398 = vadd.f32 %v2390, %v2344
      %v2399 = vadd.f32 %v2390, %v2349
      %v2400 = vadd.f32 %v2390, %v2354
      %v2401 = vadd.f32 %v2390, %v2359
      %v2402 = vadd.f32 %v2390, %v2364
      %v2403 = vadd.f32 %v2390, %v2369
      %v2404 = vadd.f32 %v2390, %v2374
      %v2405 = vadd.f32 %v2390, %v2379
      %v2406 = vadd.f32 %v2390, %v2384
      %2407 = vrot.lane.b32.xlu0 %v1275, 96
      %v2408 = vpop.permute.xlu0 %2407
      %2409 = vrot.lane.b32.xlu0 %v1280, 96
      %v2410 = vpop.permute.xlu0 %2409
      %2411 = vrot.lane.b32.xlu0 %v1285, 96
      %v2412 = vpop.permute.xlu0 %2411
      %2413 = vrot.lane.b32.xlu0 %v1290, 96
      %v2414 = vpop.permute.xlu0 %2413
      %2415 = vrot.lane.b32.xlu0 %v1295, 96
      %v2416 = vpop.permute.xlu0 %2415
      %2417 = vrot.lane.b32.xlu0 %v1300, 96
      %v2418 = vpop.permute.xlu0 %2417
      %2419 = vrot.lane.b32.xlu0 %v1305, 96
      %v2420 = vpop.permute.xlu0 %2419
      %2421 = vrot.lane.b32.xlu0 %v1310, 96
      %v2422 = vpop.permute.xlu0 %2421
      %2423 = vrot.lane.b32.xlu0 %v1315, 96
      %v2424 = vpop.permute.xlu0 %2423
      %2425 = vrot.lane.b32.xlu0 %v1320, 96
      %v2426 = vpop.permute.xlu0 %2425
      %2427 = vrot.lane.b32.xlu0 %v1325, 96
      %v2428 = vpop.permute.xlu0 %2427
      %2429 = vrot.lane.b32.xlu0 %v1330, 96
      %v2430 = vpop.permute.xlu0 %2429
      %2431 = vrot.lane.b32.xlu0 %v1335, 96
      %v2432 = vpop.permute.xlu0 %2431
      %2433 = vrot.lane.b32.xlu0 %v1340, 96
      %v2434 = vpop.permute.xlu0 %2433
      %2435 = vrot.lane.b32.xlu0 %v1345, 96
      %v2436 = vpop.permute.xlu0 %2435
      %2437 = vrot.lane.b32.xlu0 %v1350, 96
      %v2438 = vpop.permute.xlu0 %2437
      %2439 = vrot.lane.b32.xlu0 %v1452, 96
      %v2440 = vpop.permute.xlu0 %2439
      %2441 = vrot.lane.b32.xlu0 %v1457, 96
      %v2442 = vpop.permute.xlu0 %2441
      %2443 = vrot.lane.b32.xlu0 %v1462, 96
      %v2444 = vpop.permute.xlu0 %2443
      %2445 = vrot.lane.b32.xlu0 %v1467, 96
      %v2446 = vpop.permute.xlu0 %2445
      %2447 = vrot.lane.b32.xlu0 %v1472, 96
      %v2448 = vpop.permute.xlu0 %2447
      %2449 = vrot.lane.b32.xlu0 %v1477, 96
      %v2450 = vpop.permute.xlu0 %2449
      %2451 = vrot.lane.b32.xlu0 %v1482, 96
      %v2452 = vpop.permute.xlu0 %2451
      %2453 = vrot.lane.b32.xlu0 %v1487, 96
      %v2454 = vpop.permute.xlu0 %2453
      %v2455 = vsel %vm1603, %v2408, 0
      %v2457 = vsel %vm1603, %v2410, 0
      %v2459 = vsel %vm1603, %v2412, 0
      %v2461 = vsel %vm1603, %v2414, 0
      %v2463 = vsel %vm1603, %v2416, 0
      %v2465 = vsel %vm1603, %v2418, 0
      %v2467 = vsel %vm1603, %v2420, 0
      %v2469 = vsel %vm1603, %v2422, 0
      %v2471 = vsel %vm1603, %v2424, 0
      %v2473 = vsel %vm1603, %v2426, 0
      %v2475 = vsel %vm1603, %v2428, 0
      %v2477 = vsel %vm1603, %v2430, 0
      %v2479 = vsel %vm1603, %v2432, 0
      %v2481 = vsel %vm1603, %v2434, 0
      %v2483 = vsel %vm1603, %v2436, 0
      %v2485 = vsel %vm1603, %v2438, 0
      %v2487 = vsel %vm1603, %v2440, 0
      %v2489 = vsel %vm1603, %v2442, 0
      %v2491 = vsel %vm1603, %v2444, 0
      %v2493 = vsel %vm1603, %v2446, 0
      %v2495 = vsel %vm1603, %v2448, 0
      %v2497 = vsel %vm1603, %v2450, 0
      %v2499 = vsel %vm1603, %v2452, 0
      %v2501 = vsel %vm1603, %v2454, 0
      %2503 = vmatprep.subr.mxu0 0.0
      %2504 = vmatpush1.xpose.msra.mxu0 %v2487
      %2505 = vmatprep.subr.mxu0 0.0
      %2506 = vmatpush1.xpose.msra.mxu0 %v2489
      %2507 = vmatprep.subr.mxu0 0.0
      %2508 = vmatpush1.xpose.msra.mxu0 %v2491
      %2509 = vmatprep.subr.mxu0 0.0
      %2510 = vmatpush1.xpose.msra.mxu0 %v2493
      %2511 = vmatprep.subr.mxu0 0.0
      %2512 = vmatpush1.xpose.msra.mxu0 %v2495
      %2513 = vmatprep.subr.mxu0 0.0
      %2514 = vmatpush1.xpose.msra.mxu0 %v2497
      %2515 = vmatprep.subr.mxu0 0.0
      %2516 = vmatpush1.xpose.msra.mxu0 %v2499
      %2517 = vmatprep.subr.mxu0 0.0
      %2518 = vmatpush1.xpose.msra.mxu0 %v2501
      %2519 = vmatprep.subr.mxu0 0.0
      %2520 = vmatpush1.xpose.msra.mxu0 0.0
      %2521 = vmatprep.subr.mxu0 0.0
      %2522 = vmatpush1.xpose.msra.mxu0 0.0
      %2523 = vmatprep.subr.mxu0 0.0
      %2524 = vmatpush1.xpose.msra.mxu0 0.0
      %2525 = vmatprep.subr.mxu0 0.0
      %2526 = vmatpush1.xpose.msra.mxu0 0.0
      %2527 = vmatprep.subr.mxu0 0.0
      %2528 = vmatpush1.xpose.msra.mxu0 0.0
      %2529 = vmatprep.subr.mxu0 0.0
      %2530 = vmatpush1.xpose.msra.mxu0 0.0
      %2531 = vmatprep.subr.mxu0 0.0
      %2532 = vmatpush1.xpose.msra.mxu0 0.0
      %2533 = vmatprep.subr.mxu0 0.0
      %2534 = vmatpush1.xpose.msra.mxu0 0.0
      %2535 = vmatprep.subr.mxu0 0.0
      %2536 = vmatpush1.xpose.msra.mxu0 0.0
      %2537 = vmatprep.subr.mxu0 0.0
      %2538 = vmatpush1.xpose.msra.mxu0 0.0
      %2539 = vmatprep.subr.mxu0 0.0
      %2540 = vmatpush1.xpose.msra.mxu0 0.0
      %2541 = vmatprep.subr.mxu0 0.0
      %2542 = vmatpush1.xpose.msra.mxu0 0.0
      %2543 = vmatprep.subr.mxu0 0.0
      %2544 = vmatpush1.xpose.msra.mxu0 0.0
      %2545 = vmatprep.subr.mxu0 0.0
      %2546 = vmatpush1.xpose.msra.mxu0 0.0
      %2547 = vmatprep.subr.mxu0 0.0
      %2548 = vmatpush1.xpose.msra.mxu0 0.0
      %2549 = vmatprep.subr.mxu0 0.0
      %2550 = vmatpush1.xpose.msra.mxu0 0.0
      %2551 = vmatprep.subr.mxu0 0.0
      %2552 = vmatpush1.xpose.msra.mxu0 0.0
      %2553 = vmatprep.subr.mxu0 0.0
      %2554 = vmatpush1.xpose.msra.mxu0 0.0
      %2555 = vmatprep.subr.mxu0 0.0
      %2556 = vmatpush1.xpose.msra.mxu0 0.0
      %2557 = vmatprep.subr.mxu0 0.0
      %2558 = vmatpush1.xpose.msra.mxu0 0.0
      %2559 = vmatprep.subr.mxu0 0.0
      %2560 = vmatpush1.xpose.msra.mxu0 0.0
      %2561 = vmatprep.subr.mxu0 0.0
      %2562 = vmatpush1.xpose.msra.mxu0 0.0
      %2563 = vmatprep.subr.mxu0 0.0
      %2564 = vmatpush1.xpose.msra.mxu0 0.0
      %2565 = vmatprep.subr.mxu0 0.0
      %2566 = vmatpush1.xpose.msra.mxu0 0.0
      %2567 = vmatprep.mubr.f32.mxu0 0.0
      %2568 = vmatmul.mubr.f32.gmra.mrb[0].mxu0 %v2455
      %v2569 = vpop.f32.mrb[0].mxu0
      %v2570 = vadd.f32 0.0, %v2569
      %v2571 = vpop.f32.mrb[0].mxu0
      %2572 = vmatprep.mubr.f32.mxu0 0.0
      %2573 = vmatmul.mubr.f32.gmra.mrb[0].mxu0 %v2457
      %v2574 = vpop.f32.mrb[0].mxu0
      %v2575 = vadd.f32 0.0, %v2574
      %v2576 = vpop.f32.mrb[0].mxu0
      %2577 = vmatprep.mubr.f32.mxu0 0.0
      %2578 = vmatmul.mubr.f32.gmra.mrb[0].mxu0 %v2459
      %v2579 = vpop.f32.mrb[0].mxu0
      %v2580 = vadd.f32 0.0, %v2579
      %v2581 = vpop.f32.mrb[0].mxu0
      %2582 = vmatprep.mubr.f32.mxu0 0.0
      %2583 = vmatmul.mubr.f32.gmra.mrb[0].mxu0 %v2461
      %v2584 = vpop.f32.mrb[0].mxu0
      %v2585 = vadd.f32 0.0, %v2584
      %v2586 = vpop.f32.mrb[0].mxu0
      %2587 = vmatprep.mubr.f32.mxu0 0.0
      %2588 = vmatmul.mubr.f32.gmra.mrb[0].mxu0 %v2463
      %v2589 = vpop.f32.mrb[0].mxu0
      %v2590 = vadd.f32 0.0, %v2589
      %v2591 = vpop.f32.mrb[0].mxu0
      %2592 = vmatprep.mubr.f32.mxu0 0.0
      %2593 = vmatmul.mubr.f32.gmra.mrb[0].mxu0 %v2465
      %v2594 = vpop.f32.mrb[0].mxu0
      %v2595 = vadd.f32 0.0, %v2594
      %v2596 = vpop.f32.mrb[0].mxu0
      %2597 = vmatprep.mubr.f32.mxu0 0.0
      %2598 = vmatmul.mubr.f32.gmra.mrb[0].mxu0 %v2467
      %v2599 = vpop.f32.mrb[0].mxu0
      %v2600 = vadd.f32 0.0, %v2599
      %v2601 = vpop.f32.mrb[0].mxu0
      %2602 = vmatprep.mubr.f32.mxu0 0.0
      %2603 = vmatmul.mubr.f32.gmra.mrb[0].mxu0 %v2469
      %v2604 = vpop.f32.mrb[0].mxu0
      %v2605 = vadd.f32 0.0, %v2604
      %v2606 = vpop.f32.mrb[0].mxu0
      %2607 = vmatprep.mubr.f32.mxu0 0.0
      %2608 = vmatmul.mubr.f32.gmra.mrb[0].mxu0 %v2471
      %v2609 = vpop.f32.mrb[0].mxu0
      %v2610 = vadd.f32 0.0, %v2609
      %v2611 = vpop.f32.mrb[0].mxu0
      %2612 = vmatprep.mubr.f32.mxu0 0.0
      %2613 = vmatmul.mubr.f32.gmra.mrb[0].mxu0 %v2473
      %v2614 = vpop.f32.mrb[0].mxu0
      %v2615 = vadd.f32 0.0, %v2614
      %v2616 = vpop.f32.mrb[0].mxu0
      %2617 = vmatprep.mubr.f32.mxu0 0.0
      %2618 = vmatmul.mubr.f32.gmra.mrb[0].mxu0 %v2475
      %v2619 = vpop.f32.mrb[0].mxu0
      %v2620 = vadd.f32 0.0, %v2619
      %v2621 = vpop.f32.mrb[0].mxu0
      %2622 = vmatprep.mubr.f32.mxu0 0.0
      %2623 = vmatmul.mubr.f32.gmra.mrb[0].mxu0 %v2477
      %v2624 = vpop.f32.mrb[0].mxu0
      %v2625 = vadd.f32 0.0, %v2624
      %v2626 = vpop.f32.mrb[0].mxu0
      %2627 = vmatprep.mubr.f32.mxu0 0.0
      %2628 = vmatmul.mubr.f32.gmra.mrb[0].mxu0 %v2479
      %v2629 = vpop.f32.mrb[0].mxu0
      %v2630 = vadd.f32 0.0, %v2629
      %v2631 = vpop.f32.mrb[0].mxu0
      %2632 = vmatprep.mubr.f32.mxu0 0.0
      %2633 = vmatmul.mubr.f32.gmra.mrb[0].mxu0 %v2481
      %v2634 = vpop.f32.mrb[0].mxu0
      %v2635 = vadd.f32 0.0, %v2634
      %v2636 = vpop.f32.mrb[0].mxu0
      %2637 = vmatprep.mubr.f32.mxu0 0.0
      %2638 = vmatmul.mubr.f32.gmra.mrb[0].mxu0 %v2483
      %v2639 = vpop.f32.mrb[0].mxu0
      %v2640 = vadd.f32 0.0, %v2639
      %v2641 = vpop.f32.mrb[0].mxu0
      %2642 = vmatprep.mubr.f32.mxu0 0.0
      %2643 = vmatmul.mubr.f32.gmra.mrb[0].mxu0 %v2485
      %v2644 = vpop.f32.mrb[0].mxu0
      %v2645 = vadd.f32 0.0, %v2644
      %v2646 = vpop.f32.mrb[0].mxu0
      %2647 = vdwg.mxu0
      %v2648 = vsel %vm406, %v2570, -inf
      %2649 = vmax.xlane.f32.xlu0 %v2648
      %v2650 = vpop.xlane.xlu0 %2649
      %v2651 = vsel %vm406, %v2575, -inf
      %2652 = vmax.xlane.f32.xlu0 %v2651
      %v2653 = vpop.xlane.xlu0 %2652
      %v2654 = vsel %vm406, %v2580, -inf
      %2655 = vmax.xlane.f32.xlu0 %v2654
      %v2656 = vpop.xlane.xlu0 %2655
      %v2657 = vsel %vm406, %v2585, -inf
      %2658 = vmax.xlane.f32.xlu0 %v2657
      %v2659 = vpop.xlane.xlu0 %2658
      %v2660 = vsel %vm406, %v2590, -inf
      %2661 = vmax.xlane.f32.xlu0 %v2660
      %v2662 = vpop.xlane.xlu0 %2661
      %v2663 = vsel %vm406, %v2595, -inf
      %2664 = vmax.xlane.f32.xlu0 %v2663
      %v2665 = vpop.xlane.xlu0 %2664
      %v2666 = vsel %vm406, %v2600, -inf
      %2667 = vmax.xlane.f32.xlu0 %v2666
      %v2668 = vpop.xlane.xlu0 %2667
      %v2669 = vsel %vm406, %v2605, -inf
      %2670 = vmax.xlane.f32.xlu0 %v2669
      %v2671 = vpop.xlane.xlu0 %2670
      %v2672 = vsel %vm406, %v2610, -inf
      %2673 = vmax.xlane.f32.xlu0 %v2672
      %v2674 = vpop.xlane.xlu0 %2673
      %v2675 = vsel %vm406, %v2615, -inf
      %2676 = vmax.xlane.f32.xlu0 %v2675
      %v2677 = vpop.xlane.xlu0 %2676
      %v2678 = vsel %vm406, %v2620, -inf
      %2679 = vmax.xlane.f32.xlu0 %v2678
      %v2680 = vpop.xlane.xlu0 %2679
      %v2681 = vsel %vm406, %v2625, -inf
      %2682 = vmax.xlane.f32.xlu0 %v2681
      %v2683 = vpop.xlane.xlu0 %2682
      %v2684 = vsel %vm406, %v2630, -inf
      %2685 = vmax.xlane.f32.xlu0 %v2684
      %v2686 = vpop.xlane.xlu0 %2685
      %v2687 = vsel %vm406, %v2635, -inf
      %2688 = vmax.xlane.f32.xlu0 %v2687
      %v2689 = vpop.xlane.xlu0 %2688
      %v2690 = vsel %vm406, %v2640, -inf
      %2691 = vmax.xlane.f32.xlu0 %v2690
      %v2692 = vpop.xlane.xlu0 %2691
      %v2693 = vsel %vm406, %v2645, -inf
      %2694 = vmax.xlane.f32.xlu0 %v2693
      %v2695 = vpop.xlane.xlu0 %2694
      %v2696 = vsub.f32 %v2570, %v2650
      %v2697 = vsub.f32 %v2575, %v2653
      %v2698 = vsub.f32 %v2580, %v2656
      %v2699 = vsub.f32 %v2585, %v2659
      %v2700 = vsub.f32 %v2590, %v2662
      %v2701 = vsub.f32 %v2595, %v2665
      %v2702 = vsub.f32 %v2600, %v2668
      %v2703 = vsub.f32 %v2605, %v2671
      %v2704 = vsub.f32 %v2610, %v2674
      %v2705 = vsub.f32 %v2615, %v2677
      %v2706 = vsub.f32 %v2620, %v2680
      %v2707 = vsub.f32 %v2625, %v2683
      %v2708 = vsub.f32 %v2630, %v2686
      %v2709 = vsub.f32 %v2635, %v2689
      %v2710 = vsub.f32 %v2640, %v2692
      %v2711 = vsub.f32 %v2645, %v2695
      %v2712 = vmul.f32 %v2696, 1.442695
      %v2713 = vpow.pop %v2712
      %v2714 = vmul.f32 %v2697, 1.442695
      %v2715 = vpow.pop %v2714
      %v2716 = vmul.f32 %v2698, 1.442695
      %v2717 = vpow.pop %v2716
      %v2718 = vmul.f32 %v2699, 1.442695
      %v2719 = vpow.pop %v2718
      %v2720 = vmul.f32 %v2700, 1.442695
      %v2721 = vpow.pop %v2720
      %v2722 = vmul.f32 %v2701, 1.442695
      %v2723 = vpow.pop %v2722
      %v2724 = vmul.f32 %v2702, 1.442695
      %v2725 = vpow.pop %v2724
      %v2726 = vmul.f32 %v2703, 1.442695
      %v2727 = vpow.pop %v2726
      %v2728 = vmul.f32 %v2704, 1.442695
      %v2729 = vpow.pop %v2728
      %v2730 = vmul.f32 %v2705, 1.442695
      %v2731 = vpow.pop %v2730
      %v2732 = vmul.f32 %v2706, 1.442695
      %v2733 = vpow.pop %v2732
      %v2734 = vmul.f32 %v2707, 1.442695
      %v2735 = vpow.pop %v2734
      %v2736 = vmul.f32 %v2708, 1.442695
      %v2737 = vpow.pop %v2736
      %v2738 = vmul.f32 %v2709, 1.442695
      %v2739 = vpow.pop %v2738
      %v2740 = vmul.f32 %v2710, 1.442695
      %v2741 = vpow.pop %v2740
      %v2742 = vmul.f32 %v2711, 1.442695
      %v2743 = vpow.pop %v2742
      %v2744 = vsel %vm406, %v2713, 0.0
      %2745 = vadd.xlane.f32.xlu0 %v2744
      %v2746 = vpop.xlane.xlu0 %2745
      %v2747 = vsel %vm406, %v2715, 0.0
      %2748 = vadd.xlane.f32.xlu0 %v2747
      %v2749 = vpop.xlane.xlu0 %2748
      %v2750 = vsel %vm406, %v2717, 0.0
      %2751 = vadd.xlane.f32.xlu0 %v2750
      %v2752 = vpop.xlane.xlu0 %2751
      %v2753 = vsel %vm406, %v2719, 0.0
      %2754 = vadd.xlane.f32.xlu0 %v2753
      %v2755 = vpop.xlane.xlu0 %2754
      %v2756 = vsel %vm406, %v2721, 0.0
      %2757 = vadd.xlane.f32.xlu0 %v2756
      %v2758 = vpop.xlane.xlu0 %2757
      %v2759 = vsel %vm406, %v2723, 0.0
      %2760 = vadd.xlane.f32.xlu0 %v2759
      %v2761 = vpop.xlane.xlu0 %2760
      %v2762 = vsel %vm406, %v2725, 0.0
      %2763 = vadd.xlane.f32.xlu0 %v2762
      %v2764 = vpop.xlane.xlu0 %2763
      %v2765 = vsel %vm406, %v2727, 0.0
      %2766 = vadd.xlane.f32.xlu0 %v2765
      %v2767 = vpop.xlane.xlu0 %2766
      %v2768 = vsel %vm406, %v2729, 0.0
      %2769 = vadd.xlane.f32.xlu0 %v2768
      %v2770 = vpop.xlane.xlu0 %2769
      %v2771 = vsel %vm406, %v2731, 0.0
      %2772 = vadd.xlane.f32.xlu0 %v2771
      %v2773 = vpop.xlane.xlu0 %2772
      %v2774 = vsel %vm406, %v2733, 0.0
      %2775 = vadd.xlane.f32.xlu0 %v2774
      %v2776 = vpop.xlane.xlu0 %2775
      %v2777 = vsel %vm406, %v2735, 0.0
      %2778 = vadd.xlane.f32.xlu0 %v2777
      %v2779 = vpop.xlane.xlu0 %2778
      %v2780 = vsel %vm406, %v2737, 0.0
      %2781 = vadd.xlane.f32.xlu0 %v2780
      %v2782 = vpop.xlane.xlu0 %2781
      %v2783 = vsel %vm406, %v2739, 0.0
      %2784 = vadd.xlane.f32.xlu0 %v2783
      %v2785 = vpop.xlane.xlu0 %2784
      %v2786 = vsel %vm406, %v2741, 0.0
      %2787 = vadd.xlane.f32.xlu0 %v2786
      %v2788 = vpop.xlane.xlu0 %2787
      %v2789 = vsel %vm406, %v2743, 0.0
      %2790 = vadd.xlane.f32.xlu0 %v2789
      %v2791 = vpop.xlane.xlu0 %2790
      %v2792 = vrcp.pop %v2746
      %v2793 = vmul.f32 %v2713, %v2792
      %v2794 = vrcp.pop %v2749
      %v2795 = vmul.f32 %v2715, %v2794
      %v2796 = vrcp.pop %v2752
      %v2797 = vmul.f32 %v2717, %v2796
      %v2798 = vrcp.pop %v2755
      %v2799 = vmul.f32 %v2719, %v2798
      %v2800 = vrcp.pop %v2758
      %v2801 = vmul.f32 %v2721, %v2800
      %v2802 = vrcp.pop %v2761
      %v2803 = vmul.f32 %v2723, %v2802
      %v2804 = vrcp.pop %v2764
      %v2805 = vmul.f32 %v2725, %v2804
      %v2806 = vrcp.pop %v2767
      %v2807 = vmul.f32 %v2727, %v2806
      %v2808 = vrcp.pop %v2770
      %v2809 = vmul.f32 %v2729, %v2808
      %v2810 = vrcp.pop %v2773
      %v2811 = vmul.f32 %v2731, %v2810
      %v2812 = vrcp.pop %v2776
      %v2813 = vmul.f32 %v2733, %v2812
      %v2814 = vrcp.pop %v2779
      %v2815 = vmul.f32 %v2735, %v2814
      %v2816 = vrcp.pop %v2782
      %v2817 = vmul.f32 %v2737, %v2816
      %v2818 = vrcp.pop %v2785
      %v2819 = vmul.f32 %v2739, %v2818
      %v2820 = vrcp.pop %v2788
      %v2821 = vmul.f32 %v2741, %v2820
      %v2822 = vrcp.pop %v2791
      %v2823 = vmul.f32 %v2743, %v2822
      %2832 = vrot.lane.b32.xlu0 %v1565, 96
      %v2833 = vpop.permute.xlu0 %2832
      %2834 = vrot.lane.b32.xlu0 %v1570, 96
      %v2835 = vpop.permute.xlu0 %2834
      %2836 = vrot.lane.b32.xlu0 %v1575, 96
      %v2837 = vpop.permute.xlu0 %2836
      %2838 = vrot.lane.b32.xlu0 %v1580, 96
      %v2839 = vpop.permute.xlu0 %2838
      %2840 = vrot.lane.b32.xlu0 %v1585, 96
      %v2841 = vpop.permute.xlu0 %2840
      %2842 = vrot.lane.b32.xlu0 %v1590, 96
      %v2843 = vpop.permute.xlu0 %2842
      %2844 = vrot.lane.b32.xlu0 %v1595, 96
      %v2845 = vpop.permute.xlu0 %2844
      %2846 = vrot.lane.b32.xlu0 %v1600, 96
      %v2847 = vpop.permute.xlu0 %2846
      %v2857 = vsel %vm406, %v2793, 0
      %v2860 = vsel %vm406, %v2795, 0
      %v2863 = vsel %vm406, %v2797, 0
      %v2866 = vsel %vm406, %v2799, 0
      %v2869 = vsel %vm406, %v2801, 0
      %v2872 = vsel %vm406, %v2803, 0
      %v2875 = vsel %vm406, %v2805, 0
      %v2878 = vsel %vm406, %v2807, 0
      %v2881 = vsel %vm406, %v2809, 0
      %v2884 = vsel %vm406, %v2811, 0
      %v2887 = vsel %vm406, %v2813, 0
      %v2890 = vsel %vm406, %v2815, 0
      %v2893 = vsel %vm406, %v2817, 0
      %v2896 = vsel %vm406, %v2819, 0
      %v2899 = vsel %vm406, %v2821, 0
      %v2902 = vsel %vm406, %v2823, 0
      %2904 = vmatprep.subr.mxu0 0.0
      %2905 = vmatpush1.msra.mxu0 %v2833
      %2906 = vmatprep.subr.mxu0 0.0
      %2907 = vmatpush1.msra.mxu0 %v2835
      %2908 = vmatprep.subr.mxu0 0.0
      %2909 = vmatpush1.msra.mxu0 %v2837
      %2910 = vmatprep.subr.mxu0 0.0
      %2911 = vmatpush1.msra.mxu0 %v2839
      %2912 = vmatprep.subr.mxu0 0.0
      %2913 = vmatpush1.msra.mxu0 %v2841
      %2914 = vmatprep.subr.mxu0 0.0
      %2915 = vmatpush1.msra.mxu0 %v2843
      %2916 = vmatprep.subr.mxu0 0.0
      %2917 = vmatpush1.msra.mxu0 %v2845
      %2918 = vmatprep.subr.mxu0 0.0
      %2919 = vmatpush1.msra.mxu0 %v2847
      %2920 = vmatprep.subr.mxu0 0.0
      %2921 = vmatpush1.msra.mxu0 0.0
      %2922 = vmatprep.subr.mxu0 0.0
      %2923 = vmatpush1.msra.mxu0 0.0
      %2924 = vmatprep.subr.mxu0 0.0
      %2925 = vmatpush1.msra.mxu0 0.0
      %2926 = vmatprep.subr.mxu0 0.0
      %2927 = vmatpush1.msra.mxu0 0.0
      %2928 = vmatprep.subr.mxu0 0.0
      %2929 = vmatpush1.msra.mxu0 0.0
      %2930 = vmatprep.subr.mxu0 0.0
      %2931 = vmatpush1.msra.mxu0 0.0
      %2932 = vmatprep.subr.mxu0 0.0
      %2933 = vmatpush1.msra.mxu0 0.0
      %2934 = vmatprep.subr.mxu0 0.0
      %2935 = vmatpush1.msra.mxu0 0.0
      %2936 = vmatprep.subr.mxu0 0.0
      %2937 = vmatpush1.msra.mxu0 0.0
      %2938 = vmatprep.subr.mxu0 0.0
      %2939 = vmatpush1.msra.mxu0 0.0
      %2940 = vmatprep.subr.mxu0 0.0
      %2941 = vmatpush1.msra.mxu0 0.0
      %2942 = vmatprep.subr.mxu0 0.0
      %2943 = vmatpush1.msra.mxu0 0.0
      %2944 = vmatprep.subr.mxu0 0.0
      %2945 = vmatpush1.msra.mxu0 0.0
      %2946 = vmatprep.subr.mxu0 0.0
      %2947 = vmatpush1.msra.mxu0 0.0
      %2948 = vmatprep.subr.mxu0 0.0
      %2949 = vmatpush1.msra.mxu0 0.0
      %2950 = vmatprep.subr.mxu0 0.0
      %2951 = vmatpush1.msra.mxu0 0.0
      %2952 = vmatprep.subr.mxu0 0.0
      %2953 = vmatpush1.msra.mxu0 0.0
      %2954 = vmatprep.subr.mxu0 0.0
      %2955 = vmatpush1.msra.mxu0 0.0
      %2956 = vmatprep.subr.mxu0 0.0
      %2957 = vmatpush1.msra.mxu0 0.0
      %2958 = vmatprep.subr.mxu0 0.0
      %2959 = vmatpush1.msra.mxu0 0.0
      %2960 = vmatprep.subr.mxu0 0.0
      %2961 = vmatpush1.msra.mxu0 0.0
      %2962 = vmatprep.subr.mxu0 0.0
      %2963 = vmatpush1.msra.mxu0 0.0
      %2964 = vmatprep.subr.mxu0 0.0
      %2965 = vmatpush1.msra.mxu0 0.0
      %2966 = vmatprep.subr.mxu0 0.0
      %2967 = vmatpush1.msra.mxu0 0.0
      %2968 = vmatprep.mubr.f32.mxu0 0.0
      %2969 = vmatmul.mubr.f32.gmra.mrb[0].mxu0 %v2857
      %v2970 = vpop.f32.mrb[0].mxu0
      %v2971 = vadd.f32 0.0, %v2970
      %v2972 = vpop.f32.mrb[0].mxu0
      %2973 = vmatprep.mubr.f32.mxu0 0.0
      %2974 = vmatmul.mubr.f32.gmra.mrb[0].mxu0 %v2860
      %v2975 = vpop.f32.mrb[0].mxu0
      %v2976 = vadd.f32 0.0, %v2975
      %v2977 = vpop.f32.mrb[0].mxu0
      %2978 = vmatprep.mubr.f32.mxu0 0.0
      %2979 = vmatmul.mubr.f32.gmra.mrb[0].mxu0 %v2863
      %v2980 = vpop.f32.mrb[0].mxu0
      %v2981 = vadd.f32 0.0, %v2980
      %v2982 = vpop.f32.mrb[0].mxu0
      %2983 = vmatprep.mubr.f32.mxu0 0.0
      %2984 = vmatmul.mubr.f32.gmra.mrb[0].mxu0 %v2866
      %v2985 = vpop.f32.mrb[0].mxu0
      %v2986 = vadd.f32 0.0, %v2985
      %v2987 = vpop.f32.mrb[0].mxu0
      %2988 = vmatprep.mubr.f32.mxu0 0.0
      %2989 = vmatmul.mubr.f32.gmra.mrb[0].mxu0 %v2869
      %v2990 = vpop.f32.mrb[0].mxu0
      %v2991 = vadd.f32 0.0, %v2990
      %v2992 = vpop.f32.mrb[0].mxu0
      %2993 = vmatprep.mubr.f32.mxu0 0.0
      %2994 = vmatmul.mubr.f32.gmra.mrb[0].mxu0 %v2872
      %v2995 = vpop.f32.mrb[0].mxu0
      %v2996 = vadd.f32 0.0, %v2995
      %v2997 = vpop.f32.mrb[0].mxu0
      %2998 = vmatprep.mubr.f32.mxu0 0.0
      %2999 = vmatmul.mubr.f32.gmra.mrb[0].mxu0 %v2875
      %v3000 = vpop.f32.mrb[0].mxu0
      %v3001 = vadd.f32 0.0, %v3000
      %v3002 = vpop.f32.mrb[0].mxu0
      %3003 = vmatprep.mubr.f32.mxu0 0.0
      %3004 = vmatmul.mubr.f32.gmra.mrb[0].mxu0 %v2878
      %v3005 = vpop.f32.mrb[0].mxu0
      %v3006 = vadd.f32 0.0, %v3005
      %v3007 = vpop.f32.mrb[0].mxu0
      %3008 = vmatprep.mubr.f32.mxu0 0.0
      %3009 = vmatmul.mubr.f32.gmra.mrb[0].mxu0 %v2881
      %v3010 = vpop.f32.mrb[0].mxu0
      %v3011 = vadd.f32 0.0, %v3010
      %v3012 = vpop.f32.mrb[0].mxu0
      %3013 = vmatprep.mubr.f32.mxu0 0.0
      %3014 = vmatmul.mubr.f32.gmra.mrb[0].mxu0 %v2884
      %v3015 = vpop.f32.mrb[0].mxu0
      %v3016 = vadd.f32 0.0, %v3015
      %v3017 = vpop.f32.mrb[0].mxu0
      %3018 = vmatprep.mubr.f32.mxu0 0.0
      %3019 = vmatmul.mubr.f32.gmra.mrb[0].mxu0 %v2887
      %v3020 = vpop.f32.mrb[0].mxu0
      %v3021 = vadd.f32 0.0, %v3020
      %v3022 = vpop.f32.mrb[0].mxu0
      %3023 = vmatprep.mubr.f32.mxu0 0.0
      %3024 = vmatmul.mubr.f32.gmra.mrb[0].mxu0 %v2890
      %v3025 = vpop.f32.mrb[0].mxu0
      %v3026 = vadd.f32 0.0, %v3025
      %v3027 = vpop.f32.mrb[0].mxu0
      %3028 = vmatprep.mubr.f32.mxu0 0.0
      %3029 = vmatmul.mubr.f32.gmra.mrb[0].mxu0 %v2893
      %v3030 = vpop.f32.mrb[0].mxu0
      %v3031 = vadd.f32 0.0, %v3030
      %v3032 = vpop.f32.mrb[0].mxu0
      %3033 = vmatprep.mubr.f32.mxu0 0.0
      %3034 = vmatmul.mubr.f32.gmra.mrb[0].mxu0 %v2896
      %v3035 = vpop.f32.mrb[0].mxu0
      %v3036 = vadd.f32 0.0, %v3035
      %v3037 = vpop.f32.mrb[0].mxu0
      %3038 = vmatprep.mubr.f32.mxu0 0.0
      %3039 = vmatmul.mubr.f32.gmra.mrb[0].mxu0 %v2899
      %v3040 = vpop.f32.mrb[0].mxu0
      %v3041 = vadd.f32 0.0, %v3040
      %v3042 = vpop.f32.mrb[0].mxu0
      %3043 = vmatprep.mubr.f32.mxu0 0.0
      %3044 = vmatmul.mubr.f32.gmra.mrb[0].mxu0 %v2902
      %v3045 = vpop.f32.mrb[0].mxu0
      %v3046 = vadd.f32 0.0, %v3045
      %v3047 = vpop.f32.mrb[0].mxu0
      %3048 = vdwg.mxu0
      %v3049 = vld [vmem:[%s7 + $0x20] sm:$0xff]
      %v3050 = vld [vmem:[%s7 + $0x28] sm:$0xff]
      %v3051 = vld [vmem:[%s7 + $0x30] sm:$0xff]
      %v3052 = vld [vmem:[%s7 + $0x38] sm:$0xff]
      %v3054 = vsel %vm1603, %v2971, 0
      %v3057 = vsel %vm1603, %v2976, 0
      %v3060 = vsel %vm1603, %v2981, 0
      %v3063 = vsel %vm1603, %v2986, 0
      %v3066 = vsel %vm1603, %v2991, 0
      %v3069 = vsel %vm1603, %v2996, 0
      %v3072 = vsel %vm1603, %v3001, 0
      %v3075 = vsel %vm1603, %v3006, 0
      %v3078 = vsel %vm1603, %v3011, 0
      %v3081 = vsel %vm1603, %v3016, 0
      %v3084 = vsel %vm1603, %v3021, 0
      %v3087 = vsel %vm1603, %v3026, 0
      %v3090 = vsel %vm1603, %v3031, 0
      %v3093 = vsel %vm1603, %v3036, 0
      %v3096 = vsel %vm1603, %v3041, 0
      %v3099 = vsel %vm1603, %v3046, 0
      %3101 = vmatprep.subr.mxu0 0.0
      %3102 = vmatpush1.msra.mxu0 %v3049
      %3103 = vmatprep.subr.mxu0 0.0
      %3104 = vmatpush1.msra.mxu0 %v3050
      %3105 = vmatprep.subr.mxu0 0.0
      %3106 = vmatpush1.msra.mxu0 %v3051
      %3107 = vmatprep.subr.mxu0 0.0
      %3108 = vmatpush1.msra.mxu0 %v3052
      %3109 = vmatprep.subr.mxu0 0.0
      %3110 = vmatpush1.msra.mxu0 0.0
      %3111 = vmatprep.subr.mxu0 0.0
      %3112 = vmatpush1.msra.mxu0 0.0
      %3113 = vmatprep.subr.mxu0 0.0
      %3114 = vmatpush1.msra.mxu0 0.0
      %3115 = vmatprep.subr.mxu0 0.0
      %3116 = vmatpush1.msra.mxu0 0.0
      %3117 = vmatprep.subr.mxu0 0.0
      %3118 = vmatpush1.msra.mxu0 0.0
      %3119 = vmatprep.subr.mxu0 0.0
      %3120 = vmatpush1.msra.mxu0 0.0
      %3121 = vmatprep.subr.mxu0 0.0
      %3122 = vmatpush1.msra.mxu0 0.0
      %3123 = vmatprep.subr.mxu0 0.0
      %3124 = vmatpush1.msra.mxu0 0.0
      %3125 = vmatprep.subr.mxu0 0.0
      %3126 = vmatpush1.msra.mxu0 0.0
      %3127 = vmatprep.subr.mxu0 0.0
      %3128 = vmatpush1.msra.mxu0 0.0
      %3129 = vmatprep.subr.mxu0 0.0
      %3130 = vmatpush1.msra.mxu0 0.0
      %3131 = vmatprep.subr.mxu0 0.0
      %3132 = vmatpush1.msra.mxu0 0.0
      %3133 = vmatprep.subr.mxu0 0.0
      %3134 = vmatpush1.msra.mxu0 0.0
      %3135 = vmatprep.subr.mxu0 0.0
      %3136 = vmatpush1.msra.mxu0 0.0
      %3137 = vmatprep.subr.mxu0 0.0
      %3138 = vmatpush1.msra.mxu0 0.0
      %3139 = vmatprep.subr.mxu0 0.0
      %3140 = vmatpush1.msra.mxu0 0.0
      %3141 = vmatprep.subr.mxu0 0.0
      %3142 = vmatpush1.msra.mxu0 0.0
      %3143 = vmatprep.subr.mxu0 0.0
      %3144 = vmatpush1.msra.mxu0 0.0
      %3145 = vmatprep.subr.mxu0 0.0
      %3146 = vmatpush1.msra.mxu0 0.0
      %3147 = vmatprep.subr.mxu0 0.0
      %3148 = vmatpush1.msra.mxu0 0.0
      %3149 = vmatprep.subr.mxu0 0.0
      %3150 = vmatpush1.msra.mxu0 0.0
      %3151 = vmatprep.subr.mxu0 0.0
      %3152 = vmatpush1.msra.mxu0 0.0
      %3153 = vmatprep.subr.mxu0 0.0
      %3154 = vmatpush1.msra.mxu0 0.0
      %3155 = vmatprep.subr.mxu0 0.0
      %3156 = vmatpush1.msra.mxu0 0.0
      %3157 = vmatprep.subr.mxu0 0.0
      %3158 = vmatpush1.msra.mxu0 0.0
      %3159 = vmatprep.subr.mxu0 0.0
      %3160 = vmatpush1.msra.mxu0 0.0
      %3161 = vmatprep.subr.mxu0 0.0
      %3162 = vmatpush1.msra.mxu0 0.0
      %3163 = vmatprep.subr.mxu0 0.0
      %3164 = vmatpush1.msra.mxu0 0.0
      %3165 = vmatprep.mubr.f32.mxu0 0.0
      %3166 = vmatmul.mubr.f32.gmra.mrb[0].mxu0 %v3054
      %v3167 = vpop.f32.mrb[0].mxu0
      %v3168 = vadd.f32 0.0, %v3167
      %v3169 = vpop.f32.mrb[0].mxu0
      %3170 = vmatprep.mubr.f32.mxu0 0.0
      %3171 = vmatmul.mubr.f32.gmra.mrb[0].mxu0 %v3057
      %v3172 = vpop.f32.mrb[0].mxu0
      %v3173 = vadd.f32 0.0, %v3172
      %v3174 = vpop.f32.mrb[0].mxu0
      %3175 = vmatprep.mubr.f32.mxu0 0.0
      %3176 = vmatmul.mubr.f32.gmra.mrb[0].mxu0 %v3060
      %v3177 = vpop.f32.mrb[0].mxu0
      %v3178 = vadd.f32 0.0, %v3177
      %v3179 = vpop.f32.mrb[0].mxu0
      %3180 = vmatprep.mubr.f32.mxu0 0.0
      %3181 = vmatmul.mubr.f32.gmra.mrb[0].mxu0 %v3063
      %v3182 = vpop.f32.mrb[0].mxu0
      %v3183 = vadd.f32 0.0, %v3182
      %v3184 = vpop.f32.mrb[0].mxu0
      %3185 = vmatprep.mubr.f32.mxu0 0.0
      %3186 = vmatmul.mubr.f32.gmra.mrb[0].mxu0 %v3066
      %v3187 = vpop.f32.mrb[0].mxu0
      %v3188 = vadd.f32 0.0, %v3187
      %v3189 = vpop.f32.mrb[0].mxu0
      %3190 = vmatprep.mubr.f32.mxu0 0.0
      %3191 = vmatmul.mubr.f32.gmra.mrb[0].mxu0 %v3069
      %v3192 = vpop.f32.mrb[0].mxu0
      %v3193 = vadd.f32 0.0, %v3192
      %v3194 = vpop.f32.mrb[0].mxu0
      %3195 = vmatprep.mubr.f32.mxu0 0.0
      %3196 = vmatmul.mubr.f32.gmra.mrb[0].mxu0 %v3072
      %v3197 = vpop.f32.mrb[0].mxu0
      %v3198 = vadd.f32 0.0, %v3197
      %v3199 = vpop.f32.mrb[0].mxu0
      %3200 = vmatprep.mubr.f32.mxu0 0.0
      %3201 = vmatmul.mubr.f32.gmra.mrb[0].mxu0 %v3075
      %v3202 = vpop.f32.mrb[0].mxu0
      %v3203 = vadd.f32 0.0, %v3202
      %v3204 = vpop.f32.mrb[0].mxu0
      %3205 = vmatprep.mubr.f32.mxu0 0.0
      %3206 = vmatmul.mubr.f32.gmra.mrb[0].mxu0 %v3078
      %v3207 = vpop.f32.mrb[0].mxu0
      %v3208 = vadd.f32 0.0, %v3207
      %v3209 = vpop.f32.mrb[0].mxu0
      %3210 = vmatprep.mubr.f32.mxu0 0.0
      %3211 = vmatmul.mubr.f32.gmra.mrb[0].mxu0 %v3081
      %v3212 = vpop.f32.mrb[0].mxu0
      %v3213 = vadd.f32 0.0, %v3212
      %v3214 = vpop.f32.mrb[0].mxu0
      %3215 = vmatprep.mubr.f32.mxu0 0.0
      %3216 = vmatmul.mubr.f32.gmra.mrb[0].mxu0 %v3084
      %v3217 = vpop.f32.mrb[0].mxu0
      %v3218 = vadd.f32 0.0, %v3217
      %v3219 = vpop.f32.mrb[0].mxu0
      %3220 = vmatprep.mubr.f32.mxu0 0.0
      %3221 = vmatmul.mubr.f32.gmra.mrb[0].mxu0 %v3087
      %v3222 = vpop.f32.mrb[0].mxu0
      %v3223 = vadd.f32 0.0, %v3222
      %v3224 = vpop.f32.mrb[0].mxu0
      %3225 = vmatprep.mubr.f32.mxu0 0.0
      %3226 = vmatmul.mubr.f32.gmra.mrb[0].mxu0 %v3090
      %v3227 = vpop.f32.mrb[0].mxu0
      %v3228 = vadd.f32 0.0, %v3227
      %v3229 = vpop.f32.mrb[0].mxu0
      %3230 = vmatprep.mubr.f32.mxu0 0.0
      %3231 = vmatmul.mubr.f32.gmra.mrb[0].mxu0 %v3093
      %v3232 = vpop.f32.mrb[0].mxu0
      %v3233 = vadd.f32 0.0, %v3232
      %v3234 = vpop.f32.mrb[0].mxu0
      %3235 = vmatprep.mubr.f32.mxu0 0.0
      %3236 = vmatmul.mubr.f32.gmra.mrb[0].mxu0 %v3096
      %v3237 = vpop.f32.mrb[0].mxu0
      %v3238 = vadd.f32 0.0, %v3237
      %v3239 = vpop.f32.mrb[0].mxu0
      %3240 = vmatprep.mubr.f32.mxu0 0.0
      %3241 = vmatmul.mubr.f32.gmra.mrb[0].mxu0 %v3099
      %v3242 = vpop.f32.mrb[0].mxu0
      %v3243 = vadd.f32 0.0, %v3242
      %v3244 = vpop.f32.mrb[0].mxu0
      %3245 = vdwg.mxu0
      %v3246 = vadd.f32 %v2391, %v3168
      %v3247 = vadd.f32 %v2392, %v3173
      %v3248 = vadd.f32 %v2393, %v3178
      %v3249 = vadd.f32 %v2394, %v3183
      %v3250 = vadd.f32 %v2395, %v3188
      %v3251 = vadd.f32 %v2396, %v3193
      %v3252 = vadd.f32 %v2397, %v3198
      %v3253 = vadd.f32 %v2398, %v3203
      %v3254 = vadd.f32 %v2399, %v3208
      %v3255 = vadd.f32 %v2400, %v3213
      %v3256 = vadd.f32 %v2401, %v3218
      %v3257 = vadd.f32 %v2402, %v3223
      %v3258 = vadd.f32 %v2403, %v3228
      %v3259 = vadd.f32 %v2404, %v3233
      %v3260 = vadd.f32 %v2405, %v3238
      %v3261 = vadd.f32 %v2406, %v3243
      %v3262 = vadd.f32 %v3246, %v1136
      %v3263 = vadd.f32 %v3247, %v1137
      %v3264 = vadd.f32 %v3248, %v1138
      %v3265 = vadd.f32 %v3249, %v1139
      %v3266 = vadd.f32 %v3250, %v1140
      %v3267 = vadd.f32 %v3251, %v1141
      %v3268 = vadd.f32 %v3252, %v1142
      %v3269 = vadd.f32 %v3253, %v1143
      %v3270 = vadd.f32 %v3254, %v1144
      %v3271 = vadd.f32 %v3255, %v1145
      %v3272 = vadd.f32 %v3256, %v1146
      %v3273 = vadd.f32 %v3257, %v1147
      %v3274 = vadd.f32 %v3258, %v1148
      %v3275 = vadd.f32 %v3259, %v1149
      %v3276 = vadd.f32 %v3260, %v1150
      %v3277 = vadd.f32 %v3261, %v1151
      %v3278 = vsel %vm406, %v3262, 0.0
      %3279 = vadd.xlane.f32.xlu0 %v3278
      %v3280 = vpop.xlane.xlu0 %3279
      %v3281 = vsel %vm406, %v3263, 0.0
      %3282 = vadd.xlane.f32.xlu0 %v3281
      %v3283 = vpop.xlane.xlu0 %3282
      %v3284 = vsel %vm406, %v3264, 0.0
      %3285 = vadd.xlane.f32.xlu0 %v3284
      %v3286 = vpop.xlane.xlu0 %3285
      %v3287 = vsel %vm406, %v3265, 0.0
      %3288 = vadd.xlane.f32.xlu0 %v3287
      %v3289 = vpop.xlane.xlu0 %3288
      %v3290 = vsel %vm406, %v3266, 0.0
      %3291 = vadd.xlane.f32.xlu0 %v3290
      %v3292 = vpop.xlane.xlu0 %3291
      %v3293 = vsel %vm406, %v3267, 0.0
      %3294 = vadd.xlane.f32.xlu0 %v3293
      %v3295 = vpop.xlane.xlu0 %3294
      %v3296 = vsel %vm406, %v3268, 0.0
      %3297 = vadd.xlane.f32.xlu0 %v3296
      %v3298 = vpop.xlane.xlu0 %3297
      %v3299 = vsel %vm406, %v3269, 0.0
      %3300 = vadd.xlane.f32.xlu0 %v3299
      %v3301 = vpop.xlane.xlu0 %3300
      %v3302 = vsel %vm406, %v3270, 0.0
      %3303 = vadd.xlane.f32.xlu0 %v3302
      %v3304 = vpop.xlane.xlu0 %3303
      %v3305 = vsel %vm406, %v3271, 0.0
      %3306 = vadd.xlane.f32.xlu0 %v3305
      %v3307 = vpop.xlane.xlu0 %3306
      %v3308 = vsel %vm406, %v3272, 0.0
      %3309 = vadd.xlane.f32.xlu0 %v3308
      %v3310 = vpop.xlane.xlu0 %3309
      %v3311 = vsel %vm406, %v3273, 0.0
      %3312 = vadd.xlane.f32.xlu0 %v3311
      %v3313 = vpop.xlane.xlu0 %3312
      %v3314 = vsel %vm406, %v3274, 0.0
      %3315 = vadd.xlane.f32.xlu0 %v3314
      %v3316 = vpop.xlane.xlu0 %3315
      %v3317 = vsel %vm406, %v3275, 0.0
      %3318 = vadd.xlane.f32.xlu0 %v3317
      %v3319 = vpop.xlane.xlu0 %3318
      %v3320 = vsel %vm406, %v3276, 0.0
      %3321 = vadd.xlane.f32.xlu0 %v3320
      %v3322 = vpop.xlane.xlu0 %3321
      %v3323 = vsel %vm406, %v3277, 0.0
      %3324 = vadd.xlane.f32.xlu0 %v3323
      %v3325 = vpop.xlane.xlu0 %3324
      %v3326 = vmul.f32 %v3280, %v455
      %v3327 = vmul.f32 %v3283, %v455
      %v3328 = vmul.f32 %v3286, %v455
      %v3329 = vmul.f32 %v3289, %v455
      %v3330 = vmul.f32 %v3292, %v455
      %v3331 = vmul.f32 %v3295, %v455
      %v3332 = vmul.f32 %v3298, %v455
      %v3333 = vmul.f32 %v3301, %v455
      %v3334 = vmul.f32 %v3304, %v455
      %v3335 = vmul.f32 %v3307, %v455
      %v3336 = vmul.f32 %v3310, %v455
      %v3337 = vmul.f32 %v3313, %v455
      %v3338 = vmul.f32 %v3316, %v455
      %v3339 = vmul.f32 %v3319, %v455
      %v3340 = vmul.f32 %v3322, %v455
      %v3341 = vmul.f32 %v3325, %v455
      %v3342 = vsub.f32 %v3262, %v3326
      %v3343 = vsub.f32 %v3263, %v3327
      %v3344 = vsub.f32 %v3264, %v3328
      %v3345 = vsub.f32 %v3265, %v3329
      %v3346 = vsub.f32 %v3266, %v3330
      %v3347 = vsub.f32 %v3267, %v3331
      %v3348 = vsub.f32 %v3268, %v3332
      %v3349 = vsub.f32 %v3269, %v3333
      %v3350 = vsub.f32 %v3270, %v3334
      %v3351 = vsub.f32 %v3271, %v3335
      %v3352 = vsub.f32 %v3272, %v3336
      %v3353 = vsub.f32 %v3273, %v3337
      %v3354 = vsub.f32 %v3274, %v3338
      %v3355 = vsub.f32 %v3275, %v3339
      %v3356 = vsub.f32 %v3276, %v3340
      %v3357 = vsub.f32 %v3277, %v3341
      %v3358 = vmul.f32 %v3342, %v3342
      %v3359 = vmul.f32 %v3343, %v3343
      %v3360 = vmul.f32 %v3344, %v3344
      %v3361 = vmul.f32 %v3345, %v3345
      %v3362 = vmul.f32 %v3346, %v3346
      %v3363 = vmul.f32 %v3347, %v3347
      %v3364 = vmul.f32 %v3348, %v3348
      %v3365 = vmul.f32 %v3349, %v3349
      %v3366 = vmul.f32 %v3350, %v3350
      %v3367 = vmul.f32 %v3351, %v3351
      %v3368 = vmul.f32 %v3352, %v3352
      %v3369 = vmul.f32 %v3353, %v3353
      %v3370 = vmul.f32 %v3354, %v3354
      %v3371 = vmul.f32 %v3355, %v3355
      %v3372 = vmul.f32 %v3356, %v3356
      %v3373 = vmul.f32 %v3357, %v3357
      %v3374 = vsel %vm406, %v3358, 0.0
      %3375 = vadd.xlane.f32.xlu0 %v3374
      %v3376 = vpop.xlane.xlu0 %3375
      %v3377 = vsel %vm406, %v3359, 0.0
      %3378 = vadd.xlane.f32.xlu0 %v3377
      %v3379 = vpop.xlane.xlu0 %3378
      %v3380 = vsel %vm406, %v3360, 0.0
      %3381 = vadd.xlane.f32.xlu0 %v3380
      %v3382 = vpop.xlane.xlu0 %3381
      %v3383 = vsel %vm406, %v3361, 0.0
      %3384 = vadd.xlane.f32.xlu0 %v3383
      %v3385 = vpop.xlane.xlu0 %3384
      %v3386 = vsel %vm406, %v3362, 0.0
      %3387 = vadd.xlane.f32.xlu0 %v3386
      %v3388 = vpop.xlane.xlu0 %3387
      %v3389 = vsel %vm406, %v3363, 0.0
      %3390 = vadd.xlane.f32.xlu0 %v3389
      %v3391 = vpop.xlane.xlu0 %3390
      %v3392 = vsel %vm406, %v3364, 0.0
      %3393 = vadd.xlane.f32.xlu0 %v3392
      %v3394 = vpop.xlane.xlu0 %3393
      %v3395 = vsel %vm406, %v3365, 0.0
      %3396 = vadd.xlane.f32.xlu0 %v3395
      %v3397 = vpop.xlane.xlu0 %3396
      %v3398 = vsel %vm406, %v3366, 0.0
      %3399 = vadd.xlane.f32.xlu0 %v3398
      %v3400 = vpop.xlane.xlu0 %3399
      %v3401 = vsel %vm406, %v3367, 0.0
      %3402 = vadd.xlane.f32.xlu0 %v3401
      %v3403 = vpop.xlane.xlu0 %3402
      %v3404 = vsel %vm406, %v3368, 0.0
      %3405 = vadd.xlane.f32.xlu0 %v3404
      %v3406 = vpop.xlane.xlu0 %3405
      %v3407 = vsel %vm406, %v3369, 0.0
      %3408 = vadd.xlane.f32.xlu0 %v3407
      %v3409 = vpop.xlane.xlu0 %3408
      %v3410 = vsel %vm406, %v3370, 0.0
      %3411 = vadd.xlane.f32.xlu0 %v3410
      %v3412 = vpop.xlane.xlu0 %3411
      %v3413 = vsel %vm406, %v3371, 0.0
      %3414 = vadd.xlane.f32.xlu0 %v3413
      %v3415 = vpop.xlane.xlu0 %3414
      %v3416 = vsel %vm406, %v3372, 0.0
      %3417 = vadd.xlane.f32.xlu0 %v3416
      %v3418 = vpop.xlane.xlu0 %3417
      %v3419 = vsel %vm406, %v3373, 0.0
      %3420 = vadd.xlane.f32.xlu0 %v3419
      %v3421 = vpop.xlane.xlu0 %3420
      %v3422 = vmul.f32 %v3376, %v455
      %v3423 = vmul.f32 %v3379, %v455
      %v3424 = vmul.f32 %v3382, %v455
      %v3425 = vmul.f32 %v3385, %v455
      %v3426 = vmul.f32 %v3388, %v455
      %v3427 = vmul.f32 %v3391, %v455
      %v3428 = vmul.f32 %v3394, %v455
      %v3429 = vmul.f32 %v3397, %v455
      %v3430 = vmul.f32 %v3400, %v455
      %v3431 = vmul.f32 %v3403, %v455
      %v3432 = vmul.f32 %v3406, %v455
      %v3433 = vmul.f32 %v3409, %v455
      %v3434 = vmul.f32 %v3412, %v455
      %v3435 = vmul.f32 %v3415, %v455
      %v3436 = vmul.f32 %v3418, %v455
      %v3437 = vmul.f32 %v3421, %v455
      %v3438 = vadd.f32 %v3422, 1e-05
      %v3439 = vadd.f32 %v3423, 1e-05
      %v3440 = vadd.f32 %v3424, 1e-05
      %v3441 = vadd.f32 %v3425, 1e-05
      %v3442 = vadd.f32 %v3426, 1e-05
      %v3443 = vadd.f32 %v3427, 1e-05
      %v3444 = vadd.f32 %v3428, 1e-05
      %v3445 = vadd.f32 %v3429, 1e-05
      %v3446 = vadd.f32 %v3430, 1e-05
      %v3447 = vadd.f32 %v3431, 1e-05
      %v3448 = vadd.f32 %v3432, 1e-05
      %v3449 = vadd.f32 %v3433, 1e-05
      %v3450 = vadd.f32 %v3434, 1e-05
      %v3451 = vadd.f32 %v3435, 1e-05
      %v3452 = vadd.f32 %v3436, 1e-05
      %v3453 = vadd.f32 %v3437, 1e-05
      %v3454 = vrsqrt.pop %v3438
      %v3455 = vrsqrt.pop %v3439
      %v3456 = vrsqrt.pop %v3440
      %v3457 = vrsqrt.pop %v3441
      %v3458 = vrsqrt.pop %v3442
      %v3459 = vrsqrt.pop %v3443
      %v3460 = vrsqrt.pop %v3444
      %v3461 = vrsqrt.pop %v3445
      %v3462 = vrsqrt.pop %v3446
      %v3463 = vrsqrt.pop %v3447
      %v3464 = vrsqrt.pop %v3448
      %v3465 = vrsqrt.pop %v3449
      %v3466 = vrsqrt.pop %v3450
      %v3467 = vrsqrt.pop %v3451
      %v3468 = vrsqrt.pop %v3452
      %v3469 = vrsqrt.pop %v3453
      %v3470 = vmul.f32 %v3342, %v3454
      %v3471 = vmul.f32 %v3343, %v3455
      %v3472 = vmul.f32 %v3344, %v3456
      %v3473 = vmul.f32 %v3345, %v3457
      %v3474 = vmul.f32 %v3346, %v3458
      %v3475 = vmul.f32 %v3347, %v3459
      %v3476 = vmul.f32 %v3348, %v3460
      %v3477 = vmul.f32 %v3349, %v3461
      %v3478 = vmul.f32 %v3350, %v3462
      %v3479 = vmul.f32 %v3351, %v3463
      %v3480 = vmul.f32 %v3352, %v3464
      %v3481 = vmul.f32 %v3353, %v3465
      %v3482 = vmul.f32 %v3354, %v3466
      %v3483 = vmul.f32 %v3355, %v3467
      %v3484 = vmul.f32 %v3356, %v3468
      %v3485 = vmul.f32 %v3357, %v3469
      %v3486 = vlaneseq
      %v3487 = vshrl.u32 %v3486, 7
      %v3488 = vsub.s32 6, %v3487
      %v3489 = vrot.slane %v404, %v3488
      %v3490 = vmul.f32 %v3470, %v3489
      %v3491 = vmul.f32 %v3471, %v3489
      %v3492 = vmul.f32 %v3472, %v3489
      %v3493 = vmul.f32 %v3473, %v3489
      %v3494 = vmul.f32 %v3474, %v3489
      %v3495 = vmul.f32 %v3475, %v3489
      %v3496 = vmul.f32 %v3476, %v3489
      %v3497 = vmul.f32 %v3477, %v3489
      %v3498 = vmul.f32 %v3478, %v3489
      %v3499 = vmul.f32 %v3479, %v3489
      %v3500 = vmul.f32 %v3480, %v3489
      %v3501 = vmul.f32 %v3481, %v3489
      %v3502 = vmul.f32 %v3482, %v3489
      %v3503 = vmul.f32 %v3483, %v3489
      %v3504 = vmul.f32 %v3484, %v3489
      %v3505 = vmul.f32 %v3485, %v3489
      %v3506 = vlaneseq
      %v3507 = vshrl.u32 %v3506, 7
      %v3508 = vsub.s32 7, %v3507
      %v3509 = vrot.slane %v404, %v3508
      %v3510 = vadd.f32 %v3490, %v3509
      %v3511 = vadd.f32 %v3491, %v3509
      %v3512 = vadd.f32 %v3492, %v3509
      %v3513 = vadd.f32 %v3493, %v3509
      %v3514 = vadd.f32 %v3494, %v3509
      %v3515 = vadd.f32 %v3495, %v3509
      %v3516 = vadd.f32 %v3496, %v3509
      %v3517 = vadd.f32 %v3497, %v3509
      %v3518 = vadd.f32 %v3498, %v3509
      %v3519 = vadd.f32 %v3499, %v3509
      %v3520 = vadd.f32 %v3500, %v3509
      %v3521 = vadd.f32 %v3501, %v3509
      %v3522 = vadd.f32 %v3502, %v3509
      %v3523 = vadd.f32 %v3503, %v3509
      %v3524 = vadd.f32 %v3504, %v3509
      %v3525 = vadd.f32 %v3505, %v3509
      %v3526 = vld [vmem:[%s8] sm:$0xff]
      %v3527 = vld [vmem:[%s8 + $0x8] sm:$0xff]
      %v3528 = vld [vmem:[%s8 + $0x40] sm:$0xff]
      %v3529 = vld [vmem:[%s8 + $0x48] sm:$0xff]
      %v3530 = vld [vmem:[%s8 + $0x80] sm:$0xff]
      %v3531 = vld [vmem:[%s8 + $0x88] sm:$0xff]
      %v3532 = vld [vmem:[%s8 + $0xc0] sm:$0xff]
      %v3533 = vld [vmem:[%s8 + $0xc8] sm:$0xff]
      %v3534 = vld [vmem:[%s8 + $0x100] sm:$0xff]
      %v3535 = vld [vmem:[%s8 + $0x108] sm:$0xff]
      %v3536 = vld [vmem:[%s8 + $0x140] sm:$0xff]
      %v3537 = vld [vmem:[%s8 + $0x148] sm:$0xff]
      %v3538 = vld [vmem:[%s8 + $0x180] sm:$0xff]
      %v3539 = vld [vmem:[%s8 + $0x188] sm:$0xff]
      %v3540 = vld [vmem:[%s8 + $0x1c0] sm:$0xff]
      %v3541 = vld [vmem:[%s8 + $0x1c8] sm:$0xff]
      %v3542 = vld [vmem:[%s3] sm:$0x3]
      %v3544 = vlaneseq
      %v3545 = vshrl.u32 %v3544, 7
      %v3546 = vsub.s32 0, %v3545
      %v3547 = vrot.slane %v3542, %v3546
      %v3548 = vlaneseq
      %v3549 = vshrl.u32 %v3548, 7
      %v3550 = vsub.s32 1, %v3549
      %v3551 = vrot.slane %v3542, %v3550
      %v3555 = vsel %vm406, %v3510, 0
      %v3558 = vsel %vm406, %v3511, 0
      %v3561 = vsel %vm406, %v3512, 0
      %v3564 = vsel %vm406, %v3513, 0
      %v3567 = vsel %vm406, %v3514, 0
      %v3570 = vsel %vm406, %v3515, 0
      %v3573 = vsel %vm406, %v3516, 0
      %v3576 = vsel %vm406, %v3517, 0
      %v3579 = vsel %vm406, %v3518, 0
      %v3582 = vsel %vm406, %v3519, 0
      %v3585 = vsel %vm406, %v3520, 0
      %v3588 = vsel %vm406, %v3521, 0
      %v3591 = vsel %vm406, %v3522, 0
      %v3594 = vsel %vm406, %v3523, 0
      %v3597 = vsel %vm406, %v3524, 0
      %v3600 = vsel %vm406, %v3525, 0
      %3602 = vmatprep.subr.mxu0 %v3527
      %3603 = vmatpush1.msra.mxu0 %v3526
      %3604 = vmatprep.subr.mxu0 %v3529
      %3605 = vmatpush1.msra.mxu0 %v3528
      %3606 = vmatprep.subr.mxu0 %v3531
      %3607 = vmatpush1.msra.mxu0 %v3530
      %3608 = vmatprep.subr.mxu0 %v3533
      %3609 = vmatpush1.msra.mxu0 %v3532
      %3610 = vmatprep.subr.mxu0 %v3535
      %3611 = vmatpush1.msra.mxu0 %v3534
      %3612 = vmatprep.subr.mxu0 %v3537
      %3613 = vmatpush1.msra.mxu0 %v3536
      %3614 = vmatprep.subr.mxu0 %v3539
      %3615 = vmatpush1.msra.mxu0 %v3538
      %3616 = vmatprep.subr.mxu0 %v3541
      %3617 = vmatpush1.msra.mxu0 %v3540
      %3618 = vmatprep.subr.mxu0 0.0
      %3619 = vmatpush1.msra.mxu0 0.0
      %3620 = vmatprep.subr.mxu0 0.0
      %3621 = vmatpush1.msra.mxu0 0.0
      %3622 = vmatprep.subr.mxu0 0.0
      %3623 = vmatpush1.msra.mxu0 0.0
      %3624 = vmatprep.subr.mxu0 0.0
      %3625 = vmatpush1.msra.mxu0 0.0
      %3626 = vmatprep.subr.mxu0 0.0
      %3627 = vmatpush1.msra.mxu0 0.0
      %3628 = vmatprep.subr.mxu0 0.0
      %3629 = vmatpush1.msra.mxu0 0.0
      %3630 = vmatprep.subr.mxu0 0.0
      %3631 = vmatpush1.msra.mxu0 0.0
      %3632 = vmatprep.subr.mxu0 0.0
      %3633 = vmatpush1.msra.mxu0 0.0
      %3634 = vmatprep.subr.mxu0 0.0
      %3635 = vmatpush1.msra.mxu0 0.0
      %3636 = vmatprep.subr.mxu0 0.0
      %3637 = vmatpush1.msra.mxu0 0.0
      %3638 = vmatprep.subr.mxu0 0.0
      %3639 = vmatpush1.msra.mxu0 0.0
      %3640 = vmatprep.subr.mxu0 0.0
      %3641 = vmatpush1.msra.mxu0 0.0
      %3642 = vmatprep.subr.mxu0 0.0
      %3643 = vmatpush1.msra.mxu0 0.0
      %3644 = vmatprep.subr.mxu0 0.0
      %3645 = vmatpush1.msra.mxu0 0.0
      %3646 = vmatprep.subr.mxu0 0.0
      %3647 = vmatpush1.msra.mxu0 0.0
      %3648 = vmatprep.subr.mxu0 0.0
      %3649 = vmatpush1.msra.mxu0 0.0
      %3650 = vmatprep.subr.mxu0 0.0
      %3651 = vmatpush1.msra.mxu0 0.0
      %3652 = vmatprep.subr.mxu0 0.0
      %3653 = vmatpush1.msra.mxu0 0.0
      %3654 = vmatprep.subr.mxu0 0.0
      %3655 = vmatpush1.msra.mxu0 0.0
      %3656 = vmatprep.subr.mxu0 0.0
      %3657 = vmatpush1.msra.mxu0 0.0
      %3658 = vmatprep.subr.mxu0 0.0
      %3659 = vmatpush1.msra.mxu0 0.0
      %3660 = vmatprep.subr.mxu0 0.0
      %3661 = vmatpush1.msra.mxu0 0.0
      %3662 = vmatprep.subr.mxu0 0.0
      %3663 = vmatpush1.msra.mxu0 0.0
      %3664 = vmatprep.subr.mxu0 0.0
      %3665 = vmatpush1.msra.mxu0 0.0
      %3666 = vmatprep.mubr.f32.mxu0 0.0
      %3667 = vmatmul.mubr.f32.gmra.mrb[0].mxu0 %v3555
      %v3668 = vpop.f32.mrb[0].mxu0
      %v3669 = vadd.f32 %v3547, %v3668
      %v3670 = vpop.f32.mrb[0].mxu0
      %v3671 = vadd.f32 %v3551, %v3670
      %3672 = vmatprep.mubr.f32.mxu0 0.0
      %3673 = vmatmul.mubr.f32.gmra.mrb[0].mxu0 %v3558
      %v3674 = vpop.f32.mrb[0].mxu0
      %v3675 = vadd.f32 %v3547, %v3674
      %v3676 = vpop.f32.mrb[0].mxu0
      %v3677 = vadd.f32 %v3551, %v3676
      %3678 = vmatprep.mubr.f32.mxu0 0.0
      %3679 = vmatmul.mubr.f32.gmra.mrb[0].mxu0 %v3561
      %v3680 = vpop.f32.mrb[0].mxu0
      %v3681 = vadd.f32 %v3547, %v3680
      %v3682 = vpop.f32.mrb[0].mxu0
      %v3683 = vadd.f32 %v3551, %v3682
      %3684 = vmatprep.mubr.f32.mxu0 0.0
      %3685 = vmatmul.mubr.f32.gmra.mrb[0].mxu0 %v3564
      %v3686 = vpop.f32.mrb[0].mxu0
      %v3687 = vadd.f32 %v3547, %v3686
      %v3688 = vpop.f32.mrb[0].mxu0
      %v3689 = vadd.f32 %v3551, %v3688
      %3690 = vmatprep.mubr.f32.mxu0 0.0
      %3691 = vmatmul.mubr.f32.gmra.mrb[0].mxu0 %v3567
      %v3692 = vpop.f32.mrb[0].mxu0
      %v3693 = vadd.f32 %v3547, %v3692
      %v3694 = vpop.f32.mrb[0].mxu0
      %v3695 = vadd.f32 %v3551, %v3694
      %3696 = vmatprep.mubr.f32.mxu0 0.0
      %3697 = vmatmul.mubr.f32.gmra.mrb[0].mxu0 %v3570
      %v3698 = vpop.f32.mrb[0].mxu0
      %v3699 = vadd.f32 %v3547, %v3698
      %v3700 = vpop.f32.mrb[0].mxu0
      %v3701 = vadd.f32 %v3551, %v3700
      %3702 = vmatprep.mubr.f32.mxu0 0.0
      %3703 = vmatmul.mubr.f32.gmra.mrb[0].mxu0 %v3573
      %v3704 = vpop.f32.mrb[0].mxu0
      %v3705 = vadd.f32 %v3547, %v3704
      %v3706 = vpop.f32.mrb[0].mxu0
      %v3707 = vadd.f32 %v3551, %v3706
      %3708 = vmatprep.mubr.f32.mxu0 0.0
      %3709 = vmatmul.mubr.f32.gmra.mrb[0].mxu0 %v3576
      %v3710 = vpop.f32.mrb[0].mxu0
      %v3711 = vadd.f32 %v3547, %v3710
      %v3712 = vpop.f32.mrb[0].mxu0
      %v3713 = vadd.f32 %v3551, %v3712
      %3714 = vmatprep.mubr.f32.mxu0 0.0
      %3715 = vmatmul.mubr.f32.gmra.mrb[0].mxu0 %v3579
      %v3716 = vpop.f32.mrb[0].mxu0
      %v3717 = vadd.f32 %v3547, %v3716
      %v3718 = vpop.f32.mrb[0].mxu0
      %v3719 = vadd.f32 %v3551, %v3718
      %3720 = vmatprep.mubr.f32.mxu0 0.0
      %3721 = vmatmul.mubr.f32.gmra.mrb[0].mxu0 %v3582
      %v3722 = vpop.f32.mrb[0].mxu0
      %v3723 = vadd.f32 %v3547, %v3722
      %v3724 = vpop.f32.mrb[0].mxu0
      %v3725 = vadd.f32 %v3551, %v3724
      %3726 = vmatprep.mubr.f32.mxu0 0.0
      %3727 = vmatmul.mubr.f32.gmra.mrb[0].mxu0 %v3585
      %v3728 = vpop.f32.mrb[0].mxu0
      %v3729 = vadd.f32 %v3547, %v3728
      %v3730 = vpop.f32.mrb[0].mxu0
      %v3731 = vadd.f32 %v3551, %v3730
      %3732 = vmatprep.mubr.f32.mxu0 0.0
      %3733 = vmatmul.mubr.f32.gmra.mrb[0].mxu0 %v3588
      %v3734 = vpop.f32.mrb[0].mxu0
      %v3735 = vadd.f32 %v3547, %v3734
      %v3736 = vpop.f32.mrb[0].mxu0
      %v3737 = vadd.f32 %v3551, %v3736
      %3738 = vmatprep.mubr.f32.mxu0 0.0
      %3739 = vmatmul.mubr.f32.gmra.mrb[0].mxu0 %v3591
      %v3740 = vpop.f32.mrb[0].mxu0
      %v3741 = vadd.f32 %v3547, %v3740
      %v3742 = vpop.f32.mrb[0].mxu0
      %v3743 = vadd.f32 %v3551, %v3742
      %3744 = vmatprep.mubr.f32.mxu0 0.0
      %3745 = vmatmul.mubr.f32.gmra.mrb[0].mxu0 %v3594
      %v3746 = vpop.f32.mrb[0].mxu0
      %v3747 = vadd.f32 %v3547, %v3746
      %v3748 = vpop.f32.mrb[0].mxu0
      %v3749 = vadd.f32 %v3551, %v3748
      %3750 = vmatprep.mubr.f32.mxu0 0.0
      %3751 = vmatmul.mubr.f32.gmra.mrb[0].mxu0 %v3597
      %v3752 = vpop.f32.mrb[0].mxu0
      %v3753 = vadd.f32 %v3547, %v3752
      %v3754 = vpop.f32.mrb[0].mxu0
      %v3755 = vadd.f32 %v3551, %v3754
      %3756 = vmatprep.mubr.f32.mxu0 0.0
      %3757 = vmatmul.mubr.f32.gmra.mrb[0].mxu0 %v3600
      %v3758 = vpop.f32.mrb[0].mxu0
      %v3759 = vadd.f32 %v3547, %v3758
      %v3760 = vpop.f32.mrb[0].mxu0
      %v3761 = vadd.f32 %v3551, %v3760
      %3762 = vdwg.mxu0
      %v3763 = vmax.f32 %v3669, 0.0
      %v3764 = vmax.f32 %v3671, 0.0
      %v3765 = vmax.f32 %v3675, 0.0
      %v3766 = vmax.f32 %v3677, 0.0
      %v3767 = vmax.f32 %v3681, 0.0
      %v3768 = vmax.f32 %v3683, 0.0
      %v3769 = vmax.f32 %v3687, 0.0
      %v3770 = vmax.f32 %v3689, 0.0
      %v3771 = vmax.f32 %v3693, 0.0
      %v3772 = vmax.f32 %v3695, 0.0
      %v3773 = vmax.f32 %v3699, 0.0
      %v3774 = vmax.f32 %v3701, 0.0
      %v3775 = vmax.f32 %v3705, 0.0
      %v3776 = vmax.f32 %v3707, 0.0
      %v3777 = vmax.f32 %v3711, 0.0
      %v3778 = vmax.f32 %v3713, 0.0
      %v3779 = vmax.f32 %v3717, 0.0
      %v3780 = vmax.f32 %v3719, 0.0
      %v3781 = vmax.f32 %v3723, 0.0
      %v3782 = vmax.f32 %v3725, 0.0
      %v3783 = vmax.f32 %v3729, 0.0
      %v3784 = vmax.f32 %v3731, 0.0
      %v3785 = vmax.f32 %v3735, 0.0
      %v3786 = vmax.f32 %v3737, 0.0
      %v3787 = vmax.f32 %v3741, 0.0
      %v3788 = vmax.f32 %v3743, 0.0
      %v3789 = vmax.f32 %v3747, 0.0
      %v3790 = vmax.f32 %v3749, 0.0
      %v3791 = vmax.f32 %v3753, 0.0
      %v3792 = vmax.f32 %v3755, 0.0
      %v3793 = vmax.f32 %v3759, 0.0
      %v3794 = vmax.f32 %v3761, 0.0
      %v3795 = vld [vmem:[%s9] sm:$0xff]
      %v3796 = vld [vmem:[%s9 + $0x8] sm:$0xff]
      %v3797 = vld [vmem:[%s9 + $0x10] sm:$0xff]
      %v3798 = vld [vmem:[%s9 + $0x18] sm:$0xff]
      %v3799 = vld [vmem:[%s9 + $0x20] sm:$0xff]
      %v3800 = vld [vmem:[%s9 + $0x28] sm:$0xff]
      %v3801 = vld [vmem:[%s9 + $0x30] sm:$0xff]
      %v3802 = vld [vmem:[%s9 + $0x38] sm:$0xff]
      %v3803 = vld [vmem:[%s9 + $0x40] sm:$0xff]
      %v3804 = vld [vmem:[%s9 + $0x48] sm:$0xff]
      %v3805 = vld [vmem:[%s9 + $0x50] sm:$0xff]
      %v3806 = vld [vmem:[%s9 + $0x58] sm:$0xff]
      %v3807 = vld [vmem:[%s9 + $0x60] sm:$0xff]
      %v3808 = vld [vmem:[%s9 + $0x68] sm:$0xff]
      %v3809 = vld [vmem:[%s9 + $0x70] sm:$0xff]
      %v3810 = vld [vmem:[%s9 + $0x78] sm:$0xff]
      %v3811 = vld [vmem:[%s9 + $0x80] sm:$0xff]
      %v3812 = vld [vmem:[%s9 + $0x88] sm:$0xff]
      %v3813 = vld [vmem:[%s9 + $0x90] sm:$0xff]
      %v3814 = vld [vmem:[%s9 + $0x98] sm:$0xff]
      %v3815 = vld [vmem:[%s9 + $0xa0] sm:$0xff]
      %v3816 = vld [vmem:[%s9 + $0xa8] sm:$0xff]
      %v3817 = vld [vmem:[%s9 + $0xb0] sm:$0xff]
      %v3818 = vld [vmem:[%s9 + $0xb8] sm:$0xff]
      %v3819 = vld [vmem:[%s9 + $0xc0] sm:$0xff]
      %v3820 = vld [vmem:[%s9 + $0xc8] sm:$0xff]
      %v3821 = vld [vmem:[%s9 + $0xd0] sm:$0xff]
      %v3822 = vld [vmem:[%s9 + $0xd8] sm:$0xff]
      %v3823 = vld [vmem:[%s9 + $0xe0] sm:$0xff]
      %v3824 = vld [vmem:[%s9 + $0xe8] sm:$0xff]
      %v3825 = vld [vmem:[%s9 + $0xf0] sm:$0xff]
      %v3826 = vld [vmem:[%s9 + $0xf8] sm:$0xff]
      %3827 = vmatprep.subr.mxu0 0.0
      %3828 = vmatpush1.msra.mxu0 %v3795
      %3829 = vmatprep.subr.mxu0 0.0
      %3830 = vmatpush1.msra.mxu0 %v3796
      %3831 = vmatprep.subr.mxu0 0.0
      %3832 = vmatpush1.msra.mxu0 %v3797
      %3833 = vmatprep.subr.mxu0 0.0
      %3834 = vmatpush1.msra.mxu0 %v3798
      %3835 = vmatprep.subr.mxu0 0.0
      %3836 = vmatpush1.msra.mxu0 %v3799
      %3837 = vmatprep.subr.mxu0 0.0
      %3838 = vmatpush1.msra.mxu0 %v3800
      %3839 = vmatprep.subr.mxu0 0.0
      %3840 = vmatpush1.msra.mxu0 %v3801
      %3841 = vmatprep.subr.mxu0 0.0
      %3842 = vmatpush1.msra.mxu0 %v3802
      %3843 = vmatprep.subr.mxu0 0.0
      %3844 = vmatpush1.msra.mxu0 %v3803
      %3845 = vmatprep.subr.mxu0 0.0
      %3846 = vmatpush1.msra.mxu0 %v3804
      %3847 = vmatprep.subr.mxu0 0.0
      %3848 = vmatpush1.msra.mxu0 %v3805
      %3849 = vmatprep.subr.mxu0 0.0
      %3850 = vmatpush1.msra.mxu0 %v3806
      %3851 = vmatprep.subr.mxu0 0.0
      %3852 = vmatpush1.msra.mxu0 %v3807
      %3853 = vmatprep.subr.mxu0 0.0
      %3854 = vmatpush1.msra.mxu0 %v3808
      %3855 = vmatprep.subr.mxu0 0.0
      %3856 = vmatpush1.msra.mxu0 %v3809
      %3857 = vmatprep.subr.mxu0 0.0
      %3858 = vmatpush1.msra.mxu0 %v3810
      %3859 = vmatprep.subr.mxu0 0.0
      %3860 = vmatpush1.msra.mxu0 %v3811
      %3861 = vmatprep.subr.mxu0 0.0
      %3862 = vmatpush1.msra.mxu0 %v3812
      %3863 = vmatprep.subr.mxu0 0.0
      %3864 = vmatpush1.msra.mxu0 %v3813
      %3865 = vmatprep.subr.mxu0 0.0
      %3866 = vmatpush1.msra.mxu0 %v3814
      %3867 = vmatprep.subr.mxu0 0.0
      %3868 = vmatpush1.msra.mxu0 %v3815
      %3869 = vmatprep.subr.mxu0 0.0
      %3870 = vmatpush1.msra.mxu0 %v3816
      %3871 = vmatprep.subr.mxu0 0.0
      %3872 = vmatpush1.msra.mxu0 %v3817
      %3873 = vmatprep.subr.mxu0 0.0
      %3874 = vmatpush1.msra.mxu0 %v3818
      %3875 = vmatprep.subr.mxu0 0.0
      %3876 = vmatpush1.msra.mxu0 %v3819
      %3877 = vmatprep.subr.mxu0 0.0
      %3878 = vmatpush1.msra.mxu0 %v3820
      %3879 = vmatprep.subr.mxu0 0.0
      %3880 = vmatpush1.msra.mxu0 %v3821
      %3881 = vmatprep.subr.mxu0 0.0
      %3882 = vmatpush1.msra.mxu0 %v3822
      %3883 = vmatprep.subr.mxu0 0.0
      %3884 = vmatpush1.msra.mxu0 %v3823
      %3885 = vmatprep.subr.mxu0 0.0
      %3886 = vmatpush1.msra.mxu0 %v3824
      %3887 = vmatprep.subr.mxu0 0.0
      %3888 = vmatpush1.msra.mxu0 %v3825
      %3889 = vmatprep.subr.mxu0 0.0
      %3890 = vmatpush1.msra.mxu0 %v3826
      %3891 = vmatprep.mubr.f32.mxu0 %v3764
      %3892 = vmatmul.mubr.f32.gmra.mrb[0].mxu0 %v3763
      %v3893 = vpop.f32.mrb[0].mxu0
      %v3894 = vadd.f32 0.0, %v3893
      %v3895 = vpop.f32.mrb[0].mxu0
      %3896 = vmatprep.mubr.f32.mxu0 %v3766
      %3897 = vmatmul.mubr.f32.gmra.mrb[0].mxu0 %v3765
      %v3898 = vpop.f32.mrb[0].mxu0
      %v3899 = vadd.f32 0.0, %v3898
      %v3900 = vpop.f32.mrb[0].mxu0
      %3901 = vmatprep.mubr.f32.mxu0 %v3768
      %3902 = vmatmul.mubr.f32.gmra.mrb[0].mxu0 %v3767
      %v3903 = vpop.f32.mrb[0].mxu0
      %v3904 = vadd.f32 0.0, %v3903
      %v3905 = vpop.f32.mrb[0].mxu0
      %3906 = vmatprep.mubr.f32.mxu0 %v3770
      %3907 = vmatmul.mubr.f32.gmra.mrb[0].mxu0 %v3769
      %v3908 = vpop.f32.mrb[0].mxu0
      %v3909 = vadd.f32 0.0, %v3908
      %v3910 = vpop.f32.mrb[0].mxu0
      %3911 = vmatprep.mubr.f32.mxu0 %v3772
      %3912 = vmatmul.mubr.f32.gmra.mrb[0].mxu0 %v3771
      %v3913 = vpop.f32.mrb[0].mxu0
      %v3914 = vadd.f32 0.0, %v3913
      %v3915 = vpop.f32.mrb[0].mxu0
      %3916 = vmatprep.mubr.f32.mxu0 %v3774
      %3917 = vmatmul.mubr.f32.gmra.mrb[0].mxu0 %v3773
      %v3918 = vpop.f32.mrb[0].mxu0
      %v3919 = vadd.f32 0.0, %v3918
      %v3920 = vpop.f32.mrb[0].mxu0
      %3921 = vmatprep.mubr.f32.mxu0 %v3776
      %3922 = vmatmul.mubr.f32.gmra.mrb[0].mxu0 %v3775
      %v3923 = vpop.f32.mrb[0].mxu0
      %v3924 = vadd.f32 0.0, %v3923
      %v3925 = vpop.f32.mrb[0].mxu0
      %3926 = vmatprep.mubr.f32.mxu0 %v3778
      %3927 = vmatmul.mubr.f32.gmra.mrb[0].mxu0 %v3777
      %v3928 = vpop.f32.mrb[0].mxu0
      %v3929 = vadd.f32 0.0, %v3928
      %v3930 = vpop.f32.mrb[0].mxu0
      %3931 = vmatprep.mubr.f32.mxu0 %v3780
      %3932 = vmatmul.mubr.f32.gmra.mrb[0].mxu0 %v3779
      %v3933 = vpop.f32.mrb[0].mxu0
      %v3934 = vadd.f32 0.0, %v3933
      %v3935 = vpop.f32.mrb[0].mxu0
      %3936 = vmatprep.mubr.f32.mxu0 %v3782
      %3937 = vmatmul.mubr.f32.gmra.mrb[0].mxu0 %v3781
      %v3938 = vpop.f32.mrb[0].mxu0
      %v3939 = vadd.f32 0.0, %v3938
      %v3940 = vpop.f32.mrb[0].mxu0
      %3941 = vmatprep.mubr.f32.mxu0 %v3784
      %3942 = vmatmul.mubr.f32.gmra.mrb[0].mxu0 %v3783
      %v3943 = vpop.f32.mrb[0].mxu0
      %v3944 = vadd.f32 0.0, %v3943
      %v3945 = vpop.f32.mrb[0].mxu0
      %3946 = vmatprep.mubr.f32.mxu0 %v3786
      %3947 = vmatmul.mubr.f32.gmra.mrb[0].mxu0 %v3785
      %v3948 = vpop.f32.mrb[0].mxu0
      %v3949 = vadd.f32 0.0, %v3948
      %v3950 = vpop.f32.mrb[0].mxu0
      %3951 = vmatprep.mubr.f32.mxu0 %v3788
      %3952 = vmatmul.mubr.f32.gmra.mrb[0].mxu0 %v3787
      %v3953 = vpop.f32.mrb[0].mxu0
      %v3954 = vadd.f32 0.0, %v3953
      %v3955 = vpop.f32.mrb[0].mxu0
      %3956 = vmatprep.mubr.f32.mxu0 %v3790
      %3957 = vmatmul.mubr.f32.gmra.mrb[0].mxu0 %v3789
      %v3958 = vpop.f32.mrb[0].mxu0
      %v3959 = vadd.f32 0.0, %v3958
      %v3960 = vpop.f32.mrb[0].mxu0
      %3961 = vmatprep.mubr.f32.mxu0 %v3792
      %3962 = vmatmul.mubr.f32.gmra.mrb[0].mxu0 %v3791
      %v3963 = vpop.f32.mrb[0].mxu0
      %v3964 = vadd.f32 0.0, %v3963
      %v3965 = vpop.f32.mrb[0].mxu0
      %3966 = vmatprep.mubr.f32.mxu0 %v3794
      %3967 = vmatmul.mubr.f32.gmra.mrb[0].mxu0 %v3793
      %v3968 = vpop.f32.mrb[0].mxu0
      %v3969 = vadd.f32 0.0, %v3968
      %v3970 = vpop.f32.mrb[0].mxu0
      %3971 = vdwg.mxu0
      %v3972 = vlaneseq
      %v3973 = vshrl.u32 %v3972, 7
      %v3974 = vsub.s32 1, %v3973
      %v3975 = vrot.slane %v405, %v3974
      %v3976 = vadd.f32 %v3975, %v3894
      %v3977 = vadd.f32 %v3975, %v3899
      %v3978 = vadd.f32 %v3975, %v3904
      %v3979 = vadd.f32 %v3975, %v3909
      %v3980 = vadd.f32 %v3975, %v3914
      %v3981 = vadd.f32 %v3975, %v3919
      %v3982 = vadd.f32 %v3975, %v3924
      %v3983 = vadd.f32 %v3975, %v3929
      %v3984 = vadd.f32 %v3975, %v3934
      %v3985 = vadd.f32 %v3975, %v3939
      %v3986 = vadd.f32 %v3975, %v3944
      %v3987 = vadd.f32 %v3975, %v3949
      %v3988 = vadd.f32 %v3975, %v3954
      %v3989 = vadd.f32 %v3975, %v3959
      %v3990 = vadd.f32 %v3975, %v3964
      %v3991 = vadd.f32 %v3975, %v3969
      %v3992 = vld [vmem:[%s8 + $0x10] sm:$0xff]
      %v3993 = vld [vmem:[%s8 + $0x18] sm:$0xff]
      %v3994 = vld [vmem:[%s8 + $0x50] sm:$0xff]
      %v3995 = vld [vmem:[%s8 + $0x58] sm:$0xff]
      %v3996 = vld [vmem:[%s8 + $0x90] sm:$0xff]
      %v3997 = vld [vmem:[%s8 + $0x98] sm:$0xff]
      %v3998 = vld [vmem:[%s8 + $0xd0] sm:$0xff]
      %v3999 = vld [vmem:[%s8 + $0xd8] sm:$0xff]
      %v4000 = vld [vmem:[%s8 + $0x110] sm:$0xff]
      %v4001 = vld [vmem:[%s8 + $0x118] sm:$0xff]
      %v4002 = vld [vmem:[%s8 + $0x150] sm:$0xff]
      %v4003 = vld [vmem:[%s8 + $0x158] sm:$0xff]
      %v4004 = vld [vmem:[%s8 + $0x190] sm:$0xff]
      %v4005 = vld [vmem:[%s8 + $0x198] sm:$0xff]
      %v4006 = vld [vmem:[%s8 + $0x1d0] sm:$0xff]
      %v4007 = vld [vmem:[%s8 + $0x1d8] sm:$0xff]
      %v4008 = vld [vmem:[%s3 + $0x2] sm:$0x3]
      %v4010 = vlaneseq
      %v4011 = vshrl.u32 %v4010, 7
      %v4012 = vsub.s32 0, %v4011
      %v4013 = vrot.slane %v4008, %v4012
      %v4014 = vlaneseq
      %v4015 = vshrl.u32 %v4014, 7
      %v4016 = vsub.s32 1, %v4015
      %v4017 = vrot.slane %v4008, %v4016
      %4020 = vmatprep.subr.mxu0 %v3993
      %4021 = vmatpush1.msra.mxu0 %v3992
      %4022 = vmatprep.subr.mxu0 %v3995
      %4023 = vmatpush1.msra.mxu0 %v3994
      %4024 = vmatprep.subr.mxu0 %v3997
      %4025 = vmatpush1.msra.mxu0 %v3996
      %4026 = vmatprep.subr.mxu0 %v3999
      %4027 = vmatpush1.msra.mxu0 %v3998
      %4028 = vmatprep.subr.mxu0 %v4001
      %4029 = vmatpush1.msra.mxu0 %v4000
      %4030 = vmatprep.subr.mxu0 %v4003
      %4031 = vmatpush1.msra.mxu0 %v4002
      %4032 = vmatprep.subr.mxu0 %v4005
      %4033 = vmatpush1.msra.mxu0 %v4004
      %4034 = vmatprep.subr.mxu0 %v4007
      %4035 = vmatpush1.msra.mxu0 %v4006
      %4036 = vmatprep.subr.mxu0 0.0
      %4037 = vmatpush1.msra.mxu0 0.0
      %4038 = vmatprep.subr.mxu0 0.0
      %4039 = vmatpush1.msra.mxu0 0.0
      %4040 = vmatprep.subr.mxu0 0.0
      %4041 = vmatpush1.msra.mxu0 0.0
      %4042 = vmatprep.subr.mxu0 0.0
      %4043 = vmatpush1.msra.mxu0 0.0
      %4044 = vmatprep.subr.mxu0 0.0
      %4045 = vmatpush1.msra.mxu0 0.0
      %4046 = vmatprep.subr.mxu0 0.0
      %4047 = vmatpush1.msra.mxu0 0.0
      %4048 = vmatprep.subr.mxu0 0.0
      %4049 = vmatpush1.msra.mxu0 0.0
      %4050 = vmatprep.subr.mxu0 0.0
      %4051 = vmatpush1.msra.mxu0 0.0
      %4052 = vmatprep.subr.mxu0 0.0
      %4053 = vmatpush1.msra.mxu0 0.0
      %4054 = vmatprep.subr.mxu0 0.0
      %4055 = vmatpush1.msra.mxu0 0.0
      %4056 = vmatprep.subr.mxu0 0.0
      %4057 = vmatpush1.msra.mxu0 0.0
      %4058 = vmatprep.subr.mxu0 0.0
      %4059 = vmatpush1.msra.mxu0 0.0
      %4060 = vmatprep.subr.mxu0 0.0
      %4061 = vmatpush1.msra.mxu0 0.0
      %4062 = vmatprep.subr.mxu0 0.0
      %4063 = vmatpush1.msra.mxu0 0.0
      %4064 = vmatprep.subr.mxu0 0.0
      %4065 = vmatpush1.msra.mxu0 0.0
      %4066 = vmatprep.subr.mxu0 0.0
      %4067 = vmatpush1.msra.mxu0 0.0
      %4068 = vmatprep.subr.mxu0 0.0
      %4069 = vmatpush1.msra.mxu0 0.0
      %4070 = vmatprep.subr.mxu0 0.0
      %4071 = vmatpush1.msra.mxu0 0.0
      %4072 = vmatprep.subr.mxu0 0.0
      %4073 = vmatpush1.msra.mxu0 0.0
      %4074 = vmatprep.subr.mxu0 0.0
      %4075 = vmatpush1.msra.mxu0 0.0
      %4076 = vmatprep.subr.mxu0 0.0
      %4077 = vmatpush1.msra.mxu0 0.0
      %4078 = vmatprep.subr.mxu0 0.0
      %4079 = vmatpush1.msra.mxu0 0.0
      %4080 = vmatprep.subr.mxu0 0.0
      %4081 = vmatpush1.msra.mxu0 0.0
      %4082 = vmatprep.subr.mxu0 0.0
      %4083 = vmatpush1.msra.mxu0 0.0
      %4084 = vmatprep.mubr.f32.mxu0 0.0
      %4085 = vmatmul.mubr.f32.gmra.mrb[0].mxu0 %v3555
      %v4086 = vpop.f32.mrb[0].mxu0
      %v4087 = vadd.f32 %v4013, %v4086
      %v4088 = vpop.f32.mrb[0].mxu0
      %v4089 = vadd.f32 %v4017, %v4088
      %4090 = vmatprep.mubr.f32.mxu0 0.0
      %4091 = vmatmul.mubr.f32.gmra.mrb[0].mxu0 %v3558
      %v4092 = vpop.f32.mrb[0].mxu0
      %v4093 = vadd.f32 %v4013, %v4092
      %v4094 = vpop.f32.mrb[0].mxu0
      %v4095 = vadd.f32 %v4017, %v4094
      %4096 = vmatprep.mubr.f32.mxu0 0.0
      %4097 = vmatmul.mubr.f32.gmra.mrb[0].mxu0 %v3561
      %v4098 = vpop.f32.mrb[0].mxu0
      %v4099 = vadd.f32 %v4013, %v4098
      %v4100 = vpop.f32.mrb[0].mxu0
      %v4101 = vadd.f32 %v4017, %v4100
      %4102 = vmatprep.mubr.f32.mxu0 0.0
      %4103 = vmatmul.mubr.f32.gmra.mrb[0].mxu0 %v3564
      %v4104 = vpop.f32.mrb[0].mxu0
      %v4105 = vadd.f32 %v4013, %v4104
      %v4106 = vpop.f32.mrb[0].mxu0
      %v4107 = vadd.f32 %v4017, %v4106
      %4108 = vmatprep.mubr.f32.mxu0 0.0
      %4109 = vmatmul.mubr.f32.gmra.mrb[0].mxu0 %v3567
      %v4110 = vpop.f32.mrb[0].mxu0
      %v4111 = vadd.f32 %v4013, %v4110
      %v4112 = vpop.f32.mrb[0].mxu0
      %v4113 = vadd.f32 %v4017, %v4112
      %4114 = vmatprep.mubr.f32.mxu0 0.0
      %4115 = vmatmul.mubr.f32.gmra.mrb[0].mxu0 %v3570
      %v4116 = vpop.f32.mrb[0].mxu0
      %v4117 = vadd.f32 %v4013, %v4116
      %v4118 = vpop.f32.mrb[0].mxu0
      %v4119 = vadd.f32 %v4017, %v4118
      %4120 = vmatprep.mubr.f32.mxu0 0.0
      %4121 = vmatmul.mubr.f32.gmra.mrb[0].mxu0 %v3573
      %v4122 = vpop.f32.mrb[0].mxu0
      %v4123 = vadd.f32 %v4013, %v4122
      %v4124 = vpop.f32.mrb[0].mxu0
      %v4125 = vadd.f32 %v4017, %v4124
      %4126 = vmatprep.mubr.f32.mxu0 0.0
      %4127 = vmatmul.mubr.f32.gmra.mrb[0].mxu0 %v3576
      %v4128 = vpop.f32.mrb[0].mxu0
      %v4129 = vadd.f32 %v4013, %v4128
      %v4130 = vpop.f32.mrb[0].mxu0
      %v4131 = vadd.f32 %v4017, %v4130
      %4132 = vmatprep.mubr.f32.mxu0 0.0
      %4133 = vmatmul.mubr.f32.gmra.mrb[0].mxu0 %v3579
      %v4134 = vpop.f32.mrb[0].mxu0
      %v4135 = vadd.f32 %v4013, %v4134
      %v4136 = vpop.f32.mrb[0].mxu0
      %v4137 = vadd.f32 %v4017, %v4136
      %4138 = vmatprep.mubr.f32.mxu0 0.0
      %4139 = vmatmul.mubr.f32.gmra.mrb[0].mxu0 %v3582
      %v4140 = vpop.f32.mrb[0].mxu0
      %v4141 = vadd.f32 %v4013, %v4140
      %v4142 = vpop.f32.mrb[0].mxu0
      %v4143 = vadd.f32 %v4017, %v4142
      %4144 = vmatprep.mubr.f32.mxu0 0.0
      %4145 = vmatmul.mubr.f32.gmra.mrb[0].mxu0 %v3585
      %v4146 = vpop.f32.mrb[0].mxu0
      %v4147 = vadd.f32 %v4013, %v4146
      %v4148 = vpop.f32.mrb[0].mxu0
      %v4149 = vadd.f32 %v4017, %v4148
      %4150 = vmatprep.mubr.f32.mxu0 0.0
      %4151 = vmatmul.mubr.f32.gmra.mrb[0].mxu0 %v3588
      %v4152 = vpop.f32.mrb[0].mxu0
      %v4153 = vadd.f32 %v4013, %v4152
      %v4154 = vpop.f32.mrb[0].mxu0
      %v4155 = vadd.f32 %v4017, %v4154
      %4156 = vmatprep.mubr.f32.mxu0 0.0
      %4157 = vmatmul.mubr.f32.gmra.mrb[0].mxu0 %v3591
      %v4158 = vpop.f32.mrb[0].mxu0
      %v4159 = vadd.f32 %v4013, %v4158
      %v4160 = vpop.f32.mrb[0].mxu0
      %v4161 = vadd.f32 %v4017, %v4160
      %4162 = vmatprep.mubr.f32.mxu0 0.0
      %4163 = vmatmul.mubr.f32.gmra.mrb[0].mxu0 %v3594
      %v4164 = vpop.f32.mrb[0].mxu0
      %v4165 = vadd.f32 %v4013, %v4164
      %v4166 = vpop.f32.mrb[0].mxu0
      %v4167 = vadd.f32 %v4017, %v4166
      %4168 = vmatprep.mubr.f32.mxu0 0.0
      %4169 = vmatmul.mubr.f32.gmra.mrb[0].mxu0 %v3597
      %v4170 = vpop.f32.mrb[0].mxu0
      %v4171 = vadd.f32 %v4013, %v4170
      %v4172 = vpop.f32.mrb[0].mxu0
      %v4173 = vadd.f32 %v4017, %v4172
      %4174 = vmatprep.mubr.f32.mxu0 0.0
      %4175 = vmatmul.mubr.f32.gmra.mrb[0].mxu0 %v3600
      %v4176 = vpop.f32.mrb[0].mxu0
      %v4177 = vadd.f32 %v4013, %v4176
      %v4178 = vpop.f32.mrb[0].mxu0
      %v4179 = vadd.f32 %v4017, %v4178
      %4180 = vdwg.mxu0
      %v4181 = vmax.f32 %v4087, 0.0
      %v4182 = vmax.f32 %v4089, 0.0
      %v4183 = vmax.f32 %v4093, 0.0
      %v4184 = vmax.f32 %v4095, 0.0
      %v4185 = vmax.f32 %v4099, 0.0
      %v4186 = vmax.f32 %v4101, 0.0
      %v4187 = vmax.f32 %v4105, 0.0
      %v4188 = vmax.f32 %v4107, 0.0
      %v4189 = vmax.f32 %v4111, 0.0
      %v4190 = vmax.f32 %v4113, 0.0
      %v4191 = vmax.f32 %v4117, 0.0
      %v4192 = vmax.f32 %v4119, 0.0
      %v4193 = vmax.f32 %v4123, 0.0
      %v4194 = vmax.f32 %v4125, 0.0
      %v4195 = vmax.f32 %v4129, 0.0
      %v4196 = vmax.f32 %v4131, 0.0
      %v4197 = vmax.f32 %v4135, 0.0
      %v4198 = vmax.f32 %v4137, 0.0
      %v4199 = vmax.f32 %v4141, 0.0
      %v4200 = vmax.f32 %v4143, 0.0
      %v4201 = vmax.f32 %v4147, 0.0
      %v4202 = vmax.f32 %v4149, 0.0
      %v4203 = vmax.f32 %v4153, 0.0
      %v4204 = vmax.f32 %v4155, 0.0
      %v4205 = vmax.f32 %v4159, 0.0
      %v4206 = vmax.f32 %v4161, 0.0
      %v4207 = vmax.f32 %v4165, 0.0
      %v4208 = vmax.f32 %v4167, 0.0
      %v4209 = vmax.f32 %v4171, 0.0
      %v4210 = vmax.f32 %v4173, 0.0
      %v4211 = vmax.f32 %v4177, 0.0
      %v4212 = vmax.f32 %v4179, 0.0
      %v4213 = vld [vmem:[%s9 + $0x100] sm:$0xff]
      %v4214 = vld [vmem:[%s9 + $0x108] sm:$0xff]
      %v4215 = vld [vmem:[%s9 + $0x110] sm:$0xff]
      %v4216 = vld [vmem:[%s9 + $0x118] sm:$0xff]
      %v4217 = vld [vmem:[%s9 + $0x120] sm:$0xff]
      %v4218 = vld [vmem:[%s9 + $0x128] sm:$0xff]
      %v4219 = vld [vmem:[%s9 + $0x130] sm:$0xff]
      %v4220 = vld [vmem:[%s9 + $0x138] sm:$0xff]
      %v4221 = vld [vmem:[%s9 + $0x140] sm:$0xff]
      %v4222 = vld [vmem:[%s9 + $0x148] sm:$0xff]
      %v4223 = vld [vmem:[%s9 + $0x150] sm:$0xff]
      %v4224 = vld [vmem:[%s9 + $0x158] sm:$0xff]
      %v4225 = vld [vmem:[%s9 + $0x160] sm:$0xff]
      %v4226 = vld [vmem:[%s9 + $0x168] sm:$0xff]
      %v4227 = vld [vmem:[%s9 + $0x170] sm:$0xff]
      %v4228 = vld [vmem:[%s9 + $0x178] sm:$0xff]
      %v4229 = vld [vmem:[%s9 + $0x180] sm:$0xff]
      %v4230 = vld [vmem:[%s9 + $0x188] sm:$0xff]
      %v4231 = vld [vmem:[%s9 + $0x190] sm:$0xff]
      %v4232 = vld [vmem:[%s9 + $0x198] sm:$0xff]
      %v4233 = vld [vmem:[%s9 + $0x1a0] sm:$0xff]
      %v4234 = vld [vmem:[%s9 + $0x1a8] sm:$0xff]
      %v4235 = vld [vmem:[%s9 + $0x1b0] sm:$0xff]
      %v4236 = vld [vmem:[%s9 + $0x1b8] sm:$0xff]
      %v4237 = vld [vmem:[%s9 + $0x1c0] sm:$0xff]
      %v4238 = vld [vmem:[%s9 + $0x1c8] sm:$0xff]
      %v4239 = vld [vmem:[%s9 + $0x1d0] sm:$0xff]
      %v4240 = vld [vmem:[%s9 + $0x1d8] sm:$0xff]
      %v4241 = vld [vmem:[%s9 + $0x1e0] sm:$0xff]
      %v4242 = vld [vmem:[%s9 + $0x1e8] sm:$0xff]
      %v4243 = vld [vmem:[%s9 + $0x1f0] sm:$0xff]
      %v4244 = vld [vmem:[%s9 + $0x1f8] sm:$0xff]
      %4245 = vmatprep.subr.mxu0 0.0
      %4246 = vmatpush1.msra.mxu0 %v4213
      %4247 = vmatprep.subr.mxu0 0.0
      %4248 = vmatpush1.msra.mxu0 %v4214
      %4249 = vmatprep.subr.mxu0 0.0
      %4250 = vmatpush1.msra.mxu0 %v4215
      %4251 = vmatprep.subr.mxu0 0.0
      %4252 = vmatpush1.msra.mxu0 %v4216
      %4253 = vmatprep.subr.mxu0 0.0
      %4254 = vmatpush1.msra.mxu0 %v4217
      %4255 = vmatprep.subr.mxu0 0.0
      %4256 = vmatpush1.msra.mxu0 %v4218
      %4257 = vmatprep.subr.mxu0 0.0
      %4258 = vmatpush1.msra.mxu0 %v4219
      %4259 = vmatprep.subr.mxu0 0.0
      %4260 = vmatpush1.msra.mxu0 %v4220
      %4261 = vmatprep.subr.mxu0 0.0
      %4262 = vmatpush1.msra.mxu0 %v4221
      %4263 = vmatprep.subr.mxu0 0.0
      %4264 = vmatpush1.msra.mxu0 %v4222
      %4265 = vmatprep.subr.mxu0 0.0
      %4266 = vmatpush1.msra.mxu0 %v4223
      %4267 = vmatprep.subr.mxu0 0.0
      %4268 = vmatpush1.msra.mxu0 %v4224
      %4269 = vmatprep.subr.mxu0 0.0
      %4270 = vmatpush1.msra.mxu0 %v4225
      %4271 = vmatprep.subr.mxu0 0.0
      %4272 = vmatpush1.msra.mxu0 %v4226
      %4273 = vmatprep.subr.mxu0 0.0
      %4274 = vmatpush1.msra.mxu0 %v4227
      %4275 = vmatprep.subr.mxu0 0.0
      %4276 = vmatpush1.msra.mxu0 %v4228
      %4277 = vmatprep.subr.mxu0 0.0
      %4278 = vmatpush1.msra.mxu0 %v4229
      %4279 = vmatprep.subr.mxu0 0.0
      %4280 = vmatpush1.msra.mxu0 %v4230
      %4281 = vmatprep.subr.mxu0 0.0
      %4282 = vmatpush1.msra.mxu0 %v4231
      %4283 = vmatprep.subr.mxu0 0.0
      %4284 = vmatpush1.msra.mxu0 %v4232
      %4285 = vmatprep.subr.mxu0 0.0
      %4286 = vmatpush1.msra.mxu0 %v4233
      %4287 = vmatprep.subr.mxu0 0.0
      %4288 = vmatpush1.msra.mxu0 %v4234
      %4289 = vmatprep.subr.mxu0 0.0
      %4290 = vmatpush1.msra.mxu0 %v4235
      %4291 = vmatprep.subr.mxu0 0.0
      %4292 = vmatpush1.msra.mxu0 %v4236
      %4293 = vmatprep.subr.mxu0 0.0
      %4294 = vmatpush1.msra.mxu0 %v4237
      %4295 = vmatprep.subr.mxu0 0.0
      %4296 = vmatpush1.msra.mxu0 %v4238
      %4297 = vmatprep.subr.mxu0 0.0
      %4298 = vmatpush1.msra.mxu0 %v4239
      %4299 = vmatprep.subr.mxu0 0.0
      %4300 = vmatpush1.msra.mxu0 %v4240
      %4301 = vmatprep.subr.mxu0 0.0
      %4302 = vmatpush1.msra.mxu0 %v4241
      %4303 = vmatprep.subr.mxu0 0.0
      %4304 = vmatpush1.msra.mxu0 %v4242
      %4305 = vmatprep.subr.mxu0 0.0
      %4306 = vmatpush1.msra.mxu0 %v4243
      %4307 = vmatprep.subr.mxu0 0.0
      %4308 = vmatpush1.msra.mxu0 %v4244
      %4309 = vmatprep.mubr.f32.mxu0 %v4182
      %4310 = vmatmul.mubr.f32.gmra.mrb[0].mxu0 %v4181
      %v4311 = vpop.f32.mrb[0].mxu0
      %v4312 = vadd.f32 0.0, %v4311
      %v4313 = vpop.f32.mrb[0].mxu0
      %4314 = vmatprep.mubr.f32.mxu0 %v4184
      %4315 = vmatmul.mubr.f32.gmra.mrb[0].mxu0 %v4183
      %v4316 = vpop.f32.mrb[0].mxu0
      %v4317 = vadd.f32 0.0, %v4316
      %v4318 = vpop.f32.mrb[0].mxu0
      %4319 = vmatprep.mubr.f32.mxu0 %v4186
      %4320 = vmatmul.mubr.f32.gmra.mrb[0].mxu0 %v4185
      %v4321 = vpop.f32.mrb[0].mxu0
      %v4322 = vadd.f32 0.0, %v4321
      %v4323 = vpop.f32.mrb[0].mxu0
      %4324 = vmatprep.mubr.f32.mxu0 %v4188
      %4325 = vmatmul.mubr.f32.gmra.mrb[0].mxu0 %v4187
      %v4326 = vpop.f32.mrb[0].mxu0
      %v4327 = vadd.f32 0.0, %v4326
      %v4328 = vpop.f32.mrb[0].mxu0
      %4329 = vmatprep.mubr.f32.mxu0 %v4190
      %4330 = vmatmul.mubr.f32.gmra.mrb[0].mxu0 %v4189
      %v4331 = vpop.f32.mrb[0].mxu0
      %v4332 = vadd.f32 0.0, %v4331
      %v4333 = vpop.f32.mrb[0].mxu0
      %4334 = vmatprep.mubr.f32.mxu0 %v4192
      %4335 = vmatmul.mubr.f32.gmra.mrb[0].mxu0 %v4191
      %v4336 = vpop.f32.mrb[0].mxu0
      %v4337 = vadd.f32 0.0, %v4336
      %v4338 = vpop.f32.mrb[0].mxu0
      %4339 = vmatprep.mubr.f32.mxu0 %v4194
      %4340 = vmatmul.mubr.f32.gmra.mrb[0].mxu0 %v4193
      %v4341 = vpop.f32.mrb[0].mxu0
      %v4342 = vadd.f32 0.0, %v4341
      %v4343 = vpop.f32.mrb[0].mxu0
      %4344 = vmatprep.mubr.f32.mxu0 %v4196
      %4345 = vmatmul.mubr.f32.gmra.mrb[0].mxu0 %v4195
      %v4346 = vpop.f32.mrb[0].mxu0
      %v4347 = vadd.f32 0.0, %v4346
      %v4348 = vpop.f32.mrb[0].mxu0
      %4349 = vmatprep.mubr.f32.mxu0 %v4198
      %4350 = vmatmul.mubr.f32.gmra.mrb[0].mxu0 %v4197
      %v4351 = vpop.f32.mrb[0].mxu0
      %v4352 = vadd.f32 0.0, %v4351
      %v4353 = vpop.f32.mrb[0].mxu0
      %4354 = vmatprep.mubr.f32.mxu0 %v4200
      %4355 = vmatmul.mubr.f32.gmra.mrb[0].mxu0 %v4199
      %v4356 = vpop.f32.mrb[0].mxu0
      %v4357 = vadd.f32 0.0, %v4356
      %v4358 = vpop.f32.mrb[0].mxu0
      %4359 = vmatprep.mubr.f32.mxu0 %v4202
      %4360 = vmatmul.mubr.f32.gmra.mrb[0].mxu0 %v4201
      %v4361 = vpop.f32.mrb[0].mxu0
      %v4362 = vadd.f32 0.0, %v4361
      %v4363 = vpop.f32.mrb[0].mxu0
      %4364 = vmatprep.mubr.f32.mxu0 %v4204
      %4365 = vmatmul.mubr.f32.gmra.mrb[0].mxu0 %v4203
      %v4366 = vpop.f32.mrb[0].mxu0
      %v4367 = vadd.f32 0.0, %v4366
      %v4368 = vpop.f32.mrb[0].mxu0
      %4369 = vmatprep.mubr.f32.mxu0 %v4206
      %4370 = vmatmul.mubr.f32.gmra.mrb[0].mxu0 %v4205
      %v4371 = vpop.f32.mrb[0].mxu0
      %v4372 = vadd.f32 0.0, %v4371
      %v4373 = vpop.f32.mrb[0].mxu0
      %4374 = vmatprep.mubr.f32.mxu0 %v4208
      %4375 = vmatmul.mubr.f32.gmra.mrb[0].mxu0 %v4207
      %v4376 = vpop.f32.mrb[0].mxu0
      %v4377 = vadd.f32 0.0, %v4376
      %v4378 = vpop.f32.mrb[0].mxu0
      %4379 = vmatprep.mubr.f32.mxu0 %v4210
      %4380 = vmatmul.mubr.f32.gmra.mrb[0].mxu0 %v4209
      %v4381 = vpop.f32.mrb[0].mxu0
      %v4382 = vadd.f32 0.0, %v4381
      %v4383 = vpop.f32.mrb[0].mxu0
      %4384 = vmatprep.mubr.f32.mxu0 %v4212
      %4385 = vmatmul.mubr.f32.gmra.mrb[0].mxu0 %v4211
      %v4386 = vpop.f32.mrb[0].mxu0
      %v4387 = vadd.f32 0.0, %v4386
      %v4388 = vpop.f32.mrb[0].mxu0
      %4389 = vdwg.mxu0
      %v4390 = vadd.f32 %v3976, %v4312
      %v4391 = vadd.f32 %v3977, %v4317
      %v4392 = vadd.f32 %v3978, %v4322
      %v4393 = vadd.f32 %v3979, %v4327
      %v4394 = vadd.f32 %v3980, %v4332
      %v4395 = vadd.f32 %v3981, %v4337
      %v4396 = vadd.f32 %v3982, %v4342
      %v4397 = vadd.f32 %v3983, %v4347
      %v4398 = vadd.f32 %v3984, %v4352
      %v4399 = vadd.f32 %v3985, %v4357
      %v4400 = vadd.f32 %v3986, %v4362
      %v4401 = vadd.f32 %v3987, %v4367
      %v4402 = vadd.f32 %v3988, %v4372
      %v4403 = vadd.f32 %v3989, %v4377
      %v4404 = vadd.f32 %v3990, %v4382
      %v4405 = vadd.f32 %v3991, %v4387
      %v4406 = vld [vmem:[%s8 + $0x20] sm:$0xff]
      %v4407 = vld [vmem:[%s8 + $0x28] sm:$0xff]
      %v4408 = vld [vmem:[%s8 + $0x60] sm:$0xff]
      %v4409 = vld [vmem:[%s8 + $0x68] sm:$0xff]
      %v4410 = vld [vmem:[%s8 + $0xa0] sm:$0xff]
      %v4411 = vld [vmem:[%s8 + $0xa8] sm:$0xff]
      %v4412 = vld [vmem:[%s8 + $0xe0] sm:$0xff]
      %v4413 = vld [vmem:[%s8 + $0xe8] sm:$0xff]
      %v4414 = vld [vmem:[%s8 + $0x120] sm:$0xff]
      %v4415 = vld [vmem:[%s8 + $0x128] sm:$0xff]
      %v4416 = vld [vmem:[%s8 + $0x160] sm:$0xff]
      %v4417 = vld [vmem:[%s8 + $0x168] sm:$0xff]
      %v4418 = vld [vmem:[%s8 + $0x1a0] sm:$0xff]
      %v4419 = vld [vmem:[%s8 + $0x1a8] sm:$0xff]
      %v4420 = vld [vmem:[%s8 + $0x1e0] sm:$0xff]
      %v4421 = vld [vmem:[%s8 + $0x1e8] sm:$0xff]
      %v4422 = vld [vmem:[%s3 + $0x4] sm:$0x3]
      %v4424 = vlaneseq
      %v4425 = vshrl.u32 %v4424, 7
      %v4426 = vsub.s32 0, %v4425
      %v4427 = vrot.slane %v4422, %v4426
      %v4428 = vlaneseq
      %v4429 = vshrl.u32 %v4428, 7
      %v4430 = vsub.s32 1, %v4429
      %v4431 = vrot.slane %v4422, %v4430
      %4434 = vmatprep.subr.mxu0 %v4407
      %4435 = vmatpush1.msra.mxu0 %v4406
      %4436 = vmatprep.subr.mxu0 %v4409
      %4437 = vmatpush1.msra.mxu0 %v4408
      %4438 = vmatprep.subr.mxu0 %v4411
      %4439 = vmatpush1.msra.mxu0 %v4410
      %4440 = vmatprep.subr.mxu0 %v4413
      %4441 = vmatpush1.msra.mxu0 %v4412
      %4442 = vmatprep.subr.mxu0 %v4415
      %4443 = vmatpush1.msra.mxu0 %v4414
      %4444 = vmatprep.subr.mxu0 %v4417
      %4445 = vmatpush1.msra.mxu0 %v4416
      %4446 = vmatprep.subr.mxu0 %v4419
      %4447 = vmatpush1.msra.mxu0 %v4418
      %4448 = vmatprep.subr.mxu0 %v4421
      %4449 = vmatpush1.msra.mxu0 %v4420
      %4450 = vmatprep.subr.mxu0 0.0
      %4451 = vmatpush1.msra.mxu0 0.0
      %4452 = vmatprep.subr.mxu0 0.0
      %4453 = vmatpush1.msra.mxu0 0.0
      %4454 = vmatprep.subr.mxu0 0.0
      %4455 = vmatpush1.msra.mxu0 0.0
      %4456 = vmatprep.subr.mxu0 0.0
      %4457 = vmatpush1.msra.mxu0 0.0
      %4458 = vmatprep.subr.mxu0 0.0
      %4459 = vmatpush1.msra.mxu0 0.0
      %4460 = vmatprep.subr.mxu0 0.0
      %4461 = vmatpush1.msra.mxu0 0.0
      %4462 = vmatprep.subr.mxu0 0.0
      %4463 = vmatpush1.msra.mxu0 0.0
      %4464 = vmatprep.subr.mxu0 0.0
      %4465 = vmatpush1.msra.mxu0 0.0
      %4466 = vmatprep.subr.mxu0 0.0
      %4467 = vmatpush1.msra.mxu0 0.0
      %4468 = vmatprep.subr.mxu0 0.0
      %4469 = vmatpush1.msra.mxu0 0.0
      %4470 = vmatprep.subr.mxu0 0.0
      %4471 = vmatpush1.msra.mxu0 0.0
      %4472 = vmatprep.subr.mxu0 0.0
      %4473 = vmatpush1.msra.mxu0 0.0
      %4474 = vmatprep.subr.mxu0 0.0
      %4475 = vmatpush1.msra.mxu0 0.0
      %4476 = vmatprep.subr.mxu0 0.0
      %4477 = vmatpush1.msra.mxu0 0.0
      %4478 = vmatprep.subr.mxu0 0.0
      %4479 = vmatpush1.msra.mxu0 0.0
      %4480 = vmatprep.subr.mxu0 0.0
      %4481 = vmatpush1.msra.mxu0 0.0
      %4482 = vmatprep.subr.mxu0 0.0
      %4483 = vmatpush1.msra.mxu0 0.0
      %4484 = vmatprep.subr.mxu0 0.0
      %4485 = vmatpush1.msra.mxu0 0.0
      %4486 = vmatprep.subr.mxu0 0.0
      %4487 = vmatpush1.msra.mxu0 0.0
      %4488 = vmatprep.subr.mxu0 0.0
      %4489 = vmatpush1.msra.mxu0 0.0
      %4490 = vmatprep.subr.mxu0 0.0
      %4491 = vmatpush1.msra.mxu0 0.0
      %4492 = vmatprep.subr.mxu0 0.0
      %4493 = vmatpush1.msra.mxu0 0.0
      %4494 = vmatprep.subr.mxu0 0.0
      %4495 = vmatpush1.msra.mxu0 0.0
      %4496 = vmatprep.subr.mxu0 0.0
      %4497 = vmatpush1.msra.mxu0 0.0
      %4498 = vmatprep.mubr.f32.mxu0 0.0
      %4499 = vmatmul.mubr.f32.gmra.mrb[0].mxu0 %v3555
      %v4500 = vpop.f32.mrb[0].mxu0
      %v4501 = vadd.f32 %v4427, %v4500
      %v4502 = vpop.f32.mrb[0].mxu0
      %v4503 = vadd.f32 %v4431, %v4502
      %4504 = vmatprep.mubr.f32.mxu0 0.0
      %4505 = vmatmul.mubr.f32.gmra.mrb[0].mxu0 %v3558
      %v4506 = vpop.f32.mrb[0].mxu0
      %v4507 = vadd.f32 %v4427, %v4506
      %v4508 = vpop.f32.mrb[0].mxu0
      %v4509 = vadd.f32 %v4431, %v4508
      %4510 = vmatprep.mubr.f32.mxu0 0.0
      %4511 = vmatmul.mubr.f32.gmra.mrb[0].mxu0 %v3561
      %v4512 = vpop.f32.mrb[0].mxu0
      %v4513 = vadd.f32 %v4427, %v4512
      %v4514 = vpop.f32.mrb[0].mxu0
      %v4515 = vadd.f32 %v4431, %v4514
      %4516 = vmatprep.mubr.f32.mxu0 0.0
      %4517 = vmatmul.mubr.f32.gmra.mrb[0].mxu0 %v3564
      %v4518 = vpop.f32.mrb[0].mxu0
      %v4519 = vadd.f32 %v4427, %v4518
      %v4520 = vpop.f32.mrb[0].mxu0
      %v4521 = vadd.f32 %v4431, %v4520
      %4522 = vmatprep.mubr.f32.mxu0 0.0
      %4523 = vmatmul.mubr.f32.gmra.mrb[0].mxu0 %v3567
      %v4524 = vpop.f32.mrb[0].mxu0
      %v4525 = vadd.f32 %v4427, %v4524
      %v4526 = vpop.f32.mrb[0].mxu0
      %v4527 = vadd.f32 %v4431, %v4526
      %4528 = vmatprep.mubr.f32.mxu0 0.0
      %4529 = vmatmul.mubr.f32.gmra.mrb[0].mxu0 %v3570
      %v4530 = vpop.f32.mrb[0].mxu0
      %v4531 = vadd.f32 %v4427, %v4530
      %v4532 = vpop.f32.mrb[0].mxu0
      %v4533 = vadd.f32 %v4431, %v4532
      %4534 = vmatprep.mubr.f32.mxu0 0.0
      %4535 = vmatmul.mubr.f32.gmra.mrb[0].mxu0 %v3573
      %v4536 = vpop.f32.mrb[0].mxu0
      %v4537 = vadd.f32 %v4427, %v4536
      %v4538 = vpop.f32.mrb[0].mxu0
      %v4539 = vadd.f32 %v4431, %v4538
      %4540 = vmatprep.mubr.f32.mxu0 0.0
      %4541 = vmatmul.mubr.f32.gmra.mrb[0].mxu0 %v3576
      %v4542 = vpop.f32.mrb[0].mxu0
      %v4543 = vadd.f32 %v4427, %v4542
      %v4544 = vpop.f32.mrb[0].mxu0
      %v4545 = vadd.f32 %v4431, %v4544
      %4546 = vmatprep.mubr.f32.mxu0 0.0
      %4547 = vmatmul.mubr.f32.gmra.mrb[0].mxu0 %v3579
      %v4548 = vpop.f32.mrb[0].mxu0
      %v4549 = vadd.f32 %v4427, %v4548
      %v4550 = vpop.f32.mrb[0].mxu0
      %v4551 = vadd.f32 %v4431, %v4550
      %4552 = vmatprep.mubr.f32.mxu0 0.0
      %4553 = vmatmul.mubr.f32.gmra.mrb[0].mxu0 %v3582
      %v4554 = vpop.f32.mrb[0].mxu0
      %v4555 = vadd.f32 %v4427, %v4554
      %v4556 = vpop.f32.mrb[0].mxu0
      %v4557 = vadd.f32 %v4431, %v4556
      %4558 = vmatprep.mubr.f32.mxu0 0.0
      %4559 = vmatmul.mubr.f32.gmra.mrb[0].mxu0 %v3585
      %v4560 = vpop.f32.mrb[0].mxu0
      %v4561 = vadd.f32 %v4427, %v4560
      %v4562 = vpop.f32.mrb[0].mxu0
      %v4563 = vadd.f32 %v4431, %v4562
      %4564 = vmatprep.mubr.f32.mxu0 0.0
      %4565 = vmatmul.mubr.f32.gmra.mrb[0].mxu0 %v3588
      %v4566 = vpop.f32.mrb[0].mxu0
      %v4567 = vadd.f32 %v4427, %v4566
      %v4568 = vpop.f32.mrb[0].mxu0
      %v4569 = vadd.f32 %v4431, %v4568
      %4570 = vmatprep.mubr.f32.mxu0 0.0
      %4571 = vmatmul.mubr.f32.gmra.mrb[0].mxu0 %v3591
      %v4572 = vpop.f32.mrb[0].mxu0
      %v4573 = vadd.f32 %v4427, %v4572
      %v4574 = vpop.f32.mrb[0].mxu0
      %v4575 = vadd.f32 %v4431, %v4574
      %4576 = vmatprep.mubr.f32.mxu0 0.0
      %4577 = vmatmul.mubr.f32.gmra.mrb[0].mxu0 %v3594
      %v4578 = vpop.f32.mrb[0].mxu0
      %v4579 = vadd.f32 %v4427, %v4578
      %v4580 = vpop.f32.mrb[0].mxu0
      %v4581 = vadd.f32 %v4431, %v4580
      %4582 = vmatprep.mubr.f32.mxu0 0.0
      %4583 = vmatmul.mubr.f32.gmra.mrb[0].mxu0 %v3597
      %v4584 = vpop.f32.mrb[0].mxu0
      %v4585 = vadd.f32 %v4427, %v4584
      %v4586 = vpop.f32.mrb[0].mxu0
      %v4587 = vadd.f32 %v4431, %v4586
      %4588 = vmatprep.mubr.f32.mxu0 0.0
      %4589 = vmatmul.mubr.f32.gmra.mrb[0].mxu0 %v3600
      %v4590 = vpop.f32.mrb[0].mxu0
      %v4591 = vadd.f32 %v4427, %v4590
      %v4592 = vpop.f32.mrb[0].mxu0
      %v4593 = vadd.f32 %v4431, %v4592
      %4594 = vdwg.mxu0
      %v4595 = vmax.f32 %v4501, 0.0
      %v4596 = vmax.f32 %v4503, 0.0
      %v4597 = vmax.f32 %v4507, 0.0
      %v4598 = vmax.f32 %v4509, 0.0
      %v4599 = vmax.f32 %v4513, 0.0
      %v4600 = vmax.f32 %v4515, 0.0
      %v4601 = vmax.f32 %v4519, 0.0
      %v4602 = vmax.f32 %v4521, 0.0
      %v4603 = vmax.f32 %v4525, 0.0
      %v4604 = vmax.f32 %v4527, 0.0
      %v4605 = vmax.f32 %v4531, 0.0
      %v4606 = vmax.f32 %v4533, 0.0
      %v4607 = vmax.f32 %v4537, 0.0
      %v4608 = vmax.f32 %v4539, 0.0
      %v4609 = vmax.f32 %v4543, 0.0
      %v4610 = vmax.f32 %v4545, 0.0
      %v4611 = vmax.f32 %v4549, 0.0
      %v4612 = vmax.f32 %v4551, 0.0
      %v4613 = vmax.f32 %v4555, 0.0
      %v4614 = vmax.f32 %v4557, 0.0
      %v4615 = vmax.f32 %v4561, 0.0
      %v4616 = vmax.f32 %v4563, 0.0
      %v4617 = vmax.f32 %v4567, 0.0
      %v4618 = vmax.f32 %v4569, 0.0
      %v4619 = vmax.f32 %v4573, 0.0
      %v4620 = vmax.f32 %v4575, 0.0
      %v4621 = vmax.f32 %v4579, 0.0
      %v4622 = vmax.f32 %v4581, 0.0
      %v4623 = vmax.f32 %v4585, 0.0
      %v4624 = vmax.f32 %v4587, 0.0
      %v4625 = vmax.f32 %v4591, 0.0
      %v4626 = vmax.f32 %v4593, 0.0
      %v4627 = vld [vmem:[%s9 + $0x200] sm:$0xff]
      %v4628 = vld [vmem:[%s9 + $0x208] sm:$0xff]
      %v4629 = vld [vmem:[%s9 + $0x210] sm:$0xff]
      %v4630 = vld [vmem:[%s9 + $0x218] sm:$0xff]
      %v4631 = vld [vmem:[%s9 + $0x220] sm:$0xff]
      %v4632 = vld [vmem:[%s9 + $0x228] sm:$0xff]
      %v4633 = vld [vmem:[%s9 + $0x230] sm:$0xff]
      %v4634 = vld [vmem:[%s9 + $0x238] sm:$0xff]
      %v4635 = vld [vmem:[%s9 + $0x240] sm:$0xff]
      %v4636 = vld [vmem:[%s9 + $0x248] sm:$0xff]
      %v4637 = vld [vmem:[%s9 + $0x250] sm:$0xff]
      %v4638 = vld [vmem:[%s9 + $0x258] sm:$0xff]
      %v4639 = vld [vmem:[%s9 + $0x260] sm:$0xff]
      %v4640 = vld [vmem:[%s9 + $0x268] sm:$0xff]
      %v4641 = vld [vmem:[%s9 + $0x270] sm:$0xff]
      %v4642 = vld [vmem:[%s9 + $0x278] sm:$0xff]
      %v4643 = vld [vmem:[%s9 + $0x280] sm:$0xff]
      %v4644 = vld [vmem:[%s9 + $0x288] sm:$0xff]
      %v4645 = vld [vmem:[%s9 + $0x290] sm:$0xff]
      %v4646 = vld [vmem:[%s9 + $0x298] sm:$0xff]
      %v4647 = vld [vmem:[%s9 + $0x2a0] sm:$0xff]
      %v4648 = vld [vmem:[%s9 + $0x2a8] sm:$0xff]
      %v4649 = vld [vmem:[%s9 + $0x2b0] sm:$0xff]
      %v4650 = vld [vmem:[%s9 + $0x2b8] sm:$0xff]
      %v4651 = vld [vmem:[%s9 + $0x2c0] sm:$0xff]
      %v4652 = vld [vmem:[%s9 + $0x2c8] sm:$0xff]
      %v4653 = vld [vmem:[%s9 + $0x2d0] sm:$0xff]
      %v4654 = vld [vmem:[%s9 + $0x2d8] sm:$0xff]
      %v4655 = vld [vmem:[%s9 + $0x2e0] sm:$0xff]
      %v4656 = vld [vmem:[%s9 + $0x2e8] sm:$0xff]
      %v4657 = vld [vmem:[%s9 + $0x2f0] sm:$0xff]
      %v4658 = vld [vmem:[%s9 + $0x2f8] sm:$0xff]
      %4659 = vmatprep.subr.mxu0 0.0
      %4660 = vmatpush1.msra.mxu0 %v4627
      %4661 = vmatprep.subr.mxu0 0.0
      %4662 = vmatpush1.msra.mxu0 %v4628
      %4663 = vmatprep.subr.mxu0 0.0
      %4664 = vmatpush1.msra.mxu0 %v4629
      %4665 = vmatprep.subr.mxu0 0.0
      %4666 = vmatpush1.msra.mxu0 %v4630
      %4667 = vmatprep.subr.mxu0 0.0
      %4668 = vmatpush1.msra.mxu0 %v4631
      %4669 = vmatprep.subr.mxu0 0.0
      %4670 = vmatpush1.msra.mxu0 %v4632
      %4671 = vmatprep.subr.mxu0 0.0
      %4672 = vmatpush1.msra.mxu0 %v4633
      %4673 = vmatprep.subr.mxu0 0.0
      %4674 = vmatpush1.msra.mxu0 %v4634
      %4675 = vmatprep.subr.mxu0 0.0
      %4676 = vmatpush1.msra.mxu0 %v4635
      %4677 = vmatprep.subr.mxu0 0.0
      %4678 = vmatpush1.msra.mxu0 %v4636
      %4679 = vmatprep.subr.mxu0 0.0
      %4680 = vmatpush1.msra.mxu0 %v4637
      %4681 = vmatprep.subr.mxu0 0.0
      %4682 = vmatpush1.msra.mxu0 %v4638
      %4683 = vmatprep.subr.mxu0 0.0
      %4684 = vmatpush1.msra.mxu0 %v4639
      %4685 = vmatprep.subr.mxu0 0.0
      %4686 = vmatpush1.msra.mxu0 %v4640
      %4687 = vmatprep.subr.mxu0 0.0
      %4688 = vmatpush1.msra.mxu0 %v4641
      %4689 = vmatprep.subr.mxu0 0.0
      %4690 = vmatpush1.msra.mxu0 %v4642
      %4691 = vmatprep.subr.mxu0 0.0
      %4692 = vmatpush1.msra.mxu0 %v4643
      %4693 = vmatprep.subr.mxu0 0.0
      %4694 = vmatpush1.msra.mxu0 %v4644
      %4695 = vmatprep.subr.mxu0 0.0
      %4696 = vmatpush1.msra.mxu0 %v4645
      %4697 = vmatprep.subr.mxu0 0.0
      %4698 = vmatpush1.msra.mxu0 %v4646
      %4699 = vmatprep.subr.mxu0 0.0
      %4700 = vmatpush1.msra.mxu0 %v4647
      %4701 = vmatprep.subr.mxu0 0.0
      %4702 = vmatpush1.msra.mxu0 %v4648
      %4703 = vmatprep.subr.mxu0 0.0
      %4704 = vmatpush1.msra.mxu0 %v4649
      %4705 = vmatprep.subr.mxu0 0.0
      %4706 = vmatpush1.msra.mxu0 %v4650
      %4707 = vmatprep.subr.mxu0 0.0
      %4708 = vmatpush1.msra.mxu0 %v4651
      %4709 = vmatprep.subr.mxu0 0.0
      %4710 = vmatpush1.msra.mxu0 %v4652
      %4711 = vmatprep.subr.mxu0 0.0
      %4712 = vmatpush1.msra.mxu0 %v4653
      %4713 = vmatprep.subr.mxu0 0.0
      %4714 = vmatpush1.msra.mxu0 %v4654
      %4715 = vmatprep.subr.mxu0 0.0
      %4716 = vmatpush1.msra.mxu0 %v4655
      %4717 = vmatprep.subr.mxu0 0.0
      %4718 = vmatpush1.msra.mxu0 %v4656
      %4719 = vmatprep.subr.mxu0 0.0
      %4720 = vmatpush1.msra.mxu0 %v4657
      %4721 = vmatprep.subr.mxu0 0.0
      %4722 = vmatpush1.msra.mxu0 %v4658
      %4723 = vmatprep.mubr.f32.mxu0 %v4596
      %4724 = vmatmul.mubr.f32.gmra.mrb[0].mxu0 %v4595
      %v4725 = vpop.f32.mrb[0].mxu0
      %v4726 = vadd.f32 0.0, %v4725
      %v4727 = vpop.f32.mrb[0].mxu0
      %4728 = vmatprep.mubr.f32.mxu0 %v4598
      %4729 = vmatmul.mubr.f32.gmra.mrb[0].mxu0 %v4597
      %v4730 = vpop.f32.mrb[0].mxu0
      %v4731 = vadd.f32 0.0, %v4730
      %v4732 = vpop.f32.mrb[0].mxu0
      %4733 = vmatprep.mubr.f32.mxu0 %v4600
      %4734 = vmatmul.mubr.f32.gmra.mrb[0].mxu0 %v4599
      %v4735 = vpop.f32.mrb[0].mxu0
      %v4736 = vadd.f32 0.0, %v4735
      %v4737 = vpop.f32.mrb[0].mxu0
      %4738 = vmatprep.mubr.f32.mxu0 %v4602
      %4739 = vmatmul.mubr.f32.gmra.mrb[0].mxu0 %v4601
      %v4740 = vpop.f32.mrb[0].mxu0
      %v4741 = vadd.f32 0.0, %v4740
      %v4742 = vpop.f32.mrb[0].mxu0
      %4743 = vmatprep.mubr.f32.mxu0 %v4604
      %4744 = vmatmul.mubr.f32.gmra.mrb[0].mxu0 %v4603
      %v4745 = vpop.f32.mrb[0].mxu0
      %v4746 = vadd.f32 0.0, %v4745
      %v4747 = vpop.f32.mrb[0].mxu0
      %4748 = vmatprep.mubr.f32.mxu0 %v4606
      %4749 = vmatmul.mubr.f32.gmra.mrb[0].mxu0 %v4605
      %v4750 = vpop.f32.mrb[0].mxu0
      %v4751 = vadd.f32 0.0, %v4750
      %v4752 = vpop.f32.mrb[0].mxu0
      %4753 = vmatprep.mubr.f32.mxu0 %v4608
      %4754 = vmatmul.mubr.f32.gmra.mrb[0].mxu0 %v4607
      %v4755 = vpop.f32.mrb[0].mxu0
      %v4756 = vadd.f32 0.0, %v4755
      %v4757 = vpop.f32.mrb[0].mxu0
      %4758 = vmatprep.mubr.f32.mxu0 %v4610
      %4759 = vmatmul.mubr.f32.gmra.mrb[0].mxu0 %v4609
      %v4760 = vpop.f32.mrb[0].mxu0
      %v4761 = vadd.f32 0.0, %v4760
      %v4762 = vpop.f32.mrb[0].mxu0
      %4763 = vmatprep.mubr.f32.mxu0 %v4612
      %4764 = vmatmul.mubr.f32.gmra.mrb[0].mxu0 %v4611
      %v4765 = vpop.f32.mrb[0].mxu0
      %v4766 = vadd.f32 0.0, %v4765
      %v4767 = vpop.f32.mrb[0].mxu0
      %4768 = vmatprep.mubr.f32.mxu0 %v4614
      %4769 = vmatmul.mubr.f32.gmra.mrb[0].mxu0 %v4613
      %v4770 = vpop.f32.mrb[0].mxu0
      %v4771 = vadd.f32 0.0, %v4770
      %v4772 = vpop.f32.mrb[0].mxu0
      %4773 = vmatprep.mubr.f32.mxu0 %v4616
      %4774 = vmatmul.mubr.f32.gmra.mrb[0].mxu0 %v4615
      %v4775 = vpop.f32.mrb[0].mxu0
      %v4776 = vadd.f32 0.0, %v4775
      %v4777 = vpop.f32.mrb[0].mxu0
      %4778 = vmatprep.mubr.f32.mxu0 %v4618
      %4779 = vmatmul.mubr.f32.gmra.mrb[0].mxu0 %v4617
      %v4780 = vpop.f32.mrb[0].mxu0
      %v4781 = vadd.f32 0.0, %v4780
      %v4782 = vpop.f32.mrb[0].mxu0
      %4783 = vmatprep.mubr.f32.mxu0 %v4620
      %4784 = vmatmul.mubr.f32.gmra.mrb[0].mxu0 %v4619
      %v4785 = vpop.f32.mrb[0].mxu0
      %v4786 = vadd.f32 0.0, %v4785
      %v4787 = vpop.f32.mrb[0].mxu0
      %4788 = vmatprep.mubr.f32.mxu0 %v4622
      %4789 = vmatmul.mubr.f32.gmra.mrb[0].mxu0 %v4621
      %v4790 = vpop.f32.mrb[0].mxu0
      %v4791 = vadd.f32 0.0, %v4790
      %v4792 = vpop.f32.mrb[0].mxu0
      %4793 = vmatprep.mubr.f32.mxu0 %v4624
      %4794 = vmatmul.mubr.f32.gmra.mrb[0].mxu0 %v4623
      %v4795 = vpop.f32.mrb[0].mxu0
      %v4796 = vadd.f32 0.0, %v4795
      %v4797 = vpop.f32.mrb[0].mxu0
      %4798 = vmatprep.mubr.f32.mxu0 %v4626
      %4799 = vmatmul.mubr.f32.gmra.mrb[0].mxu0 %v4625
      %v4800 = vpop.f32.mrb[0].mxu0
      %v4801 = vadd.f32 0.0, %v4800
      %v4802 = vpop.f32.mrb[0].mxu0
      %4803 = vdwg.mxu0
      %v4804 = vadd.f32 %v4390, %v4726
      %v4805 = vadd.f32 %v4391, %v4731
      %v4806 = vadd.f32 %v4392, %v4736
      %v4807 = vadd.f32 %v4393, %v4741
      %v4808 = vadd.f32 %v4394, %v4746
      %v4809 = vadd.f32 %v4395, %v4751
      %v4810 = vadd.f32 %v4396, %v4756
      %v4811 = vadd.f32 %v4397, %v4761
      %v4812 = vadd.f32 %v4398, %v4766
      %v4813 = vadd.f32 %v4399, %v4771
      %v4814 = vadd.f32 %v4400, %v4776
      %v4815 = vadd.f32 %v4401, %v4781
      %v4816 = vadd.f32 %v4402, %v4786
      %v4817 = vadd.f32 %v4403, %v4791
      %v4818 = vadd.f32 %v4404, %v4796
      %v4819 = vadd.f32 %v4405, %v4801
      %v4820 = vld [vmem:[%s8 + $0x30] sm:$0xff]
      %v4821 = vld [vmem:[%s8 + $0x38] sm:$0xff]
      %v4822 = vld [vmem:[%s8 + $0x70] sm:$0xff]
      %v4823 = vld [vmem:[%s8 + $0x78] sm:$0xff]
      %v4824 = vld [vmem:[%s8 + $0xb0] sm:$0xff]
      %v4825 = vld [vmem:[%s8 + $0xb8] sm:$0xff]
      %v4826 = vld [vmem:[%s8 + $0xf0] sm:$0xff]
      %v4827 = vld [vmem:[%s8 + $0xf8] sm:$0xff]
      %v4828 = vld [vmem:[%s8 + $0x130] sm:$0xff]
      %v4829 = vld [vmem:[%s8 + $0x138] sm:$0xff]
      %v4830 = vld [vmem:[%s8 + $0x170] sm:$0xff]
      %v4831 = vld [vmem:[%s8 + $0x178] sm:$0xff]
      %v4832 = vld [vmem:[%s8 + $0x1b0] sm:$0xff]
      %v4833 = vld [vmem:[%s8 + $0x1b8] sm:$0xff]
      %v4834 = vld [vmem:[%s8 + $0x1f0] sm:$0xff]
      %v4835 = vld [vmem:[%s8 + $0x1f8] sm:$0xff]
      %v4836 = vld [vmem:[%s3 + $0x6] sm:$0x3]
      %v4838 = vlaneseq
      %v4839 = vshrl.u32 %v4838, 7
      %v4840 = vsub.s32 0, %v4839
      %v4841 = vrot.slane %v4836, %v4840
      %v4842 = vlaneseq
      %v4843 = vshrl.u32 %v4842, 7
      %v4844 = vsub.s32 1, %v4843
      %v4845 = vrot.slane %v4836, %v4844
      %4848 = vmatprep.subr.mxu0 %v4821
      %4849 = vmatpush1.msra.mxu0 %v4820
      %4850 = vmatprep.subr.mxu0 %v4823
      %4851 = vmatpush1.msra.mxu0 %v4822
      %4852 = vmatprep.subr.mxu0 %v4825
      %4853 = vmatpush1.msra.mxu0 %v4824
      %4854 = vmatprep.subr.mxu0 %v4827
      %4855 = vmatpush1.msra.mxu0 %v4826
      %4856 = vmatprep.subr.mxu0 %v4829
      %4857 = vmatpush1.msra.mxu0 %v4828
      %4858 = vmatprep.subr.mxu0 %v4831
      %4859 = vmatpush1.msra.mxu0 %v4830
      %4860 = vmatprep.subr.mxu0 %v4833
      %4861 = vmatpush1.msra.mxu0 %v4832
      %4862 = vmatprep.subr.mxu0 %v4835
      %4863 = vmatpush1.msra.mxu0 %v4834
      %4864 = vmatprep.subr.mxu0 0.0
      %4865 = vmatpush1.msra.mxu0 0.0
      %4866 = vmatprep.subr.mxu0 0.0
      %4867 = vmatpush1.msra.mxu0 0.0
      %4868 = vmatprep.subr.mxu0 0.0
      %4869 = vmatpush1.msra.mxu0 0.0
      %4870 = vmatprep.subr.mxu0 0.0
      %4871 = vmatpush1.msra.mxu0 0.0
      %4872 = vmatprep.subr.mxu0 0.0
      %4873 = vmatpush1.msra.mxu0 0.0
      %4874 = vmatprep.subr.mxu0 0.0
      %4875 = vmatpush1.msra.mxu0 0.0
      %4876 = vmatprep.subr.mxu0 0.0
      %4877 = vmatpush1.msra.mxu0 0.0
      %4878 = vmatprep.subr.mxu0 0.0
      %4879 = vmatpush1.msra.mxu0 0.0
      %4880 = vmatprep.subr.mxu0 0.0
      %4881 = vmatpush1.msra.mxu0 0.0
      %4882 = vmatprep.subr.mxu0 0.0
      %4883 = vmatpush1.msra.mxu0 0.0
      %4884 = vmatprep.subr.mxu0 0.0
      %4885 = vmatpush1.msra.mxu0 0.0
      %4886 = vmatprep.subr.mxu0 0.0
      %4887 = vmatpush1.msra.mxu0 0.0
      %4888 = vmatprep.subr.mxu0 0.0
      %4889 = vmatpush1.msra.mxu0 0.0
      %4890 = vmatprep.subr.mxu0 0.0
      %4891 = vmatpush1.msra.mxu0 0.0
      %4892 = vmatprep.subr.mxu0 0.0
      %4893 = vmatpush1.msra.mxu0 0.0
      %4894 = vmatprep.subr.mxu0 0.0
      %4895 = vmatpush1.msra.mxu0 0.0
      %4896 = vmatprep.subr.mxu0 0.0
      %4897 = vmatpush1.msra.mxu0 0.0
      %4898 = vmatprep.subr.mxu0 0.0
      %4899 = vmatpush1.msra.mxu0 0.0
      %4900 = vmatprep.subr.mxu0 0.0
      %4901 = vmatpush1.msra.mxu0 0.0
      %4902 = vmatprep.subr.mxu0 0.0
      %4903 = vmatpush1.msra.mxu0 0.0
      %4904 = vmatprep.subr.mxu0 0.0
      %4905 = vmatpush1.msra.mxu0 0.0
      %4906 = vmatprep.subr.mxu0 0.0
      %4907 = vmatpush1.msra.mxu0 0.0
      %4908 = vmatprep.subr.mxu0 0.0
      %4909 = vmatpush1.msra.mxu0 0.0
      %4910 = vmatprep.subr.mxu0 0.0
      %4911 = vmatpush1.msra.mxu0 0.0
      %4912 = vmatprep.mubr.f32.mxu0 0.0
      %4913 = vmatmul.mubr.f32.gmra.mrb[0].mxu0 %v3555
      %v4914 = vpop.f32.mrb[0].mxu0
      %v4915 = vadd.f32 %v4841, %v4914
      %v4916 = vpop.f32.mrb[0].mxu0
      %v4917 = vadd.f32 %v4845, %v4916
      %4918 = vmatprep.mubr.f32.mxu0 0.0
      %4919 = vmatmul.mubr.f32.gmra.mrb[0].mxu0 %v3558
      %v4920 = vpop.f32.mrb[0].mxu0
      %v4921 = vadd.f32 %v4841, %v4920
      %v4922 = vpop.f32.mrb[0].mxu0
      %v4923 = vadd.f32 %v4845, %v4922
      %4924 = vmatprep.mubr.f32.mxu0 0.0
      %4925 = vmatmul.mubr.f32.gmra.mrb[0].mxu0 %v3561
      %v4926 = vpop.f32.mrb[0].mxu0
      %v4927 = vadd.f32 %v4841, %v4926
      %v4928 = vpop.f32.mrb[0].mxu0
      %v4929 = vadd.f32 %v4845, %v4928
      %4930 = vmatprep.mubr.f32.mxu0 0.0
      %4931 = vmatmul.mubr.f32.gmra.mrb[0].mxu0 %v3564
      %v4932 = vpop.f32.mrb[0].mxu0
      %v4933 = vadd.f32 %v4841, %v4932
      %v4934 = vpop.f32.mrb[0].mxu0
      %v4935 = vadd.f32 %v4845, %v4934
      %4936 = vmatprep.mubr.f32.mxu0 0.0
      %4937 = vmatmul.mubr.f32.gmra.mrb[0].mxu0 %v3567
      %v4938 = vpop.f32.mrb[0].mxu0
      %v4939 = vadd.f32 %v4841, %v4938
      %v4940 = vpop.f32.mrb[0].mxu0
      %v4941 = vadd.f32 %v4845, %v4940
      %4942 = vmatprep.mubr.f32.mxu0 0.0
      %4943 = vmatmul.mubr.f32.gmra.mrb[0].mxu0 %v3570
      %v4944 = vpop.f32.mrb[0].mxu0
      %v4945 = vadd.f32 %v4841, %v4944
      %v4946 = vpop.f32.mrb[0].mxu0
      %v4947 = vadd.f32 %v4845, %v4946
      %4948 = vmatprep.mubr.f32.mxu0 0.0
      %4949 = vmatmul.mubr.f32.gmra.mrb[0].mxu0 %v3573
      %v4950 = vpop.f32.mrb[0].mxu0
      %v4951 = vadd.f32 %v4841, %v4950
      %v4952 = vpop.f32.mrb[0].mxu0
      %v4953 = vadd.f32 %v4845, %v4952
      %4954 = vmatprep.mubr.f32.mxu0 0.0
      %4955 = vmatmul.mubr.f32.gmra.mrb[0].mxu0 %v3576
      %v4956 = vpop.f32.mrb[0].mxu0
      %v4957 = vadd.f32 %v4841, %v4956
      %v4958 = vpop.f32.mrb[0].mxu0
      %v4959 = vadd.f32 %v4845, %v4958
      %4960 = vmatprep.mubr.f32.mxu0 0.0
      %4961 = vmatmul.mubr.f32.gmra.mrb[0].mxu0 %v3579
      %v4962 = vpop.f32.mrb[0].mxu0
      %v4963 = vadd.f32 %v4841, %v4962
      %v4964 = vpop.f32.mrb[0].mxu0
      %v4965 = vadd.f32 %v4845, %v4964
      %4966 = vmatprep.mubr.f32.mxu0 0.0
      %4967 = vmatmul.mubr.f32.gmra.mrb[0].mxu0 %v3582
      %v4968 = vpop.f32.mrb[0].mxu0
      %v4969 = vadd.f32 %v4841, %v4968
      %v4970 = vpop.f32.mrb[0].mxu0
      %v4971 = vadd.f32 %v4845, %v4970
      %4972 = vmatprep.mubr.f32.mxu0 0.0
      %4973 = vmatmul.mubr.f32.gmra.mrb[0].mxu0 %v3585
      %v4974 = vpop.f32.mrb[0].mxu0
      %v4975 = vadd.f32 %v4841, %v4974
      %v4976 = vpop.f32.mrb[0].mxu0
      %v4977 = vadd.f32 %v4845, %v4976
      %4978 = vmatprep.mubr.f32.mxu0 0.0
      %4979 = vmatmul.mubr.f32.gmra.mrb[0].mxu0 %v3588
      %v4980 = vpop.f32.mrb[0].mxu0
      %v4981 = vadd.f32 %v4841, %v4980
      %v4982 = vpop.f32.mrb[0].mxu0
      %v4983 = vadd.f32 %v4845, %v4982
      %4984 = vmatprep.mubr.f32.mxu0 0.0
      %4985 = vmatmul.mubr.f32.gmra.mrb[0].mxu0 %v3591
      %v4986 = vpop.f32.mrb[0].mxu0
      %v4987 = vadd.f32 %v4841, %v4986
      %v4988 = vpop.f32.mrb[0].mxu0
      %v4989 = vadd.f32 %v4845, %v4988
      %4990 = vmatprep.mubr.f32.mxu0 0.0
      %4991 = vmatmul.mubr.f32.gmra.mrb[0].mxu0 %v3594
      %v4992 = vpop.f32.mrb[0].mxu0
      %v4993 = vadd.f32 %v4841, %v4992
      %v4994 = vpop.f32.mrb[0].mxu0
      %v4995 = vadd.f32 %v4845, %v4994
      %4996 = vmatprep.mubr.f32.mxu0 0.0
      %4997 = vmatmul.mubr.f32.gmra.mrb[0].mxu0 %v3597
      %v4998 = vpop.f32.mrb[0].mxu0
      %v4999 = vadd.f32 %v4841, %v4998
      %v5000 = vpop.f32.mrb[0].mxu0
      %v5001 = vadd.f32 %v4845, %v5000
      %5002 = vmatprep.mubr.f32.mxu0 0.0
      %5003 = vmatmul.mubr.f32.gmra.mrb[0].mxu0 %v3600
      %v5004 = vpop.f32.mrb[0].mxu0
      %v5005 = vadd.f32 %v4841, %v5004
      %v5006 = vpop.f32.mrb[0].mxu0
      %v5007 = vadd.f32 %v4845, %v5006
      %5008 = vdwg.mxu0
      %v5009 = vmax.f32 %v4915, 0.0
      %v5010 = vmax.f32 %v4917, 0.0
      %v5011 = vmax.f32 %v4921, 0.0
      %v5012 = vmax.f32 %v4923, 0.0
      %v5013 = vmax.f32 %v4927, 0.0
      %v5014 = vmax.f32 %v4929, 0.0
      %v5015 = vmax.f32 %v4933, 0.0
      %v5016 = vmax.f32 %v4935, 0.0
      %v5017 = vmax.f32 %v4939, 0.0
      %v5018 = vmax.f32 %v4941, 0.0
      %v5019 = vmax.f32 %v4945, 0.0
      %v5020 = vmax.f32 %v4947, 0.0
      %v5021 = vmax.f32 %v4951, 0.0
      %v5022 = vmax.f32 %v4953, 0.0
      %v5023 = vmax.f32 %v4957, 0.0
      %v5024 = vmax.f32 %v4959, 0.0
      %v5025 = vmax.f32 %v4963, 0.0
      %v5026 = vmax.f32 %v4965, 0.0
      %v5027 = vmax.f32 %v4969, 0.0
      %v5028 = vmax.f32 %v4971, 0.0
      %v5029 = vmax.f32 %v4975, 0.0
      %v5030 = vmax.f32 %v4977, 0.0
      %v5031 = vmax.f32 %v4981, 0.0
      %v5032 = vmax.f32 %v4983, 0.0
      %v5033 = vmax.f32 %v4987, 0.0
      %v5034 = vmax.f32 %v4989, 0.0
      %v5035 = vmax.f32 %v4993, 0.0
      %v5036 = vmax.f32 %v4995, 0.0
      %v5037 = vmax.f32 %v4999, 0.0
      %v5038 = vmax.f32 %v5001, 0.0
      %v5039 = vmax.f32 %v5005, 0.0
      %v5040 = vmax.f32 %v5007, 0.0
      %v5041 = vld [vmem:[%s9 + $0x300] sm:$0xff]
      %v5042 = vld [vmem:[%s9 + $0x308] sm:$0xff]
      %v5043 = vld [vmem:[%s9 + $0x310] sm:$0xff]
      %v5044 = vld [vmem:[%s9 + $0x318] sm:$0xff]
      %v5045 = vld [vmem:[%s9 + $0x320] sm:$0xff]
      %v5046 = vld [vmem:[%s9 + $0x328] sm:$0xff]
      %v5047 = vld [vmem:[%s9 + $0x330] sm:$0xff]
      %v5048 = vld [vmem:[%s9 + $0x338] sm:$0xff]
      %v5049 = vld [vmem:[%s9 + $0x340] sm:$0xff]
      %v5050 = vld [vmem:[%s9 + $0x348] sm:$0xff]
      %v5051 = vld [vmem:[%s9 + $0x350] sm:$0xff]
      %v5052 = vld [vmem:[%s9 + $0x358] sm:$0xff]
      %v5053 = vld [vmem:[%s9 + $0x360] sm:$0xff]
      %v5054 = vld [vmem:[%s9 + $0x368] sm:$0xff]
      %v5055 = vld [vmem:[%s9 + $0x370] sm:$0xff]
      %v5056 = vld [vmem:[%s9 + $0x378] sm:$0xff]
      %v5057 = vld [vmem:[%s9 + $0x380] sm:$0xff]
      %v5058 = vld [vmem:[%s9 + $0x388] sm:$0xff]
      %v5059 = vld [vmem:[%s9 + $0x390] sm:$0xff]
      %v5060 = vld [vmem:[%s9 + $0x398] sm:$0xff]
      %v5061 = vld [vmem:[%s9 + $0x3a0] sm:$0xff]
      %v5062 = vld [vmem:[%s9 + $0x3a8] sm:$0xff]
      %v5063 = vld [vmem:[%s9 + $0x3b0] sm:$0xff]
      %v5064 = vld [vmem:[%s9 + $0x3b8] sm:$0xff]
      %v5065 = vld [vmem:[%s9 + $0x3c0] sm:$0xff]
      %v5066 = vld [vmem:[%s9 + $0x3c8] sm:$0xff]
      %v5067 = vld [vmem:[%s9 + $0x3d0] sm:$0xff]
      %v5068 = vld [vmem:[%s9 + $0x3d8] sm:$0xff]
      %v5069 = vld [vmem:[%s9 + $0x3e0] sm:$0xff]
      %v5070 = vld [vmem:[%s9 + $0x3e8] sm:$0xff]
      %v5071 = vld [vmem:[%s9 + $0x3f0] sm:$0xff]
      %v5072 = vld [vmem:[%s9 + $0x3f8] sm:$0xff]
      %5073 = vmatprep.subr.mxu0 0.0
      %5074 = vmatpush1.msra.mxu0 %v5041
      %5075 = vmatprep.subr.mxu0 0.0
      %5076 = vmatpush1.msra.mxu0 %v5042
      %5077 = vmatprep.subr.mxu0 0.0
      %5078 = vmatpush1.msra.mxu0 %v5043
      %5079 = vmatprep.subr.mxu0 0.0
      %5080 = vmatpush1.msra.mxu0 %v5044
      %5081 = vmatprep.subr.mxu0 0.0
      %5082 = vmatpush1.msra.mxu0 %v5045
      %5083 = vmatprep.subr.mxu0 0.0
      %5084 = vmatpush1.msra.mxu0 %v5046
      %5085 = vmatprep.subr.mxu0 0.0
      %5086 = vmatpush1.msra.mxu0 %v5047
      %5087 = vmatprep.subr.mxu0 0.0
      %5088 = vmatpush1.msra.mxu0 %v5048
      %5089 = vmatprep.subr.mxu0 0.0
      %5090 = vmatpush1.msra.mxu0 %v5049
      %5091 = vmatprep.subr.mxu0 0.0
      %5092 = vmatpush1.msra.mxu0 %v5050
      %5093 = vmatprep.subr.mxu0 0.0
      %5094 = vmatpush1.msra.mxu0 %v5051
      %5095 = vmatprep.subr.mxu0 0.0
      %5096 = vmatpush1.msra.mxu0 %v5052
      %5097 = vmatprep.subr.mxu0 0.0
      %5098 = vmatpush1.msra.mxu0 %v5053
      %5099 = vmatprep.subr.mxu0 0.0
      %5100 = vmatpush1.msra.mxu0 %v5054
      %5101 = vmatprep.subr.mxu0 0.0
      %5102 = vmatpush1.msra.mxu0 %v5055
      %5103 = vmatprep.subr.mxu0 0.0
      %5104 = vmatpush1.msra.mxu0 %v5056
      %5105 = vmatprep.subr.mxu0 0.0
      %5106 = vmatpush1.msra.mxu0 %v5057
      %5107 = vmatprep.subr.mxu0 0.0
      %5108 = vmatpush1.msra.mxu0 %v5058
      %5109 = vmatprep.subr.mxu0 0.0
      %5110 = vmatpush1.msra.mxu0 %v5059
      %5111 = vmatprep.subr.mxu0 0.0
      %5112 = vmatpush1.msra.mxu0 %v5060
      %5113 = vmatprep.subr.mxu0 0.0
      %5114 = vmatpush1.msra.mxu0 %v5061
      %5115 = vmatprep.subr.mxu0 0.0
      %5116 = vmatpush1.msra.mxu0 %v5062
      %5117 = vmatprep.subr.mxu0 0.0
      %5118 = vmatpush1.msra.mxu0 %v5063
      %5119 = vmatprep.subr.mxu0 0.0
      %5120 = vmatpush1.msra.mxu0 %v5064
      %5121 = vmatprep.subr.mxu0 0.0
      %5122 = vmatpush1.msra.mxu0 %v5065
      %5123 = vmatprep.subr.mxu0 0.0
      %5124 = vmatpush1.msra.mxu0 %v5066
      %5125 = vmatprep.subr.mxu0 0.0
      %5126 = vmatpush1.msra.mxu0 %v5067
      %5127 = vmatprep.subr.mxu0 0.0
      %5128 = vmatpush1.msra.mxu0 %v5068
      %5129 = vmatprep.subr.mxu0 0.0
      %5130 = vmatpush1.msra.mxu0 %v5069
      %5131 = vmatprep.subr.mxu0 0.0
      %5132 = vmatpush1.msra.mxu0 %v5070
      %5133 = vmatprep.subr.mxu0 0.0
      %5134 = vmatpush1.msra.mxu0 %v5071
      %5135 = vmatprep.subr.mxu0 0.0
      %5136 = vmatpush1.msra.mxu0 %v5072
      %5137 = vmatprep.mubr.f32.mxu0 %v5010
      %5138 = vmatmul.mubr.f32.gmra.mrb[0].mxu0 %v5009
      %v5139 = vpop.f32.mrb[0].mxu0
      %v5140 = vadd.f32 0.0, %v5139
      %v5141 = vpop.f32.mrb[0].mxu0
      %5142 = vmatprep.mubr.f32.mxu0 %v5012
      %5143 = vmatmul.mubr.f32.gmra.mrb[0].mxu0 %v5011
      %v5144 = vpop.f32.mrb[0].mxu0
      %v5145 = vadd.f32 0.0, %v5144
      %v5146 = vpop.f32.mrb[0].mxu0
      %5147 = vmatprep.mubr.f32.mxu0 %v5014
      %5148 = vmatmul.mubr.f32.gmra.mrb[0].mxu0 %v5013
      %v5149 = vpop.f32.mrb[0].mxu0
      %v5150 = vadd.f32 0.0, %v5149
      %v5151 = vpop.f32.mrb[0].mxu0
      %5152 = vmatprep.mubr.f32.mxu0 %v5016
      %5153 = vmatmul.mubr.f32.gmra.mrb[0].mxu0 %v5015
      %v5154 = vpop.f32.mrb[0].mxu0
      %v5155 = vadd.f32 0.0, %v5154
      %v5156 = vpop.f32.mrb[0].mxu0
      %5157 = vmatprep.mubr.f32.mxu0 %v5018
      %5158 = vmatmul.mubr.f32.gmra.mrb[0].mxu0 %v5017
      %v5159 = vpop.f32.mrb[0].mxu0
      %v5160 = vadd.f32 0.0, %v5159
      %v5161 = vpop.f32.mrb[0].mxu0
      %5162 = vmatprep.mubr.f32.mxu0 %v5020
      %5163 = vmatmul.mubr.f32.gmra.mrb[0].mxu0 %v5019
      %v5164 = vpop.f32.mrb[0].mxu0
      %v5165 = vadd.f32 0.0, %v5164
      %v5166 = vpop.f32.mrb[0].mxu0
      %5167 = vmatprep.mubr.f32.mxu0 %v5022
      %5168 = vmatmul.mubr.f32.gmra.mrb[0].mxu0 %v5021
      %v5169 = vpop.f32.mrb[0].mxu0
      %v5170 = vadd.f32 0.0, %v5169
      %v5171 = vpop.f32.mrb[0].mxu0
      %5172 = vmatprep.mubr.f32.mxu0 %v5024
      %5173 = vmatmul.mubr.f32.gmra.mrb[0].mxu0 %v5023
      %v5174 = vpop.f32.mrb[0].mxu0
      %v5175 = vadd.f32 0.0, %v5174
      %v5176 = vpop.f32.mrb[0].mxu0
      %5177 = vmatprep.mubr.f32.mxu0 %v5026
      %5178 = vmatmul.mubr.f32.gmra.mrb[0].mxu0 %v5025
      %v5179 = vpop.f32.mrb[0].mxu0
      %v5180 = vadd.f32 0.0, %v5179
      %v5181 = vpop.f32.mrb[0].mxu0
      %5182 = vmatprep.mubr.f32.mxu0 %v5028
      %5183 = vmatmul.mubr.f32.gmra.mrb[0].mxu0 %v5027
      %v5184 = vpop.f32.mrb[0].mxu0
      %v5185 = vadd.f32 0.0, %v5184
      %v5186 = vpop.f32.mrb[0].mxu0
      %5187 = vmatprep.mubr.f32.mxu0 %v5030
      %5188 = vmatmul.mubr.f32.gmra.mrb[0].mxu0 %v5029
      %v5189 = vpop.f32.mrb[0].mxu0
      %v5190 = vadd.f32 0.0, %v5189
      %v5191 = vpop.f32.mrb[0].mxu0
      %5192 = vmatprep.mubr.f32.mxu0 %v5032
      %5193 = vmatmul.mubr.f32.gmra.mrb[0].mxu0 %v5031
      %v5194 = vpop.f32.mrb[0].mxu0
      %v5195 = vadd.f32 0.0, %v5194
      %v5196 = vpop.f32.mrb[0].mxu0
      %5197 = vmatprep.mubr.f32.mxu0 %v5034
      %5198 = vmatmul.mubr.f32.gmra.mrb[0].mxu0 %v5033
      %v5199 = vpop.f32.mrb[0].mxu0
      %v5200 = vadd.f32 0.0, %v5199
      %v5201 = vpop.f32.mrb[0].mxu0
      %5202 = vmatprep.mubr.f32.mxu0 %v5036
      %5203 = vmatmul.mubr.f32.gmra.mrb[0].mxu0 %v5035
      %v5204 = vpop.f32.mrb[0].mxu0
      %v5205 = vadd.f32 0.0, %v5204
      %v5206 = vpop.f32.mrb[0].mxu0
      %5207 = vmatprep.mubr.f32.mxu0 %v5038
      %5208 = vmatmul.mubr.f32.gmra.mrb[0].mxu0 %v5037
      %v5209 = vpop.f32.mrb[0].mxu0
      %v5210 = vadd.f32 0.0, %v5209
      %v5211 = vpop.f32.mrb[0].mxu0
      %5212 = vmatprep.mubr.f32.mxu0 %v5040
      %5213 = vmatmul.mubr.f32.gmra.mrb[0].mxu0 %v5039
      %v5214 = vpop.f32.mrb[0].mxu0
      %v5215 = vadd.f32 0.0, %v5214
      %v5216 = vpop.f32.mrb[0].mxu0
      %5217 = vdwg.mxu0
      %v5218 = vadd.f32 %v4804, %v5140
      %v5219 = vadd.f32 %v4805, %v5145
      %v5220 = vadd.f32 %v4806, %v5150
      %v5221 = vadd.f32 %v4807, %v5155
      %v5222 = vadd.f32 %v4808, %v5160
      %v5223 = vadd.f32 %v4809, %v5165
      %v5224 = vadd.f32 %v4810, %v5170
      %v5225 = vadd.f32 %v4811, %v5175
      %v5226 = vadd.f32 %v4812, %v5180
      %v5227 = vadd.f32 %v4813, %v5185
      %v5228 = vadd.f32 %v4814, %v5190
      %v5229 = vadd.f32 %v4815, %v5195
      %v5230 = vadd.f32 %v4816, %v5200
      %v5231 = vadd.f32 %v4817, %v5205
      %v5232 = vadd.f32 %v4818, %v5210
      %v5233 = vadd.f32 %v4819, %v5215
      %v5234 = vadd.f32 %v3510, %v5218
      %v5235 = vadd.f32 %v3511, %v5219
      %v5236 = vadd.f32 %v3512, %v5220
      %v5237 = vadd.f32 %v3513, %v5221
      %v5238 = vadd.f32 %v3514, %v5222
      %v5239 = vadd.f32 %v3515, %v5223
      %v5240 = vadd.f32 %v3516, %v5224
      %v5241 = vadd.f32 %v3517, %v5225
      %v5242 = vadd.f32 %v3518, %v5226
      %v5243 = vadd.f32 %v3519, %v5227
      %v5244 = vadd.f32 %v3520, %v5228
      %v5245 = vadd.f32 %v3521, %v5229
      %v5246 = vadd.f32 %v3522, %v5230
      %v5247 = vadd.f32 %v3523, %v5231
      %v5248 = vadd.f32 %v3524, %v5232
      %v5249 = vadd.f32 %v3525, %v5233
      %5250 = vst.msk [vmem:[%s379] sm:$0xff] %vm406, %v5234
      %5251 = vst.msk [vmem:[%s379 + $0x8] sm:$0xff] %vm406, %v5235
      %5252 = vst.msk [vmem:[%s379 + $0x10] sm:$0xff] %vm406, %v5236
      %5253 = vst.msk [vmem:[%s379 + $0x18] sm:$0xff] %vm406, %v5237
      %5254 = vst.msk [vmem:[%s379 + $0x20] sm:$0xff] %vm406, %v5238
      %5255 = vst.msk [vmem:[%s379 + $0x28] sm:$0xff] %vm406, %v5239
      %5256 = vst.msk [vmem:[%s379 + $0x30] sm:$0xff] %vm406, %v5240
      %5257 = vst.msk [vmem:[%s379 + $0x38] sm:$0xff] %vm406, %v5241
      %5258 = vst.msk [vmem:[%s379 + $0x40] sm:$0xff] %vm406, %v5242
      %5259 = vst.msk [vmem:[%s379 + $0x48] sm:$0xff] %vm406, %v5243
      %5260 = vst.msk [vmem:[%s379 + $0x50] sm:$0xff] %vm406, %v5244
      %5261 = vst.msk [vmem:[%s379 + $0x58] sm:$0xff] %vm406, %v5245
      %5262 = vst.msk [vmem:[%s379 + $0x60] sm:$0xff] %vm406, %v5246
      %5263 = vst.msk [vmem:[%s379 + $0x68] sm:$0xff] %vm406, %v5247
      %5264 = vst.msk [vmem:[%s379 + $0x70] sm:$0xff] %vm406, %v5248
      %5265 = vst.msk [vmem:[%s379 + $0x78] sm:$0xff] %vm406, %v5249
      %p5266 = scmp.lt.s32.totalorder %s21, 1
      %s5267 = scalar_select %p5266, %s21, 1
      %s5268 = smul.addr %s5267, 16
      %s5269 = smul.addr %s5268, 8
      %s5270 = scalar_lea.vmem %s10, %s5269
      // Predicated region
      $region61: #{transformer_global4_forward.1} parent=59 // pred_check
        %p5271 = pneg %p259
      $region62: #{transformer_global4_forward.1} parent=59 // pred_check_branch
        %5273 = sbr.rel (%p5271) target = $region64
      $region63: #{transformer_global4_forward.1} parent=59 // pred_region
        _
      $region64: #{transformer_global4_forward.1} parent=59 // pred_fallthru
        _
    $region60: #{transformer_global4_forward.1} parent=5 // pred_fallthru
      _
    %p5274 = scmp.le.s32.totalorder 2, %s16
    // Predicated region
    $region65: #{transformer_global4_forward.1} parent=5 // pred_check
      %p5275 = pneg %p5274
    $region66: #{transformer_global4_forward.1} parent=5 // pred_check_branch
      %5277 = sbr.rel (%p5275) target = $region68
    $region67: #{transformer_global4_forward.1} parent=5 // pred_region
      %s5278 = ssub.s32 %s16, 2
      // Predicated region
      $region69: #{transformer_global4_forward.1} parent=67 // pred_check
        %p5279 = pneg %p265
      $region70: #{transformer_global4_forward.1} parent=67 // pred_check_branch
        %5281 = sbr.rel (%p5279) target = $region72
      $region71: #{transformer_global4_forward.1} parent=67 // pred_region
        %p5282 = scmp.lt.s32.totalorder %s22, 1
        %s5283 = scalar_select %p5282, %s22, 1
        %s5284 = smul.addr %s5283, 16
        %s5285 = smul.addr %s5284, 8
        %s5286 = scalar_lea.vmem %s10, %s5285
      $region72: #{transformer_global4_forward.1} parent=67 // pred_fallthru
        _
    $region68: #{transformer_global4_forward.1} parent=5 // pred_fallthru
      _
  $region6: #{transformer_global4_forward.1} parent=0 // loop_footer
    %s20 = sadd.s32 1, %s16
  $region7: #{transformer_global4_forward.1} parent=0 // loop_footer_branch
    %15 = sbr.rel target = $region3
  $region8: #{transformer_global4_forward.1} parent=0 // loop_exit
    _

</llo_original>
